<compile_context>
chip_gen: v7x
topology: tpu7x:2x2x1
jax: 0.10.0
libtpu: 0.0.40
codegen_flags: <defaults>
</compile_context>

<pallas_src>
import functools

import jax
import jax.numpy as jnp
from jax.experimental import pallas as pl
from jax.experimental.pallas import tpu as pltpu


# ---------------------------------------------------------------------------
# Fused kernel: ReLU + (depthwise-dilated x pointwise) conv + BN partial stats
# ---------------------------------------------------------------------------
def _dilconv_kernel(x_ref, w_ref, out_ref, stats_ref, *, K, dil, stride,
                    h_tile, W_out):
    # x_ref    : (B_blk, H_pad, W_pad, C_in)  padded NHWC slab (resident per batch block)
    # w_ref    : (K*K*C_in, C_out)            folded depthwise*pointwise matrix
    # out_ref  : (B_blk, C_out, h_tile*W_out) conv output tile (pre-BN), lane-dense
    # stats_ref: (1, 1, 2, C_out)             per-tile partial BN statistics
    B_blk = x_ref.shape[0]
    C_out = out_ref.shape[1]
    M_tile = B_blk * h_tile * W_out

    # Padded-input row window for this output tile (includes the (K-1)*dil halo).
    h_rows = (h_tile - 1) * stride + (K - 1) * dil + 1
    h_base = pl.multiple_of(pl.program_id(1) * (h_tile * stride),
                            h_tile * stride)

    if stride == 1:
        # ReLU once on the halo window (ReLU(0)=0 -> zero padding unaffected),
        # then build the K*K dilated taps as static value slices.
        xw = jnp.maximum(x_ref[:, pl.ds(h_base, h_rows), :, :], 0)

        def tap(kh, kw):
            h0, w0 = kh * dil, kw * dil
            return xw[:, h0:h0 + h_tile, w0:w0 + W_out, :]
    else:
        # Reduction cells (stride > 1): per-tap strided ref loads.
        def tap(kh, kw):
            t = x_ref[:, pl.ds(h_base + kh * dil, h_tile, stride),
                      pl.ds(kw * dil, W_out, stride), :]
            return jnp.maximum(t, 0)

    # In-VMEM im2col: concatenate taps along the channel (lane) axis and do ONE
    # long-contraction MXU matmul (contraction = K*K*C_in), f32 accumulate.
    taps = [tap(kh, kw) for kh in range(K) for kw in range(K)]
    xcol = jnp.concatenate(taps, axis=-1).reshape(M_tile, -1)
    acc = jnp.dot(xcol, w_ref[...], preferred_element_type=jnp.float32)

    # Per-tile partial BN statistics, merged into a single tiny output.
    s = jnp.sum(acc, axis=0, keepdims=True)           # (1, C_out)
    q = jnp.sum(acc * acc, axis=0, keepdims=True)     # (1, C_out)
    stats_ref[0, 0] = jnp.concatenate([s, q], axis=0)

    # Lane-dense store: (M_tile, C_out) -> (B_blk, C_out, h_tile*W_out) so the
    # last (lane) dim is the spatial extent (>=128), not C_out.
    out = acc.reshape(B_blk, h_tile * W_out, C_out)
    out_ref[...] = jnp.transpose(out, (0, 2, 1)).astype(out_ref.dtype)


def _pick_tiles(N, H_out, W_out):
    """Pick (B_blk, h_tile).

    target_m rows per MXU call: big enough to feed the MXU and amortize the
    per-grid-step overhead, small enough to bound the accumulator / im2col
    temporaries.  h tiles are forced lane-dense (h*W_out % 128 == 0) unless the
    full H_out is used (block == full dim is always legal)."""
    target_m = 512
    M_img = H_out * W_out
    if M_img <= target_m:
        b_blk = 1
        for b in range(1, N + 1):
            if N % b == 0 and b * M_img <= target_m:
                b_blk = b
        return b_blk, H_out
    h_tile = H_out                      # safe fallback: whole image per tile
    for h in range(1, H_out):
        if H_out % h == 0 and h * W_out <= target_m and (h * W_out) % 128 == 0:
            h_tile = h
    return 1, h_tile


# ---------------------------------------------------------------------------
# DilConv forward
# ---------------------------------------------------------------------------
@functools.partial(jax.jit,
                   static_argnames=("kernel_size", "stride", "padding",
                                    "dilation", "eps", "compute_dtype"))
def dil_conv(x, w_dw, w_pw, gamma, beta, *, kernel_size, stride, padding,
             dilation, eps=1e-5, compute_dtype=jnp.bfloat16):
    N, C_in, H, W = x.shape
    C_out = w_pw.shape[0]
    K = kernel_size
    H_out = (H + 2 * padding - dilation * (K - 1) - 1) // stride + 1
    W_out = (W + 2 * padding - dilation * (K - 1) - 1) // stride + 1
    H_pad, W_pad = H + 2 * padding, W + 2 * padding
    M_total = N * H_out * W_out
    KKC = K * K * C_in

    # NCHW -> NHWC (channels on lanes), zero-pad spatially, cast the matmul
    # operand to the compute dtype (bf16 default: native MXU dtype, halves DMA).
    x_nhwc = jnp.transpose(x, (0, 2, 3, 1)).astype(compute_dtype)
    x_pad = jnp.pad(x_nhwc,
                    ((0, 0), (padding, padding), (padding, padding), (0, 0)))

    # Fold depthwise (C_in,1,K,K) x pointwise (C_out,C_in,1,1) into a single
    # (K*K*C_in, C_out) matrix IN f32, then cast the product:
    #   w_mat[(kh*K+kw)*C_in + c, o] = w_dw[c,kh,kw] * w_pw[o,c]
    wdw = w_dw[:, 0, :, :].astype(jnp.float32)            # (C_in, K, K)
    wpw = w_pw[:, :, 0, 0].astype(jnp.float32)            # (C_out, C_in)
    w_mat = jnp.einsum("ckl,oc->klco", wdw, wpw).reshape(KKC, C_out)
    w_mat = w_mat.astype(compute_dtype)

    B_blk, h_tile = _pick_tiles(N, H_out, W_out)
    n_b, n_h = N // B_blk, H_out // h_tile
    M_tile = B_blk * h_tile * W_out

    kernel = functools.partial(_dilconv_kernel, K=K, dil=dilation,
                               stride=stride, h_tile=h_tile, W_out=W_out)

    # --- VMEM budget: generation aware, temporaries scale with K^2*M*C_in. ---
    itemsize = jnp.dtype(compute_dtype).itemsize
    h_rows = (h_tile - 1) * stride + (K - 1) * dilation + 1
    blk_bytes = (B_blk * H_pad * W_pad * C_in * itemsize      # resident x slab
                 + KKC * C_out * itemsize                     # folded weights
                 + B_blk * C_out * h_tile * W_out * 4         # conv out tile
                 + 2 * C_out * 4)                             # stats tile
    tmp_bytes = (B_blk * h_rows * W_pad * C_in * itemsize     # ReLU'd halo window
                 + 2 * K * K * M_tile * C_in * itemsize       # tap slices + im2col
                 + 3 * M_tile * C_out * 4)                    # acc / stats / transpose
    try:
        vmem_cap = pltpu.get_tpu_info().vmem_capacity_bytes   # 64 MiB v7x, 128 v5e/v6e
    except Exception:
        vmem_cap = 64 * 1024 * 1024
    vmem_limit = int(min(0.85 * vmem_cap,
                         max(2 * (2 * blk_bytes + tmp_bytes),
                             32 * 1024 * 1024)))

    flops = 2 * M_total * KKC * C_out + 4 * M_total * C_out
    bytes_accessed = int(x_pad.size * itemsize + w_mat.size * itemsize
                         + M_total * C_out * 4 + n_b * n_h * 2 * C_out * 4)

    conv_out, stats = pl.pallas_call(
        kernel,
        out_shape=(
            jax.ShapeDtypeStruct((N, C_out, H_out * W_out), jnp.float32),
            jax.ShapeDtypeStruct((n_b, n_h, 2, C_out), jnp.float32),
        ),
        grid_spec=pltpu.PrefetchScalarGridSpec(
            num_scalar_prefetch=0,
            grid=(n_b, n_h),
            in_specs=[
                # Padded image slab: constant block index along the h axis ->
                # fetched once per batch block (weights fetched once overall).
                pl.BlockSpec((B_blk, H_pad, W_pad, C_in),
                             lambda b, h: (b, 0, 0, 0)),
                pl.BlockSpec((KKC, C_out), lambda b, h: (0, 0)),
            ],
            out_specs=[
                pl.BlockSpec((B_blk, C_out, h_tile * W_out),
                             lambda b, h: (b, 0, h)),
                pl.BlockSpec((1, 1, 2, C_out), lambda b, h: (b, h, 0, 0)),
            ],
        ),
        compiler_params=pltpu.CompilerParams(
            dimension_semantics=("parallel", "parallel"),
            vmem_limit_bytes=vmem_limit),
        cost_estimate=pl.CostEstimate(flops=flops, transcendentals=0,
                                      bytes_accessed=bytes_accessed),
    )(x_pad, w_mat)

    # --- Tiny per-channel glue: BN batch stats -> scale/shift (plain JAX). ---
    total = jnp.sum(stats[:, :, 0, :], axis=(0, 1))           # (C_out,)
    totsq = jnp.sum(stats[:, :, 1, :], axis=(0, 1))
    mean = total / M_total
    var = jnp.maximum(totsq / M_total - mean * mean, 0.0)     # biased var, clamped
    inv_std = jax.lax.rsqrt(var + eps)
    scale = gamma * inv_std
    shift = beta - mean * scale

    # Per-channel affine; the conv output is already channel-major, so NCHW is
    # a free reshape (no HBM transpose pass).
    y = conv_out * scale[None, :, None] + shift[None, :, None]
    return y.reshape(N, C_out, H_out, W_out)


# ---------------------------------------------------------------------------
# Pure-JAX reference (ReLU -> depthwise dilated conv -> 1x1 conv -> BN)
# ---------------------------------------------------------------------------
def _reference(x, w_dw, w_pw, gamma, beta, *, stride, padding, dilation,
               eps=1e-5):
    C_in = x.shape[1]
    xr = jnp.maximum(x, 0.0)
    y = jax.lax.conv_general_dilated(
        xr, w_dw, window_strides=(stride, stride),
        padding=[(padding, padding), (padding, padding)],
        rhs_dilation=(dilation, dilation),
        dimension_numbers=("NCHW", "OIHW", "NCHW"),
        feature_group_count=C_in)
    y = jax.lax.conv_general_dilated(
        y, w_pw, window_strides=(1, 1), padding=[(0, 0), (0, 0)],
        dimension_numbers=("NCHW", "OIHW", "NCHW"))
    mean = y.mean(axis=(0, 2, 3), keepdims=True)
    var = y.var(axis=(0, 2, 3), keepdims=True)
    yhat = (y - mean) * jax.lax.rsqrt(var + eps)
    return yhat * gamma.reshape(1, -1, 1, 1) + beta.reshape(1, -1, 1, 1)


if __name__ == "__main__":
    key = jax.random.PRNGKey(0)

    def run_case(k, N, C_in, C_out, H, W, K, stride, padding, dilation,
                 compute_dtype, atol, rtol):
        kx, kd, kp, kg, kb = jax.random.split(k, 5)
        x = jax.random.normal(kx, (N, C_in, H, W), dtype=jnp.float32)
        w_dw = jax.random.normal(kd, (C_in, 1, K, K), dtype=jnp.float32) * 0.3
        w_pw = jax.random.normal(kp, (C_out, C_in, 1, 1), dtype=jnp.float32) * 0.3
        gamma = 1.0 + 0.1 * jax.random.normal(kg, (C_out,), dtype=jnp.float32)
        beta = 0.1 * jax.random.normal(kb, (C_out,), dtype=jnp.float32)

        out = dil_conv(x, w_dw, w_pw, gamma, beta, kernel_size=K,
                       stride=stride, padding=padding, dilation=dilation,
                       compute_dtype=compute_dtype)
        out = jax.block_until_ready(out)

        ref = _reference(x, w_dw, w_pw, gamma, beta, stride=stride,
                         padding=padding, dilation=dilation)
        assert out.shape == ref.shape, (out.shape, ref.shape)
        err = float(jnp.max(jnp.abs(out - ref)))
        assert jnp.allclose(out, ref, atol=atol, rtol=rtol), f"mismatch: {err}"

    k1, k2 = jax.random.split(key)
    # DARTS dil_conv_3x3 (normal cell): exact-parity f32 check + default bf16.
    run_case(k1, 2, 4, 8, 16, 16, 3, 1, 2, 2, jnp.float32, 2e-3, 2e-3)
    run_case(k1, 2, 4, 8, 16, 16, 3, 1, 2, 2, jnp.bfloat16, 5e-2, 5e-2)
    # DARTS dil_conv_5x5 at a larger spatial size: exercises the 2-D
    # (batch x H_out-tile) grid and the resident-slab halo slicing.
    run_case(k2, 2, 8, 16, 32, 32, 5, 1, 4, 2, jnp.bfloat16, 5e-2, 5e-2)

    print("KERNEL_OK")
</pallas_src>

<mosaic_0001>
module attributes {stable_mosaic.version = 11 : i64} {
  func.func @_dilconv_kernel(%arg0: i32, %arg1: i32, %arg2: memref<2x20x20x4xf32, #tpu.memory_space<vmem>>, %arg3: memref<36x8xf32, #tpu.memory_space<vmem>>, %arg4: memref<2x8x256xf32, #tpu.memory_space<vmem>>, %arg5: memref<1x1x2x8xf32, #tpu.memory_space<vmem>>) attributes {dimension_semantics = [#tpu.dimension_semantics<parallel>, #tpu.dimension_semantics<parallel>], iteration_bounds = array<i64: 1, 1>, scalar_prefetch = 0 : i64, scratch_operands = 0 : i64, tpu.core_type = #tpu.core_type<tc>, window_params = [{transform_indices = @transform_0, window_bounds = array<i64: 2, 20, 20, 4>}, {pipeline_mode = #tpu.pipeline_mode<synchronous>, transform_indices = @transform_1, window_bounds = array<i64: 36, 8>}, {transform_indices = @transform_2, window_bounds = array<i64: 2, 8, 256>}, {transform_indices = @transform_3, window_bounds = array<i64: 1, 1, 2, 8>}]} {
    %c16_i32 = arith.constant 16 : i32
    %0 = arith.muli %arg1, %c16_i32 : i32
    %1 = tpu.assume_multiple %0, 16 : i32
    %c0 = arith.constant 0 : index
    %2 = arith.index_cast %1 : i32 to index
    %c0_0 = arith.constant 0 : index
    %c0_1 = arith.constant 0 : index
    %3 = vector.load %arg2[%c0, %2, %c0_0, %c0_1] : memref<2x20x20x4xf32, #tpu.memory_space<vmem>>, vector<2x20x20x4xf32>
    %cst = arith.constant 0.000000e+00 : f32
    %4 = vector.broadcast %cst : f32 to vector<2x20x20x4xf32>
    %5 = arith.maximumf %3, %4 : vector<2x20x20x4xf32>
    %6 = vector.extract_strided_slice %5 {offsets = [0, 0, 0, 0], sizes = [2, 16, 16, 4], strides = [1, 1, 1, 1]} : vector<2x20x20x4xf32> to vector<2x16x16x4xf32>
    %7 = vector.extract_strided_slice %5 {offsets = [0, 0, 2, 0], sizes = [2, 16, 16, 4], strides = [1, 1, 1, 1]} : vector<2x20x20x4xf32> to vector<2x16x16x4xf32>
    %8 = vector.extract_strided_slice %5 {offsets = [0, 0, 4, 0], sizes = [2, 16, 16, 4], strides = [1, 1, 1, 1]} : vector<2x20x20x4xf32> to vector<2x16x16x4xf32>
    %9 = vector.extract_strided_slice %5 {offsets = [0, 2, 0, 0], sizes = [2, 16, 16, 4], strides = [1, 1, 1, 1]} : vector<2x20x20x4xf32> to vector<2x16x16x4xf32>
    %10 = vector.extract_strided_slice %5 {offsets = [0, 2, 2, 0], sizes = [2, 16, 16, 4], strides = [1, 1, 1, 1]} : vector<2x20x20x4xf32> to vector<2x16x16x4xf32>
    %11 = vector.extract_strided_slice %5 {offsets = [0, 2, 4, 0], sizes = [2, 16, 16, 4], strides = [1, 1, 1, 1]} : vector<2x20x20x4xf32> to vector<2x16x16x4xf32>
    %12 = vector.extract_strided_slice %5 {offsets = [0, 4, 0, 0], sizes = [2, 16, 16, 4], strides = [1, 1, 1, 1]} : vector<2x20x20x4xf32> to vector<2x16x16x4xf32>
    %13 = vector.extract_strided_slice %5 {offsets = [0, 4, 2, 0], sizes = [2, 16, 16, 4], strides = [1, 1, 1, 1]} : vector<2x20x20x4xf32> to vector<2x16x16x4xf32>
    %14 = vector.extract_strided_slice %5 {offsets = [0, 4, 4, 0], sizes = [2, 16, 16, 4], strides = [1, 1, 1, 1]} : vector<2x20x20x4xf32> to vector<2x16x16x4xf32>
    %15 = tpu.concatenate %6, %7, %8, %9, %10, %11, %12, %13, %14 in 3 : vector<2x16x16x4xf32>, vector<2x16x16x4xf32>, vector<2x16x16x4xf32>, vector<2x16x16x4xf32>, vector<2x16x16x4xf32>, vector<2x16x16x4xf32>, vector<2x16x16x4xf32>, vector<2x16x16x4xf32>, vector<2x16x16x4xf32> -> vector<2x16x16x36xf32>
    %16 = vector.shape_cast %15 : vector<2x16x16x36xf32> to vector<512x36xf32>
    %c0_2 = arith.constant 0 : index
    %c0_3 = arith.constant 0 : index
    %17 = vector.load %arg3[%c0_2, %c0_3] : memref<36x8xf32, #tpu.memory_space<vmem>>, vector<36x8xf32>
    %cst_4 = arith.constant dense<0.000000e+00> : vector<512x8xf32>
    %18 = tpu.matmul %16, %17, %cst_4 {dimension_numbers = #tpu.dot_dimension_numbers<[1], [0], [0], [1], [0, 0, 1, 1], [], []>} : vector<512x36xf32>, vector<36x8xf32>, vector<512x8xf32> -> vector<512x8xf32>
    %cst_5 = arith.constant dense<0.000000e+00> : vector<8xf32>
    %19 = vector.multi_reduction <add>, %18, %cst_5 [0] : vector<512x8xf32> to vector<8xf32>
    %20 = vector.shape_cast %19 : vector<8xf32> to vector<1x8xf32>
    %21 = arith.mulf %18, %18 : vector<512x8xf32>
    %cst_6 = arith.constant dense<0.000000e+00> : vector<8xf32>
    %22 = vector.multi_reduction <add>, %21, %cst_6 [0] : vector<512x8xf32> to vector<8xf32>
    %23 = vector.shape_cast %22 : vector<8xf32> to vector<1x8xf32>
    %24 = tpu.concatenate %20, %23 in 0 : vector<1x8xf32>, vector<1x8xf32> -> vector<2x8xf32>
    %c0_7 = arith.constant 0 : index
    %c0_8 = arith.constant 0 : index
    %c0_9 = arith.constant 0 : index
    %c0_10 = arith.constant 0 : index
    %25 = vector.load %arg5[%c0_7, %c0_8, %c0_9, %c0_10] : memref<1x1x2x8xf32, #tpu.memory_space<vmem>>, vector<1x1x2x8xf32>
    %26 = vector.shape_cast %25 : vector<1x1x2x8xf32> to vector<2x8xf32>
    %27 = vector.shape_cast %24 : vector<2x8xf32> to vector<1x1x2x8xf32>
    tpu.vector_store %arg5[%c0_7, %c0_8, %c0_9, %c0_10], %27 {strides = array<i32>} : memref<1x1x2x8xf32, #tpu.memory_space<vmem>>, vector<1x1x2x8xf32>,
    %28 = vector.shape_cast %18 : vector<512x8xf32> to vector<2x256x8xf32>
    %29 = tpu.transpose %28, [0, 2, 1] : vector<2x256x8xf32> -> vector<2x8x256xf32>
    %c0_11 = arith.constant 0 : index
    %c0_12 = arith.constant 0 : index
    %c0_13 = arith.constant 0 : index
    %30 = vector.load %arg4[%c0_11, %c0_12, %c0_13] : memref<2x8x256xf32, #tpu.memory_space<vmem>>, vector<2x8x256xf32>
    tpu.vector_store %arg4[%c0_11, %c0_12, %c0_13], %29 {strides = array<i32>} : memref<2x8x256xf32, #tpu.memory_space<vmem>>, vector<2x8x256xf32>,
    return
  }
  func.func @transform_0(%arg0: i32, %arg1: i32) -> (i32, i32, i32, i32) {
    %c0_i32 = arith.constant 0 : i32
    %c0_i32_0 = arith.constant 0 : i32
    %c0_i32_1 = arith.constant 0 : i32
    %c0_i32_2 = arith.constant 0 : i32
    return %arg0, %c0_i32, %c0_i32_0, %c0_i32_1 : i32, i32, i32, i32
  }
  func.func @transform_1(%arg0: i32, %arg1: i32) -> (i32, i32) {
    %c0_i32 = arith.constant 0 : i32
    %c0_i32_0 = arith.constant 0 : i32
    %c0_i32_1 = arith.constant 0 : i32
    return %c0_i32, %c0_i32_0 : i32, i32
  }
  func.func @transform_2(%arg0: i32, %arg1: i32) -> (i32, i32, i32) {
    %c0_i32 = arith.constant 0 : i32
    %c0_i32_0 = arith.constant 0 : i32
    return %arg0, %c0_i32, %arg1 : i32, i32, i32
  }
  func.func @transform_3(%arg0: i32, %arg1: i32) -> (i32, i32, i32, i32) {
    %c0_i32 = arith.constant 0 : i32
    %c0_i32_0 = arith.constant 0 : i32
    %c0_i32_1 = arith.constant 0 : i32
    return %arg0, %arg1, %c0_i32, %c0_i32_0 : i32, i32, i32, i32
  }
}

</mosaic_0001>

<llo_original>
// kernel: dil_conv.1
$region0: #{dil_conv.1}
  #allocation0 [shape = 'u32[]', space=smem, size = 0x4, offset = 0x4, fixed_abs, tag = 'smem constant byte address 0x4 - core index']
  #allocation1 [shape = 'u32[144,128]{1,0:T(1,128)}', space=vmem, size = 0x12000, scoped, tag = 'internal scratch']
  %s0 = inlined_call_operand.vmem [shape: f32[2,20,20,4], index: 0, kind: input, shape index: {}]
  %s1 = inlined_call_operand.vmem [shape: f32[36,8], index: 1, kind: input, shape index: {}]
  %s2 = inlined_call_operand.vmem [shape: f32[2,8,256], index: 2, kind: output, shape index: {0}]
  %s3 = inlined_call_operand.vmem [shape: f32[1,1,2,8], index: 3, kind: output, shape index: {1}]
  %4 = xla_tuple %s2, %s3
  %s5 = sld [smem:[#allocation0]]
  $region26: #{dil_conv.1} parent=0
    _
  %s7 = ssub.s32 1, %s5
  %s8 = scalar_select 0, %s7, %s5
  // Predicated region
  $region2: #{dil_conv.1} parent=0 // pred_check
    _
  $region3: #{dil_conv.1} parent=0 // pred_check_branch
    %10 = sbr.rel (0) target = $region5
  $region4: #{dil_conv.1} parent=0 // pred_region
    _
  $region5: #{dil_conv.1} parent=0 // pred_fallthru
    _
  // Predicated region
  $region6: #{dil_conv.1} parent=0 // pred_check
    _
  $region7: #{dil_conv.1} parent=0 // pred_check_branch
    %12 = sbr.rel (0) target = $region9
  $region8: #{dil_conv.1} parent=0 // pred_region
    _
  $region9: #{dil_conv.1} parent=0 // pred_fallthru
    _
  %s13 = smul.u32 0, 16
  %s14 = smul.u32 %s13, 24
  %s15 = scalar_lea.vmem %s0, %s14
  %v16 = vld [vmem:[%s15] sm:$0xff]
  %v17 = vld [vmem:[%s15 + $0x8] sm:$0xff]
  %v18 = vld [vmem:[%s15 + $0x10] sm:$0xf]
  %v19 = vld [vmem:[%s15 + $0x18] sm:$0xff]
  %v20 = vld [vmem:[%s15 + $0x20] sm:$0xff]
  %v21 = vld [vmem:[%s15 + $0x28] sm:$0xf]
  %v22 = vld [vmem:[%s15 + $0x30] sm:$0xff]
  %v23 = vld [vmem:[%s15 + $0x38] sm:$0xff]
  %v24 = vld [vmem:[%s15 + $0x40] sm:$0xf]
  %v25 = vld [vmem:[%s15 + $0x48] sm:$0xff]
  %v26 = vld [vmem:[%s15 + $0x50] sm:$0xff]
  %v27 = vld [vmem:[%s15 + $0x58] sm:$0xf]
  %v28 = vld [vmem:[%s15 + $0x60] sm:$0xff]
  %v29 = vld [vmem:[%s15 + $0x68] sm:$0xff]
  %v30 = vld [vmem:[%s15 + $0x70] sm:$0xf]
  %v31 = vld [vmem:[%s15 + $0x78] sm:$0xff]
  %v32 = vld [vmem:[%s15 + $0x80] sm:$0xff]
  %v33 = vld [vmem:[%s15 + $0x88] sm:$0xf]
  %v34 = vld [vmem:[%s15 + $0x90] sm:$0xff]
  %v35 = vld [vmem:[%s15 + $0x98] sm:$0xff]
  %v36 = vld [vmem:[%s15 + $0xa0] sm:$0xf]
  %v37 = vld [vmem:[%s15 + $0xa8] sm:$0xff]
  %v38 = vld [vmem:[%s15 + $0xb0] sm:$0xff]
  %v39 = vld [vmem:[%s15 + $0xb8] sm:$0xf]
  %v40 = vld [vmem:[%s15 + $0xc0] sm:$0xff]
  %v41 = vld [vmem:[%s15 + $0xc8] sm:$0xff]
  %v42 = vld [vmem:[%s15 + $0xd0] sm:$0xf]
  %v43 = vld [vmem:[%s15 + $0xd8] sm:$0xff]
  %v44 = vld [vmem:[%s15 + $0xe0] sm:$0xff]
  %v45 = vld [vmem:[%s15 + $0xe8] sm:$0xf]
  %v46 = vld [vmem:[%s15 + $0xf0] sm:$0xff]
  %v47 = vld [vmem:[%s15 + $0xf8] sm:$0xff]
  %v48 = vld [vmem:[%s15 + $0x100] sm:$0xf]
  %v49 = vld [vmem:[%s15 + $0x108] sm:$0xff]
  %v50 = vld [vmem:[%s15 + $0x110] sm:$0xff]
  %v51 = vld [vmem:[%s15 + $0x118] sm:$0xf]
  %v52 = vld [vmem:[%s15 + $0x120] sm:$0xff]
  %v53 = vld [vmem:[%s15 + $0x128] sm:$0xff]
  %v54 = vld [vmem:[%s15 + $0x130] sm:$0xf]
  %v55 = vld [vmem:[%s15 + $0x138] sm:$0xff]
  %v56 = vld [vmem:[%s15 + $0x140] sm:$0xff]
  %v57 = vld [vmem:[%s15 + $0x148] sm:$0xf]
  %v58 = vld [vmem:[%s15 + $0x150] sm:$0xff]
  %v59 = vld [vmem:[%s15 + $0x158] sm:$0xff]
  %v60 = vld [vmem:[%s15 + $0x160] sm:$0xf]
  %v61 = vld [vmem:[%s15 + $0x168] sm:$0xff]
  %v62 = vld [vmem:[%s15 + $0x170] sm:$0xff]
  %v63 = vld [vmem:[%s15 + $0x178] sm:$0xf]
  %v64 = vld [vmem:[%s15 + $0x180] sm:$0xff]
  %v65 = vld [vmem:[%s15 + $0x188] sm:$0xff]
  %v66 = vld [vmem:[%s15 + $0x190] sm:$0xf]
  %v67 = vld [vmem:[%s15 + $0x198] sm:$0xff]
  %v68 = vld [vmem:[%s15 + $0x1a0] sm:$0xff]
  %v69 = vld [vmem:[%s15 + $0x1a8] sm:$0xf]
  %v70 = vld [vmem:[%s15 + $0x1b0] sm:$0xff]
  %v71 = vld [vmem:[%s15 + $0x1b8] sm:$0xff]
  %v72 = vld [vmem:[%s15 + $0x1c0] sm:$0xf]
  %v73 = vld [vmem:[%s15 + $0x1c8] sm:$0xff]
  %v74 = vld [vmem:[%s15 + $0x1d0] sm:$0xff]
  %v75 = vld [vmem:[%s15 + $0x1d8] sm:$0xf]
  %v76 = vld [vmem:[%s15 + $0x1e0] sm:$0xff]
  %v77 = vld [vmem:[%s15 + $0x1e8] sm:$0xff]
  %v78 = vld [vmem:[%s15 + $0x1f0] sm:$0xf]
  %v79 = vld [vmem:[%s15 + $0x1f8] sm:$0xff]
  %v80 = vld [vmem:[%s15 + $0x200] sm:$0xff]
  %v81 = vld [vmem:[%s15 + $0x208] sm:$0xf]
  %v82 = vld [vmem:[%s15 + $0x210] sm:$0xff]
  %v83 = vld [vmem:[%s15 + $0x218] sm:$0xff]
  %v84 = vld [vmem:[%s15 + $0x220] sm:$0xf]
  %v85 = vld [vmem:[%s15 + $0x228] sm:$0xff]
  %v86 = vld [vmem:[%s15 + $0x230] sm:$0xff]
  %v87 = vld [vmem:[%s15 + $0x238] sm:$0xf]
  %v88 = vld [vmem:[%s15 + $0x240] sm:$0xff]
  %v89 = vld [vmem:[%s15 + $0x248] sm:$0xff]
  %v90 = vld [vmem:[%s15 + $0x250] sm:$0xf]
  %v91 = vld [vmem:[%s15 + $0x258] sm:$0xff]
  %v92 = vld [vmem:[%s15 + $0x260] sm:$0xff]
  %v93 = vld [vmem:[%s15 + $0x268] sm:$0xf]
  %v94 = vld [vmem:[%s15 + $0x270] sm:$0xff]
  %v95 = vld [vmem:[%s15 + $0x278] sm:$0xff]
  %v96 = vld [vmem:[%s15 + $0x280] sm:$0xf]
  %v97 = vld [vmem:[%s15 + $0x288] sm:$0xff]
  %v98 = vld [vmem:[%s15 + $0x290] sm:$0xff]
  %v99 = vld [vmem:[%s15 + $0x298] sm:$0xf]
  %v100 = vld [vmem:[%s15 + $0x2a0] sm:$0xff]
  %v101 = vld [vmem:[%s15 + $0x2a8] sm:$0xff]
  %v102 = vld [vmem:[%s15 + $0x2b0] sm:$0xf]
  %v103 = vld [vmem:[%s15 + $0x2b8] sm:$0xff]
  %v104 = vld [vmem:[%s15 + $0x2c0] sm:$0xff]
  %v105 = vld [vmem:[%s15 + $0x2c8] sm:$0xf]
  %v106 = vld [vmem:[%s15 + $0x2d0] sm:$0xff]
  %v107 = vld [vmem:[%s15 + $0x2d8] sm:$0xff]
  %v108 = vld [vmem:[%s15 + $0x2e0] sm:$0xf]
  %v109 = vld [vmem:[%s15 + $0x2e8] sm:$0xff]
  %v110 = vld [vmem:[%s15 + $0x2f0] sm:$0xff]
  %v111 = vld [vmem:[%s15 + $0x2f8] sm:$0xf]
  %v112 = vld [vmem:[%s15 + $0x300] sm:$0xff]
  %v113 = vld [vmem:[%s15 + $0x308] sm:$0xff]
  %v114 = vld [vmem:[%s15 + $0x310] sm:$0xf]
  %v115 = vld [vmem:[%s15 + $0x318] sm:$0xff]
  %v116 = vld [vmem:[%s15 + $0x320] sm:$0xff]
  %v117 = vld [vmem:[%s15 + $0x328] sm:$0xf]
  %v118 = vld [vmem:[%s15 + $0x330] sm:$0xff]
  %v119 = vld [vmem:[%s15 + $0x338] sm:$0xff]
  %v120 = vld [vmem:[%s15 + $0x340] sm:$0xf]
  %v121 = vld [vmem:[%s15 + $0x348] sm:$0xff]
  %v122 = vld [vmem:[%s15 + $0x350] sm:$0xff]
  %v123 = vld [vmem:[%s15 + $0x358] sm:$0xf]
  %v124 = vld [vmem:[%s15 + $0x360] sm:$0xff]
  %v125 = vld [vmem:[%s15 + $0x368] sm:$0xff]
  %v126 = vld [vmem:[%s15 + $0x370] sm:$0xf]
  %v127 = vld [vmem:[%s15 + $0x378] sm:$0xff]
  %v128 = vld [vmem:[%s15 + $0x380] sm:$0xff]
  %v129 = vld [vmem:[%s15 + $0x388] sm:$0xf]
  %v130 = vld [vmem:[%s15 + $0x390] sm:$0xff]
  %v131 = vld [vmem:[%s15 + $0x398] sm:$0xff]
  %v132 = vld [vmem:[%s15 + $0x3a0] sm:$0xf]
  %v133 = vld [vmem:[%s15 + $0x3a8] sm:$0xff]
  %v134 = vld [vmem:[%s15 + $0x3b0] sm:$0xff]
  %v135 = vld [vmem:[%s15 + $0x3b8] sm:$0xf]
  %v136 = vmax.f32 %v16, 0.0
  %v137 = vmax.f32 %v17, 0.0
  %v138 = vmax.f32 %v18, 0.0
  %v139 = vmax.f32 %v19, 0.0
  %v140 = vmax.f32 %v20, 0.0
  %v141 = vmax.f32 %v21, 0.0
  %v142 = vmax.f32 %v22, 0.0
  %v143 = vmax.f32 %v23, 0.0
  %v144 = vmax.f32 %v24, 0.0
  %v145 = vmax.f32 %v25, 0.0
  %v146 = vmax.f32 %v26, 0.0
  %v147 = vmax.f32 %v27, 0.0
  %v148 = vmax.f32 %v28, 0.0
  %v149 = vmax.f32 %v29, 0.0
  %v150 = vmax.f32 %v30, 0.0
  %v151 = vmax.f32 %v31, 0.0
  %v152 = vmax.f32 %v32, 0.0
  %v153 = vmax.f32 %v33, 0.0
  %v154 = vmax.f32 %v34, 0.0
  %v155 = vmax.f32 %v35, 0.0
  %v156 = vmax.f32 %v36, 0.0
  %v157 = vmax.f32 %v37, 0.0
  %v158 = vmax.f32 %v38, 0.0
  %v159 = vmax.f32 %v39, 0.0
  %v160 = vmax.f32 %v40, 0.0
  %v161 = vmax.f32 %v41, 0.0
  %v162 = vmax.f32 %v42, 0.0
  %v163 = vmax.f32 %v43, 0.0
  %v164 = vmax.f32 %v44, 0.0
  %v165 = vmax.f32 %v45, 0.0
  %v166 = vmax.f32 %v46, 0.0
  %v167 = vmax.f32 %v47, 0.0
  %v168 = vmax.f32 %v48, 0.0
  %v169 = vmax.f32 %v49, 0.0
  %v170 = vmax.f32 %v50, 0.0
  %v171 = vmax.f32 %v51, 0.0
  %v172 = vmax.f32 %v52, 0.0
  %v173 = vmax.f32 %v53, 0.0
  %v174 = vmax.f32 %v54, 0.0
  %v175 = vmax.f32 %v55, 0.0
  %v176 = vmax.f32 %v56, 0.0
  %v177 = vmax.f32 %v57, 0.0
  %v178 = vmax.f32 %v58, 0.0
  %v179 = vmax.f32 %v59, 0.0
  %v180 = vmax.f32 %v60, 0.0
  %v181 = vmax.f32 %v61, 0.0
  %v182 = vmax.f32 %v62, 0.0
  %v183 = vmax.f32 %v63, 0.0
  %v184 = vmax.f32 %v64, 0.0
  %v185 = vmax.f32 %v65, 0.0
  %v186 = vmax.f32 %v66, 0.0
  %v187 = vmax.f32 %v67, 0.0
  %v188 = vmax.f32 %v68, 0.0
  %v189 = vmax.f32 %v69, 0.0
  %v190 = vmax.f32 %v70, 0.0
  %v191 = vmax.f32 %v71, 0.0
  %v192 = vmax.f32 %v72, 0.0
  %v193 = vmax.f32 %v73, 0.0
  %v194 = vmax.f32 %v74, 0.0
  %v195 = vmax.f32 %v75, 0.0
  %v196 = vmax.f32 %v76, 0.0
  %v197 = vmax.f32 %v77, 0.0
  %v198 = vmax.f32 %v78, 0.0
  %v199 = vmax.f32 %v79, 0.0
  %v200 = vmax.f32 %v80, 0.0
  %v201 = vmax.f32 %v81, 0.0
  %v202 = vmax.f32 %v82, 0.0
  %v203 = vmax.f32 %v83, 0.0
  %v204 = vmax.f32 %v84, 0.0
  %v205 = vmax.f32 %v85, 0.0
  %v206 = vmax.f32 %v86, 0.0
  %v207 = vmax.f32 %v87, 0.0
  %v208 = vmax.f32 %v88, 0.0
  %v209 = vmax.f32 %v89, 0.0
  %v210 = vmax.f32 %v90, 0.0
  %v211 = vmax.f32 %v91, 0.0
  %v212 = vmax.f32 %v92, 0.0
  %v213 = vmax.f32 %v93, 0.0
  %v214 = vmax.f32 %v94, 0.0
  %v215 = vmax.f32 %v95, 0.0
  %v216 = vmax.f32 %v96, 0.0
  %v217 = vmax.f32 %v97, 0.0
  %v218 = vmax.f32 %v98, 0.0
  %v219 = vmax.f32 %v99, 0.0
  %v220 = vmax.f32 %v100, 0.0
  %v221 = vmax.f32 %v101, 0.0
  %v222 = vmax.f32 %v102, 0.0
  %v223 = vmax.f32 %v103, 0.0
  %v224 = vmax.f32 %v104, 0.0
  %v225 = vmax.f32 %v105, 0.0
  %v226 = vmax.f32 %v106, 0.0
  %v227 = vmax.f32 %v107, 0.0
  %v228 = vmax.f32 %v108, 0.0
  %v229 = vmax.f32 %v109, 0.0
  %v230 = vmax.f32 %v110, 0.0
  %v231 = vmax.f32 %v111, 0.0
  %v232 = vmax.f32 %v112, 0.0
  %v233 = vmax.f32 %v113, 0.0
  %v234 = vmax.f32 %v114, 0.0
  %v235 = vmax.f32 %v115, 0.0
  %v236 = vmax.f32 %v116, 0.0
  %v237 = vmax.f32 %v117, 0.0
  %v238 = vmax.f32 %v118, 0.0
  %v239 = vmax.f32 %v119, 0.0
  %v240 = vmax.f32 %v120, 0.0
  %v241 = vmax.f32 %v121, 0.0
  %v242 = vmax.f32 %v122, 0.0
  %v243 = vmax.f32 %v123, 0.0
  %v244 = vmax.f32 %v124, 0.0
  %v245 = vmax.f32 %v125, 0.0
  %v246 = vmax.f32 %v126, 0.0
  %v247 = vmax.f32 %v127, 0.0
  %v248 = vmax.f32 %v128, 0.0
  %v249 = vmax.f32 %v129, 0.0
  %v250 = vmax.f32 %v130, 0.0
  %v251 = vmax.f32 %v131, 0.0
  %v252 = vmax.f32 %v132, 0.0
  %v253 = vmax.f32 %v133, 0.0
  %v254 = vmax.f32 %v134, 0.0
  %v255 = vmax.f32 %v135, 0.0
  %vm352 = vcmask 1045504
  %v353 = vrot.slane %v136, 2
  %v354 = vrot.slane %v137, 2
  %v355 = vsel %vm352, %v353, %v354
  %v356 = vrot.slane %v138, 2
  %v357 = vsel %vm352, %v354, %v356
  %v358 = vrot.slane %v139, 2
  %v359 = vrot.slane %v140, 2
  %v360 = vsel %vm352, %v358, %v359
  %v361 = vrot.slane %v141, 2
  %v362 = vsel %vm352, %v359, %v361
  %v363 = vrot.slane %v142, 2
  %v364 = vrot.slane %v143, 2
  %v365 = vsel %vm352, %v363, %v364
  %v366 = vrot.slane %v144, 2
  %v367 = vsel %vm352, %v364, %v366
  %v368 = vrot.slane %v145, 2
  %v369 = vrot.slane %v146, 2
  %v370 = vsel %vm352, %v368, %v369
  %v371 = vrot.slane %v147, 2
  %v372 = vsel %vm352, %v369, %v371
  %v373 = vrot.slane %v148, 2
  %v374 = vrot.slane %v149, 2
  %v375 = vsel %vm352, %v373, %v374
  %v376 = vrot.slane %v150, 2
  %v377 = vsel %vm352, %v374, %v376
  %v378 = vrot.slane %v151, 2
  %v379 = vrot.slane %v152, 2
  %v380 = vsel %vm352, %v378, %v379
  %v381 = vrot.slane %v153, 2
  %v382 = vsel %vm352, %v379, %v381
  %v383 = vrot.slane %v154, 2
  %v384 = vrot.slane %v155, 2
  %v385 = vsel %vm352, %v383, %v384
  %v386 = vrot.slane %v156, 2
  %v387 = vsel %vm352, %v384, %v386
  %v388 = vrot.slane %v157, 2
  %v389 = vrot.slane %v158, 2
  %v390 = vsel %vm352, %v388, %v389
  %v391 = vrot.slane %v159, 2
  %v392 = vsel %vm352, %v389, %v391
  %v393 = vrot.slane %v160, 2
  %v394 = vrot.slane %v161, 2
  %v395 = vsel %vm352, %v393, %v394
  %v396 = vrot.slane %v162, 2
  %v397 = vsel %vm352, %v394, %v396
  %v398 = vrot.slane %v163, 2
  %v399 = vrot.slane %v164, 2
  %v400 = vsel %vm352, %v398, %v399
  %v401 = vrot.slane %v165, 2
  %v402 = vsel %vm352, %v399, %v401
  %v403 = vrot.slane %v166, 2
  %v404 = vrot.slane %v167, 2
  %v405 = vsel %vm352, %v403, %v404
  %v406 = vrot.slane %v168, 2
  %v407 = vsel %vm352, %v404, %v406
  %v408 = vrot.slane %v169, 2
  %v409 = vrot.slane %v170, 2
  %v410 = vsel %vm352, %v408, %v409
  %v411 = vrot.slane %v171, 2
  %v412 = vsel %vm352, %v409, %v411
  %v413 = vrot.slane %v172, 2
  %v414 = vrot.slane %v173, 2
  %v415 = vsel %vm352, %v413, %v414
  %v416 = vrot.slane %v174, 2
  %v417 = vsel %vm352, %v414, %v416
  %v418 = vrot.slane %v175, 2
  %v419 = vrot.slane %v176, 2
  %v420 = vsel %vm352, %v418, %v419
  %v421 = vrot.slane %v177, 2
  %v422 = vsel %vm352, %v419, %v421
  %v423 = vrot.slane %v178, 2
  %v424 = vrot.slane %v179, 2
  %v425 = vsel %vm352, %v423, %v424
  %v426 = vrot.slane %v180, 2
  %v427 = vsel %vm352, %v424, %v426
  %v428 = vrot.slane %v181, 2
  %v429 = vrot.slane %v182, 2
  %v430 = vsel %vm352, %v428, %v429
  %v431 = vrot.slane %v183, 2
  %v432 = vsel %vm352, %v429, %v431
  %v433 = vrot.slane %v196, 2
  %v434 = vrot.slane %v197, 2
  %v435 = vsel %vm352, %v433, %v434
  %v436 = vrot.slane %v198, 2
  %v437 = vsel %vm352, %v434, %v436
  %v438 = vrot.slane %v199, 2
  %v439 = vrot.slane %v200, 2
  %v440 = vsel %vm352, %v438, %v439
  %v441 = vrot.slane %v201, 2
  %v442 = vsel %vm352, %v439, %v441
  %v443 = vrot.slane %v202, 2
  %v444 = vrot.slane %v203, 2
  %v445 = vsel %vm352, %v443, %v444
  %v446 = vrot.slane %v204, 2
  %v447 = vsel %vm352, %v444, %v446
  %v448 = vrot.slane %v205, 2
  %v449 = vrot.slane %v206, 2
  %v450 = vsel %vm352, %v448, %v449
  %v451 = vrot.slane %v207, 2
  %v452 = vsel %vm352, %v449, %v451
  %v453 = vrot.slane %v208, 2
  %v454 = vrot.slane %v209, 2
  %v455 = vsel %vm352, %v453, %v454
  %v456 = vrot.slane %v210, 2
  %v457 = vsel %vm352, %v454, %v456
  %v458 = vrot.slane %v211, 2
  %v459 = vrot.slane %v212, 2
  %v460 = vsel %vm352, %v458, %v459
  %v461 = vrot.slane %v213, 2
  %v462 = vsel %vm352, %v459, %v461
  %v463 = vrot.slane %v214, 2
  %v464 = vrot.slane %v215, 2
  %v465 = vsel %vm352, %v463, %v464
  %v466 = vrot.slane %v216, 2
  %v467 = vsel %vm352, %v464, %v466
  %v468 = vrot.slane %v217, 2
  %v469 = vrot.slane %v218, 2
  %v470 = vsel %vm352, %v468, %v469
  %v471 = vrot.slane %v219, 2
  %v472 = vsel %vm352, %v469, %v471
  %v473 = vrot.slane %v220, 2
  %v474 = vrot.slane %v221, 2
  %v475 = vsel %vm352, %v473, %v474
  %v476 = vrot.slane %v222, 2
  %v477 = vsel %vm352, %v474, %v476
  %v478 = vrot.slane %v223, 2
  %v479 = vrot.slane %v224, 2
  %v480 = vsel %vm352, %v478, %v479
  %v481 = vrot.slane %v225, 2
  %v482 = vsel %vm352, %v479, %v481
  %v483 = vrot.slane %v226, 2
  %v484 = vrot.slane %v227, 2
  %v485 = vsel %vm352, %v483, %v484
  %v486 = vrot.slane %v228, 2
  %v487 = vsel %vm352, %v484, %v486
  %v488 = vrot.slane %v229, 2
  %v489 = vrot.slane %v230, 2
  %v490 = vsel %vm352, %v488, %v489
  %v491 = vrot.slane %v231, 2
  %v492 = vsel %vm352, %v489, %v491
  %v493 = vrot.slane %v232, 2
  %v494 = vrot.slane %v233, 2
  %v495 = vsel %vm352, %v493, %v494
  %v496 = vrot.slane %v234, 2
  %v497 = vsel %vm352, %v494, %v496
  %v498 = vrot.slane %v235, 2
  %v499 = vrot.slane %v236, 2
  %v500 = vsel %vm352, %v498, %v499
  %v501 = vrot.slane %v237, 2
  %v502 = vsel %vm352, %v499, %v501
  %v503 = vrot.slane %v238, 2
  %v504 = vrot.slane %v239, 2
  %v505 = vsel %vm352, %v503, %v504
  %v506 = vrot.slane %v240, 2
  %v507 = vsel %vm352, %v504, %v506
  %v508 = vrot.slane %v241, 2
  %v509 = vrot.slane %v242, 2
  %v510 = vsel %vm352, %v508, %v509
  %v511 = vrot.slane %v243, 2
  %v512 = vsel %vm352, %v509, %v511
  %513 = vrot.lane.b32.xlu0 %v355, 4
  %v514 = vpop.permute.xlu0 %513
  %515 = vrot.lane.b32.xlu0 %v357, 4
  %v516 = vpop.permute.xlu0 %515
  %517 = vrot.lane.b32.xlu0 %v360, 4
  %v518 = vpop.permute.xlu0 %517
  %519 = vrot.lane.b32.xlu0 %v362, 4
  %v520 = vpop.permute.xlu0 %519
  %521 = vrot.lane.b32.xlu0 %v365, 4
  %v522 = vpop.permute.xlu0 %521
  %523 = vrot.lane.b32.xlu0 %v367, 4
  %v524 = vpop.permute.xlu0 %523
  %525 = vrot.lane.b32.xlu0 %v370, 4
  %v526 = vpop.permute.xlu0 %525
  %527 = vrot.lane.b32.xlu0 %v372, 4
  %v528 = vpop.permute.xlu0 %527
  %529 = vrot.lane.b32.xlu0 %v375, 4
  %v530 = vpop.permute.xlu0 %529
  %531 = vrot.lane.b32.xlu0 %v377, 4
  %v532 = vpop.permute.xlu0 %531
  %533 = vrot.lane.b32.xlu0 %v380, 4
  %v534 = vpop.permute.xlu0 %533
  %535 = vrot.lane.b32.xlu0 %v382, 4
  %v536 = vpop.permute.xlu0 %535
  %537 = vrot.lane.b32.xlu0 %v385, 4
  %v538 = vpop.permute.xlu0 %537
  %539 = vrot.lane.b32.xlu0 %v387, 4
  %v540 = vpop.permute.xlu0 %539
  %541 = vrot.lane.b32.xlu0 %v390, 4
  %v542 = vpop.permute.xlu0 %541
  %543 = vrot.lane.b32.xlu0 %v392, 4
  %v544 = vpop.permute.xlu0 %543
  %545 = vrot.lane.b32.xlu0 %v395, 4
  %v546 = vpop.permute.xlu0 %545
  %547 = vrot.lane.b32.xlu0 %v397, 4
  %v548 = vpop.permute.xlu0 %547
  %549 = vrot.lane.b32.xlu0 %v400, 4
  %v550 = vpop.permute.xlu0 %549
  %551 = vrot.lane.b32.xlu0 %v402, 4
  %v552 = vpop.permute.xlu0 %551
  %553 = vrot.lane.b32.xlu0 %v405, 4
  %v554 = vpop.permute.xlu0 %553
  %555 = vrot.lane.b32.xlu0 %v407, 4
  %v556 = vpop.permute.xlu0 %555
  %557 = vrot.lane.b32.xlu0 %v410, 4
  %v558 = vpop.permute.xlu0 %557
  %559 = vrot.lane.b32.xlu0 %v412, 4
  %v560 = vpop.permute.xlu0 %559
  %561 = vrot.lane.b32.xlu0 %v415, 4
  %v562 = vpop.permute.xlu0 %561
  %563 = vrot.lane.b32.xlu0 %v417, 4
  %v564 = vpop.permute.xlu0 %563
  %565 = vrot.lane.b32.xlu0 %v420, 4
  %v566 = vpop.permute.xlu0 %565
  %567 = vrot.lane.b32.xlu0 %v422, 4
  %v568 = vpop.permute.xlu0 %567
  %569 = vrot.lane.b32.xlu0 %v425, 4
  %v570 = vpop.permute.xlu0 %569
  %571 = vrot.lane.b32.xlu0 %v427, 4
  %v572 = vpop.permute.xlu0 %571
  %573 = vrot.lane.b32.xlu0 %v430, 4
  %v574 = vpop.permute.xlu0 %573
  %575 = vrot.lane.b32.xlu0 %v432, 4
  %v576 = vpop.permute.xlu0 %575
  %577 = vrot.lane.b32.xlu0 %v435, 4
  %v578 = vpop.permute.xlu0 %577
  %579 = vrot.lane.b32.xlu0 %v437, 4
  %v580 = vpop.permute.xlu0 %579
  %581 = vrot.lane.b32.xlu0 %v440, 4
  %v582 = vpop.permute.xlu0 %581
  %583 = vrot.lane.b32.xlu0 %v442, 4
  %v584 = vpop.permute.xlu0 %583
  %585 = vrot.lane.b32.xlu0 %v445, 4
  %v586 = vpop.permute.xlu0 %585
  %587 = vrot.lane.b32.xlu0 %v447, 4
  %v588 = vpop.permute.xlu0 %587
  %589 = vrot.lane.b32.xlu0 %v450, 4
  %v590 = vpop.permute.xlu0 %589
  %591 = vrot.lane.b32.xlu0 %v452, 4
  %v592 = vpop.permute.xlu0 %591
  %593 = vrot.lane.b32.xlu0 %v455, 4
  %v594 = vpop.permute.xlu0 %593
  %595 = vrot.lane.b32.xlu0 %v457, 4
  %v596 = vpop.permute.xlu0 %595
  %597 = vrot.lane.b32.xlu0 %v460, 4
  %v598 = vpop.permute.xlu0 %597
  %599 = vrot.lane.b32.xlu0 %v462, 4
  %v600 = vpop.permute.xlu0 %599
  %601 = vrot.lane.b32.xlu0 %v465, 4
  %v602 = vpop.permute.xlu0 %601
  %603 = vrot.lane.b32.xlu0 %v467, 4
  %v604 = vpop.permute.xlu0 %603
  %605 = vrot.lane.b32.xlu0 %v470, 4
  %v606 = vpop.permute.xlu0 %605
  %607 = vrot.lane.b32.xlu0 %v472, 4
  %v608 = vpop.permute.xlu0 %607
  %609 = vrot.lane.b32.xlu0 %v475, 4
  %v610 = vpop.permute.xlu0 %609
  %611 = vrot.lane.b32.xlu0 %v477, 4
  %v612 = vpop.permute.xlu0 %611
  %613 = vrot.lane.b32.xlu0 %v480, 4
  %v614 = vpop.permute.xlu0 %613
  %615 = vrot.lane.b32.xlu0 %v482, 4
  %v616 = vpop.permute.xlu0 %615
  %617 = vrot.lane.b32.xlu0 %v485, 4
  %v618 = vpop.permute.xlu0 %617
  %619 = vrot.lane.b32.xlu0 %v487, 4
  %v620 = vpop.permute.xlu0 %619
  %621 = vrot.lane.b32.xlu0 %v490, 4
  %v622 = vpop.permute.xlu0 %621
  %623 = vrot.lane.b32.xlu0 %v492, 4
  %v624 = vpop.permute.xlu0 %623
  %625 = vrot.lane.b32.xlu0 %v495, 4
  %v626 = vpop.permute.xlu0 %625
  %627 = vrot.lane.b32.xlu0 %v497, 4
  %v628 = vpop.permute.xlu0 %627
  %629 = vrot.lane.b32.xlu0 %v500, 4
  %v630 = vpop.permute.xlu0 %629
  %631 = vrot.lane.b32.xlu0 %v502, 4
  %v632 = vpop.permute.xlu0 %631
  %633 = vrot.lane.b32.xlu0 %v505, 4
  %v634 = vpop.permute.xlu0 %633
  %635 = vrot.lane.b32.xlu0 %v507, 4
  %v636 = vpop.permute.xlu0 %635
  %637 = vrot.lane.b32.xlu0 %v510, 4
  %v638 = vpop.permute.xlu0 %637
  %639 = vrot.lane.b32.xlu0 %v512, 4
  %v640 = vpop.permute.xlu0 %639
  %vm705 = vcmask 1043456
  %v706 = vrot.slane %v136, 4
  %v707 = vrot.slane %v137, 4
  %v708 = vsel %vm705, %v706, %v707
  %v709 = vrot.slane %v138, 4
  %v710 = vsel %vm705, %v707, %v709
  %v711 = vrot.slane %v139, 4
  %v712 = vrot.slane %v140, 4
  %v713 = vsel %vm705, %v711, %v712
  %v714 = vrot.slane %v141, 4
  %v715 = vsel %vm705, %v712, %v714
  %v716 = vrot.slane %v142, 4
  %v717 = vrot.slane %v143, 4
  %v718 = vsel %vm705, %v716, %v717
  %v719 = vrot.slane %v144, 4
  %v720 = vsel %vm705, %v717, %v719
  %v721 = vrot.slane %v145, 4
  %v722 = vrot.slane %v146, 4
  %v723 = vsel %vm705, %v721, %v722
  %v724 = vrot.slane %v147, 4
  %v725 = vsel %vm705, %v722, %v724
  %v726 = vrot.slane %v148, 4
  %v727 = vrot.slane %v149, 4
  %v728 = vsel %vm705, %v726, %v727
  %v729 = vrot.slane %v150, 4
  %v730 = vsel %vm705, %v727, %v729
  %v731 = vrot.slane %v151, 4
  %v732 = vrot.slane %v152, 4
  %v733 = vsel %vm705, %v731, %v732
  %v734 = vrot.slane %v153, 4
  %v735 = vsel %vm705, %v732, %v734
  %v736 = vrot.slane %v154, 4
  %v737 = vrot.slane %v155, 4
  %v738 = vsel %vm705, %v736, %v737
  %v739 = vrot.slane %v156, 4
  %v740 = vsel %vm705, %v737, %v739
  %v741 = vrot.slane %v157, 4
  %v742 = vrot.slane %v158, 4
  %v743 = vsel %vm705, %v741, %v742
  %v744 = vrot.slane %v159, 4
  %v745 = vsel %vm705, %v742, %v744
  %v746 = vrot.slane %v160, 4
  %v747 = vrot.slane %v161, 4
  %v748 = vsel %vm705, %v746, %v747
  %v749 = vrot.slane %v162, 4
  %v750 = vsel %vm705, %v747, %v749
  %v751 = vrot.slane %v163, 4
  %v752 = vrot.slane %v164, 4
  %v753 = vsel %vm705, %v751, %v752
  %v754 = vrot.slane %v165, 4
  %v755 = vsel %vm705, %v752, %v754
  %v756 = vrot.slane %v166, 4
  %v757 = vrot.slane %v167, 4
  %v758 = vsel %vm705, %v756, %v757
  %v759 = vrot.slane %v168, 4
  %v760 = vsel %vm705, %v757, %v759
  %v761 = vrot.slane %v169, 4
  %v762 = vrot.slane %v170, 4
  %v763 = vsel %vm705, %v761, %v762
  %v764 = vrot.slane %v171, 4
  %v765 = vsel %vm705, %v762, %v764
  %v766 = vrot.slane %v172, 4
  %v767 = vrot.slane %v173, 4
  %v768 = vsel %vm705, %v766, %v767
  %v769 = vrot.slane %v174, 4
  %v770 = vsel %vm705, %v767, %v769
  %v771 = vrot.slane %v175, 4
  %v772 = vrot.slane %v176, 4
  %v773 = vsel %vm705, %v771, %v772
  %v774 = vrot.slane %v177, 4
  %v775 = vsel %vm705, %v772, %v774
  %v776 = vrot.slane %v178, 4
  %v777 = vrot.slane %v179, 4
  %v778 = vsel %vm705, %v776, %v777
  %v779 = vrot.slane %v180, 4
  %v780 = vsel %vm705, %v777, %v779
  %v781 = vrot.slane %v181, 4
  %v782 = vrot.slane %v182, 4
  %v783 = vsel %vm705, %v781, %v782
  %v784 = vrot.slane %v183, 4
  %v785 = vsel %vm705, %v782, %v784
  %v786 = vrot.slane %v196, 4
  %v787 = vrot.slane %v197, 4
  %v788 = vsel %vm705, %v786, %v787
  %v789 = vrot.slane %v198, 4
  %v790 = vsel %vm705, %v787, %v789
  %v791 = vrot.slane %v199, 4
  %v792 = vrot.slane %v200, 4
  %v793 = vsel %vm705, %v791, %v792
  %v794 = vrot.slane %v201, 4
  %v795 = vsel %vm705, %v792, %v794
  %v796 = vrot.slane %v202, 4
  %v797 = vrot.slane %v203, 4
  %v798 = vsel %vm705, %v796, %v797
  %v799 = vrot.slane %v204, 4
  %v800 = vsel %vm705, %v797, %v799
  %v801 = vrot.slane %v205, 4
  %v802 = vrot.slane %v206, 4
  %v803 = vsel %vm705, %v801, %v802
  %v804 = vrot.slane %v207, 4
  %v805 = vsel %vm705, %v802, %v804
  %v806 = vrot.slane %v208, 4
  %v807 = vrot.slane %v209, 4
  %v808 = vsel %vm705, %v806, %v807
  %v809 = vrot.slane %v210, 4
  %v810 = vsel %vm705, %v807, %v809
  %v811 = vrot.slane %v211, 4
  %v812 = vrot.slane %v212, 4
  %v813 = vsel %vm705, %v811, %v812
  %v814 = vrot.slane %v213, 4
  %v815 = vsel %vm705, %v812, %v814
  %v816 = vrot.slane %v214, 4
  %v817 = vrot.slane %v215, 4
  %v818 = vsel %vm705, %v816, %v817
  %v819 = vrot.slane %v216, 4
  %v820 = vsel %vm705, %v817, %v819
  %v821 = vrot.slane %v217, 4
  %v822 = vrot.slane %v218, 4
  %v823 = vsel %vm705, %v821, %v822
  %v824 = vrot.slane %v219, 4
  %v825 = vsel %vm705, %v822, %v824
  %v826 = vrot.slane %v220, 4
  %v827 = vrot.slane %v221, 4
  %v828 = vsel %vm705, %v826, %v827
  %v829 = vrot.slane %v222, 4
  %v830 = vsel %vm705, %v827, %v829
  %v831 = vrot.slane %v223, 4
  %v832 = vrot.slane %v224, 4
  %v833 = vsel %vm705, %v831, %v832
  %v834 = vrot.slane %v225, 4
  %v835 = vsel %vm705, %v832, %v834
  %v836 = vrot.slane %v226, 4
  %v837 = vrot.slane %v227, 4
  %v838 = vsel %vm705, %v836, %v837
  %v839 = vrot.slane %v228, 4
  %v840 = vsel %vm705, %v837, %v839
  %v841 = vrot.slane %v229, 4
  %v842 = vrot.slane %v230, 4
  %v843 = vsel %vm705, %v841, %v842
  %v844 = vrot.slane %v231, 4
  %v845 = vsel %vm705, %v842, %v844
  %v846 = vrot.slane %v232, 4
  %v847 = vrot.slane %v233, 4
  %v848 = vsel %vm705, %v846, %v847
  %v849 = vrot.slane %v234, 4
  %v850 = vsel %vm705, %v847, %v849
  %v851 = vrot.slane %v235, 4
  %v852 = vrot.slane %v236, 4
  %v853 = vsel %vm705, %v851, %v852
  %v854 = vrot.slane %v237, 4
  %v855 = vsel %vm705, %v852, %v854
  %v856 = vrot.slane %v238, 4
  %v857 = vrot.slane %v239, 4
  %v858 = vsel %vm705, %v856, %v857
  %v859 = vrot.slane %v240, 4
  %v860 = vsel %vm705, %v857, %v859
  %v861 = vrot.slane %v241, 4
  %v862 = vrot.slane %v242, 4
  %v863 = vsel %vm705, %v861, %v862
  %v864 = vrot.slane %v243, 4
  %v865 = vsel %vm705, %v862, %v864
  %866 = vrot.lane.b32.xlu0 %v708, 8
  %v867 = vpop.permute.xlu0 %866
  %868 = vrot.lane.b32.xlu0 %v710, 8
  %v869 = vpop.permute.xlu0 %868
  %870 = vrot.lane.b32.xlu0 %v713, 8
  %v871 = vpop.permute.xlu0 %870
  %872 = vrot.lane.b32.xlu0 %v715, 8
  %v873 = vpop.permute.xlu0 %872
  %874 = vrot.lane.b32.xlu0 %v718, 8
  %v875 = vpop.permute.xlu0 %874
  %876 = vrot.lane.b32.xlu0 %v720, 8
  %v877 = vpop.permute.xlu0 %876
  %878 = vrot.lane.b32.xlu0 %v723, 8
  %v879 = vpop.permute.xlu0 %878
  %880 = vrot.lane.b32.xlu0 %v725, 8
  %v881 = vpop.permute.xlu0 %880
  %882 = vrot.lane.b32.xlu0 %v728, 8
  %v883 = vpop.permute.xlu0 %882
  %884 = vrot.lane.b32.xlu0 %v730, 8
  %v885 = vpop.permute.xlu0 %884
  %886 = vrot.lane.b32.xlu0 %v733, 8
  %v887 = vpop.permute.xlu0 %886
  %888 = vrot.lane.b32.xlu0 %v735, 8
  %v889 = vpop.permute.xlu0 %888
  %890 = vrot.lane.b32.xlu0 %v738, 8
  %v891 = vpop.permute.xlu0 %890
  %892 = vrot.lane.b32.xlu0 %v740, 8
  %v893 = vpop.permute.xlu0 %892
  %894 = vrot.lane.b32.xlu0 %v743, 8
  %v895 = vpop.permute.xlu0 %894
  %896 = vrot.lane.b32.xlu0 %v745, 8
  %v897 = vpop.permute.xlu0 %896
  %898 = vrot.lane.b32.xlu0 %v748, 8
  %v899 = vpop.permute.xlu0 %898
  %900 = vrot.lane.b32.xlu0 %v750, 8
  %v901 = vpop.permute.xlu0 %900
  %902 = vrot.lane.b32.xlu0 %v753, 8
  %v903 = vpop.permute.xlu0 %902
  %904 = vrot.lane.b32.xlu0 %v755, 8
  %v905 = vpop.permute.xlu0 %904
  %906 = vrot.lane.b32.xlu0 %v758, 8
  %v907 = vpop.permute.xlu0 %906
  %908 = vrot.lane.b32.xlu0 %v760, 8
  %v909 = vpop.permute.xlu0 %908
  %910 = vrot.lane.b32.xlu0 %v763, 8
  %v911 = vpop.permute.xlu0 %910
  %912 = vrot.lane.b32.xlu0 %v765, 8
  %v913 = vpop.permute.xlu0 %912
  %914 = vrot.lane.b32.xlu0 %v768, 8
  %v915 = vpop.permute.xlu0 %914
  %916 = vrot.lane.b32.xlu0 %v770, 8
  %v917 = vpop.permute.xlu0 %916
  %918 = vrot.lane.b32.xlu0 %v773, 8
  %v919 = vpop.permute.xlu0 %918
  %920 = vrot.lane.b32.xlu0 %v775, 8
  %v921 = vpop.permute.xlu0 %920
  %922 = vrot.lane.b32.xlu0 %v778, 8
  %v923 = vpop.permute.xlu0 %922
  %924 = vrot.lane.b32.xlu0 %v780, 8
  %v925 = vpop.permute.xlu0 %924
  %926 = vrot.lane.b32.xlu0 %v783, 8
  %v927 = vpop.permute.xlu0 %926
  %928 = vrot.lane.b32.xlu0 %v785, 8
  %v929 = vpop.permute.xlu0 %928
  %930 = vrot.lane.b32.xlu0 %v788, 8
  %v931 = vpop.permute.xlu0 %930
  %932 = vrot.lane.b32.xlu0 %v790, 8
  %v933 = vpop.permute.xlu0 %932
  %934 = vrot.lane.b32.xlu0 %v793, 8
  %v935 = vpop.permute.xlu0 %934
  %936 = vrot.lane.b32.xlu0 %v795, 8
  %v937 = vpop.permute.xlu0 %936
  %938 = vrot.lane.b32.xlu0 %v798, 8
  %v939 = vpop.permute.xlu0 %938
  %940 = vrot.lane.b32.xlu0 %v800, 8
  %v941 = vpop.permute.xlu0 %940
  %942 = vrot.lane.b32.xlu0 %v803, 8
  %v943 = vpop.permute.xlu0 %942
  %944 = vrot.lane.b32.xlu0 %v805, 8
  %v945 = vpop.permute.xlu0 %944
  %946 = vrot.lane.b32.xlu0 %v808, 8
  %v947 = vpop.permute.xlu0 %946
  %948 = vrot.lane.b32.xlu0 %v810, 8
  %v949 = vpop.permute.xlu0 %948
  %950 = vrot.lane.b32.xlu0 %v813, 8
  %v951 = vpop.permute.xlu0 %950
  %952 = vrot.lane.b32.xlu0 %v815, 8
  %v953 = vpop.permute.xlu0 %952
  %954 = vrot.lane.b32.xlu0 %v818, 8
  %v955 = vpop.permute.xlu0 %954
  %956 = vrot.lane.b32.xlu0 %v820, 8
  %v957 = vpop.permute.xlu0 %956
  %958 = vrot.lane.b32.xlu0 %v823, 8
  %v959 = vpop.permute.xlu0 %958
  %960 = vrot.lane.b32.xlu0 %v825, 8
  %v961 = vpop.permute.xlu0 %960
  %962 = vrot.lane.b32.xlu0 %v828, 8
  %v963 = vpop.permute.xlu0 %962
  %964 = vrot.lane.b32.xlu0 %v830, 8
  %v965 = vpop.permute.xlu0 %964
  %966 = vrot.lane.b32.xlu0 %v833, 8
  %v967 = vpop.permute.xlu0 %966
  %968 = vrot.lane.b32.xlu0 %v835, 8
  %v969 = vpop.permute.xlu0 %968
  %970 = vrot.lane.b32.xlu0 %v838, 8
  %v971 = vpop.permute.xlu0 %970
  %972 = vrot.lane.b32.xlu0 %v840, 8
  %v973 = vpop.permute.xlu0 %972
  %974 = vrot.lane.b32.xlu0 %v843, 8
  %v975 = vpop.permute.xlu0 %974
  %976 = vrot.lane.b32.xlu0 %v845, 8
  %v977 = vpop.permute.xlu0 %976
  %978 = vrot.lane.b32.xlu0 %v848, 8
  %v979 = vpop.permute.xlu0 %978
  %980 = vrot.lane.b32.xlu0 %v850, 8
  %v981 = vpop.permute.xlu0 %980
  %982 = vrot.lane.b32.xlu0 %v853, 8
  %v983 = vpop.permute.xlu0 %982
  %984 = vrot.lane.b32.xlu0 %v855, 8
  %v985 = vpop.permute.xlu0 %984
  %986 = vrot.lane.b32.xlu0 %v858, 8
  %v987 = vpop.permute.xlu0 %986
  %988 = vrot.lane.b32.xlu0 %v860, 8
  %v989 = vpop.permute.xlu0 %988
  %990 = vrot.lane.b32.xlu0 %v863, 8
  %v991 = vpop.permute.xlu0 %990
  %992 = vrot.lane.b32.xlu0 %v865, 8
  %v993 = vpop.permute.xlu0 %992
  %1066 = vrot.lane.b32.xlu0 %v142, 12
  %v1067 = vpop.permute.xlu0 %1066
  %1068 = vrot.lane.b32.xlu0 %v143, 12
  %v1069 = vpop.permute.xlu0 %1068
  %1070 = vrot.lane.b32.xlu0 %v145, 12
  %v1071 = vpop.permute.xlu0 %1070
  %1072 = vrot.lane.b32.xlu0 %v146, 12
  %v1073 = vpop.permute.xlu0 %1072
  %1074 = vrot.lane.b32.xlu0 %v148, 12
  %v1075 = vpop.permute.xlu0 %1074
  %1076 = vrot.lane.b32.xlu0 %v149, 12
  %v1077 = vpop.permute.xlu0 %1076
  %1078 = vrot.lane.b32.xlu0 %v151, 12
  %v1079 = vpop.permute.xlu0 %1078
  %1080 = vrot.lane.b32.xlu0 %v152, 12
  %v1081 = vpop.permute.xlu0 %1080
  %1082 = vrot.lane.b32.xlu0 %v154, 12
  %v1083 = vpop.permute.xlu0 %1082
  %1084 = vrot.lane.b32.xlu0 %v155, 12
  %v1085 = vpop.permute.xlu0 %1084
  %1086 = vrot.lane.b32.xlu0 %v157, 12
  %v1087 = vpop.permute.xlu0 %1086
  %1088 = vrot.lane.b32.xlu0 %v158, 12
  %v1089 = vpop.permute.xlu0 %1088
  %1090 = vrot.lane.b32.xlu0 %v160, 12
  %v1091 = vpop.permute.xlu0 %1090
  %1092 = vrot.lane.b32.xlu0 %v161, 12
  %v1093 = vpop.permute.xlu0 %1092
  %1094 = vrot.lane.b32.xlu0 %v163, 12
  %v1095 = vpop.permute.xlu0 %1094
  %1096 = vrot.lane.b32.xlu0 %v164, 12
  %v1097 = vpop.permute.xlu0 %1096
  %1098 = vrot.lane.b32.xlu0 %v166, 12
  %v1099 = vpop.permute.xlu0 %1098
  %1100 = vrot.lane.b32.xlu0 %v167, 12
  %v1101 = vpop.permute.xlu0 %1100
  %1102 = vrot.lane.b32.xlu0 %v169, 12
  %v1103 = vpop.permute.xlu0 %1102
  %1104 = vrot.lane.b32.xlu0 %v170, 12
  %v1105 = vpop.permute.xlu0 %1104
  %1106 = vrot.lane.b32.xlu0 %v172, 12
  %v1107 = vpop.permute.xlu0 %1106
  %1108 = vrot.lane.b32.xlu0 %v173, 12
  %v1109 = vpop.permute.xlu0 %1108
  %1110 = vrot.lane.b32.xlu0 %v175, 12
  %v1111 = vpop.permute.xlu0 %1110
  %1112 = vrot.lane.b32.xlu0 %v176, 12
  %v1113 = vpop.permute.xlu0 %1112
  %1114 = vrot.lane.b32.xlu0 %v178, 12
  %v1115 = vpop.permute.xlu0 %1114
  %1116 = vrot.lane.b32.xlu0 %v179, 12
  %v1117 = vpop.permute.xlu0 %1116
  %1118 = vrot.lane.b32.xlu0 %v181, 12
  %v1119 = vpop.permute.xlu0 %1118
  %1120 = vrot.lane.b32.xlu0 %v182, 12
  %v1121 = vpop.permute.xlu0 %1120
  %1122 = vrot.lane.b32.xlu0 %v184, 12
  %v1123 = vpop.permute.xlu0 %1122
  %1124 = vrot.lane.b32.xlu0 %v185, 12
  %v1125 = vpop.permute.xlu0 %1124
  %1126 = vrot.lane.b32.xlu0 %v187, 12
  %v1127 = vpop.permute.xlu0 %1126
  %1128 = vrot.lane.b32.xlu0 %v188, 12
  %v1129 = vpop.permute.xlu0 %1128
  %1130 = vrot.lane.b32.xlu0 %v202, 12
  %v1131 = vpop.permute.xlu0 %1130
  %1132 = vrot.lane.b32.xlu0 %v203, 12
  %v1133 = vpop.permute.xlu0 %1132
  %1134 = vrot.lane.b32.xlu0 %v205, 12
  %v1135 = vpop.permute.xlu0 %1134
  %1136 = vrot.lane.b32.xlu0 %v206, 12
  %v1137 = vpop.permute.xlu0 %1136
  %1138 = vrot.lane.b32.xlu0 %v208, 12
  %v1139 = vpop.permute.xlu0 %1138
  %1140 = vrot.lane.b32.xlu0 %v209, 12
  %v1141 = vpop.permute.xlu0 %1140
  %1142 = vrot.lane.b32.xlu0 %v211, 12
  %v1143 = vpop.permute.xlu0 %1142
  %1144 = vrot.lane.b32.xlu0 %v212, 12
  %v1145 = vpop.permute.xlu0 %1144
  %1146 = vrot.lane.b32.xlu0 %v214, 12
  %v1147 = vpop.permute.xlu0 %1146
  %1148 = vrot.lane.b32.xlu0 %v215, 12
  %v1149 = vpop.permute.xlu0 %1148
  %1150 = vrot.lane.b32.xlu0 %v217, 12
  %v1151 = vpop.permute.xlu0 %1150
  %1152 = vrot.lane.b32.xlu0 %v218, 12
  %v1153 = vpop.permute.xlu0 %1152
  %1154 = vrot.lane.b32.xlu0 %v220, 12
  %v1155 = vpop.permute.xlu0 %1154
  %1156 = vrot.lane.b32.xlu0 %v221, 12
  %v1157 = vpop.permute.xlu0 %1156
  %1158 = vrot.lane.b32.xlu0 %v223, 12
  %v1159 = vpop.permute.xlu0 %1158
  %1160 = vrot.lane.b32.xlu0 %v224, 12
  %v1161 = vpop.permute.xlu0 %1160
  %1162 = vrot.lane.b32.xlu0 %v226, 12
  %v1163 = vpop.permute.xlu0 %1162
  %1164 = vrot.lane.b32.xlu0 %v227, 12
  %v1165 = vpop.permute.xlu0 %1164
  %1166 = vrot.lane.b32.xlu0 %v229, 12
  %v1167 = vpop.permute.xlu0 %1166
  %1168 = vrot.lane.b32.xlu0 %v230, 12
  %v1169 = vpop.permute.xlu0 %1168
  %1170 = vrot.lane.b32.xlu0 %v232, 12
  %v1171 = vpop.permute.xlu0 %1170
  %1172 = vrot.lane.b32.xlu0 %v233, 12
  %v1173 = vpop.permute.xlu0 %1172
  %1174 = vrot.lane.b32.xlu0 %v235, 12
  %v1175 = vpop.permute.xlu0 %1174
  %1176 = vrot.lane.b32.xlu0 %v236, 12
  %v1177 = vpop.permute.xlu0 %1176
  %1178 = vrot.lane.b32.xlu0 %v238, 12
  %v1179 = vpop.permute.xlu0 %1178
  %1180 = vrot.lane.b32.xlu0 %v239, 12
  %v1181 = vpop.permute.xlu0 %1180
  %1182 = vrot.lane.b32.xlu0 %v241, 12
  %v1183 = vpop.permute.xlu0 %1182
  %1184 = vrot.lane.b32.xlu0 %v242, 12
  %v1185 = vpop.permute.xlu0 %1184
  %1186 = vrot.lane.b32.xlu0 %v244, 12
  %v1187 = vpop.permute.xlu0 %1186
  %1188 = vrot.lane.b32.xlu0 %v245, 12
  %v1189 = vpop.permute.xlu0 %1188
  %1190 = vrot.lane.b32.xlu0 %v247, 12
  %v1191 = vpop.permute.xlu0 %1190
  %1192 = vrot.lane.b32.xlu0 %v248, 12
  %v1193 = vpop.permute.xlu0 %1192
  %v1262 = vrot.slane %v184, 2
  %v1263 = vrot.slane %v185, 2
  %v1264 = vsel %vm352, %v1262, %v1263
  %v1265 = vrot.slane %v186, 2
  %v1266 = vsel %vm352, %v1263, %v1265
  %v1267 = vrot.slane %v187, 2
  %v1268 = vrot.slane %v188, 2
  %v1269 = vsel %vm352, %v1267, %v1268
  %v1270 = vrot.slane %v189, 2
  %v1271 = vsel %vm352, %v1268, %v1270
  %v1272 = vrot.slane %v244, 2
  %v1273 = vrot.slane %v245, 2
  %v1274 = vsel %vm352, %v1272, %v1273
  %v1275 = vrot.slane %v246, 2
  %v1276 = vsel %vm352, %v1273, %v1275
  %v1277 = vrot.slane %v247, 2
  %v1278 = vrot.slane %v248, 2
  %v1279 = vsel %vm352, %v1277, %v1278
  %v1280 = vrot.slane %v249, 2
  %v1281 = vsel %vm352, %v1278, %v1280
  %1282 = vrot.lane.b32.xlu0 %v365, 16
  %v1283 = vpop.permute.xlu0 %1282
  %1284 = vrot.lane.b32.xlu0 %v367, 16
  %v1285 = vpop.permute.xlu0 %1284
  %1286 = vrot.lane.b32.xlu0 %v370, 16
  %v1287 = vpop.permute.xlu0 %1286
  %1288 = vrot.lane.b32.xlu0 %v372, 16
  %v1289 = vpop.permute.xlu0 %1288
  %1290 = vrot.lane.b32.xlu0 %v375, 16
  %v1291 = vpop.permute.xlu0 %1290
  %1292 = vrot.lane.b32.xlu0 %v377, 16
  %v1293 = vpop.permute.xlu0 %1292
  %1294 = vrot.lane.b32.xlu0 %v380, 16
  %v1295 = vpop.permute.xlu0 %1294
  %1296 = vrot.lane.b32.xlu0 %v382, 16
  %v1297 = vpop.permute.xlu0 %1296
  %1298 = vrot.lane.b32.xlu0 %v385, 16
  %v1299 = vpop.permute.xlu0 %1298
  %1300 = vrot.lane.b32.xlu0 %v387, 16
  %v1301 = vpop.permute.xlu0 %1300
  %1302 = vrot.lane.b32.xlu0 %v390, 16
  %v1303 = vpop.permute.xlu0 %1302
  %1304 = vrot.lane.b32.xlu0 %v392, 16
  %v1305 = vpop.permute.xlu0 %1304
  %1306 = vrot.lane.b32.xlu0 %v395, 16
  %v1307 = vpop.permute.xlu0 %1306
  %1308 = vrot.lane.b32.xlu0 %v397, 16
  %v1309 = vpop.permute.xlu0 %1308
  %1310 = vrot.lane.b32.xlu0 %v400, 16
  %v1311 = vpop.permute.xlu0 %1310
  %1312 = vrot.lane.b32.xlu0 %v402, 16
  %v1313 = vpop.permute.xlu0 %1312
  %1314 = vrot.lane.b32.xlu0 %v405, 16
  %v1315 = vpop.permute.xlu0 %1314
  %1316 = vrot.lane.b32.xlu0 %v407, 16
  %v1317 = vpop.permute.xlu0 %1316
  %1318 = vrot.lane.b32.xlu0 %v410, 16
  %v1319 = vpop.permute.xlu0 %1318
  %1320 = vrot.lane.b32.xlu0 %v412, 16
  %v1321 = vpop.permute.xlu0 %1320
  %1322 = vrot.lane.b32.xlu0 %v415, 16
  %v1323 = vpop.permute.xlu0 %1322
  %1324 = vrot.lane.b32.xlu0 %v417, 16
  %v1325 = vpop.permute.xlu0 %1324
  %1326 = vrot.lane.b32.xlu0 %v420, 16
  %v1327 = vpop.permute.xlu0 %1326
  %1328 = vrot.lane.b32.xlu0 %v422, 16
  %v1329 = vpop.permute.xlu0 %1328
  %1330 = vrot.lane.b32.xlu0 %v425, 16
  %v1331 = vpop.permute.xlu0 %1330
  %1332 = vrot.lane.b32.xlu0 %v427, 16
  %v1333 = vpop.permute.xlu0 %1332
  %1334 = vrot.lane.b32.xlu0 %v430, 16
  %v1335 = vpop.permute.xlu0 %1334
  %1336 = vrot.lane.b32.xlu0 %v432, 16
  %v1337 = vpop.permute.xlu0 %1336
  %1338 = vrot.lane.b32.xlu0 %v1264, 16
  %v1339 = vpop.permute.xlu0 %1338
  %1340 = vrot.lane.b32.xlu0 %v1266, 16
  %v1341 = vpop.permute.xlu0 %1340
  %1342 = vrot.lane.b32.xlu0 %v1269, 16
  %v1343 = vpop.permute.xlu0 %1342
  %1344 = vrot.lane.b32.xlu0 %v1271, 16
  %v1345 = vpop.permute.xlu0 %1344
  %1346 = vrot.lane.b32.xlu0 %v445, 16
  %v1347 = vpop.permute.xlu0 %1346
  %1348 = vrot.lane.b32.xlu0 %v447, 16
  %v1349 = vpop.permute.xlu0 %1348
  %1350 = vrot.lane.b32.xlu0 %v450, 16
  %v1351 = vpop.permute.xlu0 %1350
  %1352 = vrot.lane.b32.xlu0 %v452, 16
  %v1353 = vpop.permute.xlu0 %1352
  %1354 = vrot.lane.b32.xlu0 %v455, 16
  %v1355 = vpop.permute.xlu0 %1354
  %1356 = vrot.lane.b32.xlu0 %v457, 16
  %v1357 = vpop.permute.xlu0 %1356
  %1358 = vrot.lane.b32.xlu0 %v460, 16
  %v1359 = vpop.permute.xlu0 %1358
  %1360 = vrot.lane.b32.xlu0 %v462, 16
  %v1361 = vpop.permute.xlu0 %1360
  %1362 = vrot.lane.b32.xlu0 %v465, 16
  %v1363 = vpop.permute.xlu0 %1362
  %1364 = vrot.lane.b32.xlu0 %v467, 16
  %v1365 = vpop.permute.xlu0 %1364
  %1366 = vrot.lane.b32.xlu0 %v470, 16
  %v1367 = vpop.permute.xlu0 %1366
  %1368 = vrot.lane.b32.xlu0 %v472, 16
  %v1369 = vpop.permute.xlu0 %1368
  %1370 = vrot.lane.b32.xlu0 %v475, 16
  %v1371 = vpop.permute.xlu0 %1370
  %1372 = vrot.lane.b32.xlu0 %v477, 16
  %v1373 = vpop.permute.xlu0 %1372
  %1374 = vrot.lane.b32.xlu0 %v480, 16
  %v1375 = vpop.permute.xlu0 %1374
  %1376 = vrot.lane.b32.xlu0 %v482, 16
  %v1377 = vpop.permute.xlu0 %1376
  %1378 = vrot.lane.b32.xlu0 %v485, 16
  %v1379 = vpop.permute.xlu0 %1378
  %1380 = vrot.lane.b32.xlu0 %v487, 16
  %v1381 = vpop.permute.xlu0 %1380
  %1382 = vrot.lane.b32.xlu0 %v490, 16
  %v1383 = vpop.permute.xlu0 %1382
  %1384 = vrot.lane.b32.xlu0 %v492, 16
  %v1385 = vpop.permute.xlu0 %1384
  %1386 = vrot.lane.b32.xlu0 %v495, 16
  %v1387 = vpop.permute.xlu0 %1386
  %1388 = vrot.lane.b32.xlu0 %v497, 16
  %v1389 = vpop.permute.xlu0 %1388
  %1390 = vrot.lane.b32.xlu0 %v500, 16
  %v1391 = vpop.permute.xlu0 %1390
  %1392 = vrot.lane.b32.xlu0 %v502, 16
  %v1393 = vpop.permute.xlu0 %1392
  %1394 = vrot.lane.b32.xlu0 %v505, 16
  %v1395 = vpop.permute.xlu0 %1394
  %1396 = vrot.lane.b32.xlu0 %v507, 16
  %v1397 = vpop.permute.xlu0 %1396
  %1398 = vrot.lane.b32.xlu0 %v510, 16
  %v1399 = vpop.permute.xlu0 %1398
  %1400 = vrot.lane.b32.xlu0 %v512, 16
  %v1401 = vpop.permute.xlu0 %1400
  %1402 = vrot.lane.b32.xlu0 %v1274, 16
  %v1403 = vpop.permute.xlu0 %1402
  %1404 = vrot.lane.b32.xlu0 %v1276, 16
  %v1405 = vpop.permute.xlu0 %1404
  %1406 = vrot.lane.b32.xlu0 %v1279, 16
  %v1407 = vpop.permute.xlu0 %1406
  %1408 = vrot.lane.b32.xlu0 %v1281, 16
  %v1409 = vpop.permute.xlu0 %1408
  %v1474 = vrot.slane %v184, 4
  %v1475 = vrot.slane %v185, 4
  %v1476 = vsel %vm705, %v1474, %v1475
  %v1477 = vrot.slane %v186, 4
  %v1478 = vsel %vm705, %v1475, %v1477
  %v1479 = vrot.slane %v187, 4
  %v1480 = vrot.slane %v188, 4
  %v1481 = vsel %vm705, %v1479, %v1480
  %v1482 = vrot.slane %v189, 4
  %v1483 = vsel %vm705, %v1480, %v1482
  %v1484 = vrot.slane %v244, 4
  %v1485 = vrot.slane %v245, 4
  %v1486 = vsel %vm705, %v1484, %v1485
  %v1487 = vrot.slane %v246, 4
  %v1488 = vsel %vm705, %v1485, %v1487
  %v1489 = vrot.slane %v247, 4
  %v1490 = vrot.slane %v248, 4
  %v1491 = vsel %vm705, %v1489, %v1490
  %v1492 = vrot.slane %v249, 4
  %v1493 = vsel %vm705, %v1490, %v1492
  %1494 = vrot.lane.b32.xlu0 %v718, 20
  %v1495 = vpop.permute.xlu0 %1494
  %1496 = vrot.lane.b32.xlu0 %v720, 20
  %v1497 = vpop.permute.xlu0 %1496
  %1498 = vrot.lane.b32.xlu0 %v723, 20
  %v1499 = vpop.permute.xlu0 %1498
  %1500 = vrot.lane.b32.xlu0 %v725, 20
  %v1501 = vpop.permute.xlu0 %1500
  %1502 = vrot.lane.b32.xlu0 %v728, 20
  %v1503 = vpop.permute.xlu0 %1502
  %1504 = vrot.lane.b32.xlu0 %v730, 20
  %v1505 = vpop.permute.xlu0 %1504
  %1506 = vrot.lane.b32.xlu0 %v733, 20
  %v1507 = vpop.permute.xlu0 %1506
  %1508 = vrot.lane.b32.xlu0 %v735, 20
  %v1509 = vpop.permute.xlu0 %1508
  %1510 = vrot.lane.b32.xlu0 %v738, 20
  %v1511 = vpop.permute.xlu0 %1510
  %1512 = vrot.lane.b32.xlu0 %v740, 20
  %v1513 = vpop.permute.xlu0 %1512
  %1514 = vrot.lane.b32.xlu0 %v743, 20
  %v1515 = vpop.permute.xlu0 %1514
  %1516 = vrot.lane.b32.xlu0 %v745, 20
  %v1517 = vpop.permute.xlu0 %1516
  %1518 = vrot.lane.b32.xlu0 %v748, 20
  %v1519 = vpop.permute.xlu0 %1518
  %1520 = vrot.lane.b32.xlu0 %v750, 20
  %v1521 = vpop.permute.xlu0 %1520
  %1522 = vrot.lane.b32.xlu0 %v753, 20
  %v1523 = vpop.permute.xlu0 %1522
  %1524 = vrot.lane.b32.xlu0 %v755, 20
  %v1525 = vpop.permute.xlu0 %1524
  %1526 = vrot.lane.b32.xlu0 %v758, 20
  %v1527 = vpop.permute.xlu0 %1526
  %1528 = vrot.lane.b32.xlu0 %v760, 20
  %v1529 = vpop.permute.xlu0 %1528
  %1530 = vrot.lane.b32.xlu0 %v763, 20
  %v1531 = vpop.permute.xlu0 %1530
  %1532 = vrot.lane.b32.xlu0 %v765, 20
  %v1533 = vpop.permute.xlu0 %1532
  %1534 = vrot.lane.b32.xlu0 %v768, 20
  %v1535 = vpop.permute.xlu0 %1534
  %1536 = vrot.lane.b32.xlu0 %v770, 20
  %v1537 = vpop.permute.xlu0 %1536
  %1538 = vrot.lane.b32.xlu0 %v773, 20
  %v1539 = vpop.permute.xlu0 %1538
  %1540 = vrot.lane.b32.xlu0 %v775, 20
  %v1541 = vpop.permute.xlu0 %1540
  %1542 = vrot.lane.b32.xlu0 %v778, 20
  %v1543 = vpop.permute.xlu0 %1542
  %1544 = vrot.lane.b32.xlu0 %v780, 20
  %v1545 = vpop.permute.xlu0 %1544
  %1546 = vrot.lane.b32.xlu0 %v783, 20
  %v1547 = vpop.permute.xlu0 %1546
  %1548 = vrot.lane.b32.xlu0 %v785, 20
  %v1549 = vpop.permute.xlu0 %1548
  %1550 = vrot.lane.b32.xlu0 %v1476, 20
  %v1551 = vpop.permute.xlu0 %1550
  %1552 = vrot.lane.b32.xlu0 %v1478, 20
  %v1553 = vpop.permute.xlu0 %1552
  %1554 = vrot.lane.b32.xlu0 %v1481, 20
  %v1555 = vpop.permute.xlu0 %1554
  %1556 = vrot.lane.b32.xlu0 %v1483, 20
  %v1557 = vpop.permute.xlu0 %1556
  %1558 = vrot.lane.b32.xlu0 %v798, 20
  %v1559 = vpop.permute.xlu0 %1558
  %1560 = vrot.lane.b32.xlu0 %v800, 20
  %v1561 = vpop.permute.xlu0 %1560
  %1562 = vrot.lane.b32.xlu0 %v803, 20
  %v1563 = vpop.permute.xlu0 %1562
  %1564 = vrot.lane.b32.xlu0 %v805, 20
  %v1565 = vpop.permute.xlu0 %1564
  %1566 = vrot.lane.b32.xlu0 %v808, 20
  %v1567 = vpop.permute.xlu0 %1566
  %1568 = vrot.lane.b32.xlu0 %v810, 20
  %v1569 = vpop.permute.xlu0 %1568
  %1570 = vrot.lane.b32.xlu0 %v813, 20
  %v1571 = vpop.permute.xlu0 %1570
  %1572 = vrot.lane.b32.xlu0 %v815, 20
  %v1573 = vpop.permute.xlu0 %1572
  %1574 = vrot.lane.b32.xlu0 %v818, 20
  %v1575 = vpop.permute.xlu0 %1574
  %1576 = vrot.lane.b32.xlu0 %v820, 20
  %v1577 = vpop.permute.xlu0 %1576
  %1578 = vrot.lane.b32.xlu0 %v823, 20
  %v1579 = vpop.permute.xlu0 %1578
  %1580 = vrot.lane.b32.xlu0 %v825, 20
  %v1581 = vpop.permute.xlu0 %1580
  %1582 = vrot.lane.b32.xlu0 %v828, 20
  %v1583 = vpop.permute.xlu0 %1582
  %1584 = vrot.lane.b32.xlu0 %v830, 20
  %v1585 = vpop.permute.xlu0 %1584
  %1586 = vrot.lane.b32.xlu0 %v833, 20
  %v1587 = vpop.permute.xlu0 %1586
  %1588 = vrot.lane.b32.xlu0 %v835, 20
  %v1589 = vpop.permute.xlu0 %1588
  %1590 = vrot.lane.b32.xlu0 %v838, 20
  %v1591 = vpop.permute.xlu0 %1590
  %1592 = vrot.lane.b32.xlu0 %v840, 20
  %v1593 = vpop.permute.xlu0 %1592
  %1594 = vrot.lane.b32.xlu0 %v843, 20
  %v1595 = vpop.permute.xlu0 %1594
  %1596 = vrot.lane.b32.xlu0 %v845, 20
  %v1597 = vpop.permute.xlu0 %1596
  %1598 = vrot.lane.b32.xlu0 %v848, 20
  %v1599 = vpop.permute.xlu0 %1598
  %1600 = vrot.lane.b32.xlu0 %v850, 20
  %v1601 = vpop.permute.xlu0 %1600
  %1602 = vrot.lane.b32.xlu0 %v853, 20
  %v1603 = vpop.permute.xlu0 %1602
  %1604 = vrot.lane.b32.xlu0 %v855, 20
  %v1605 = vpop.permute.xlu0 %1604
  %1606 = vrot.lane.b32.xlu0 %v858, 20
  %v1607 = vpop.permute.xlu0 %1606
  %1608 = vrot.lane.b32.xlu0 %v860, 20
  %v1609 = vpop.permute.xlu0 %1608
  %1610 = vrot.lane.b32.xlu0 %v863, 20
  %v1611 = vpop.permute.xlu0 %1610
  %1612 = vrot.lane.b32.xlu0 %v865, 20
  %v1613 = vpop.permute.xlu0 %1612
  %1614 = vrot.lane.b32.xlu0 %v1486, 20
  %v1615 = vpop.permute.xlu0 %1614
  %1616 = vrot.lane.b32.xlu0 %v1488, 20
  %v1617 = vpop.permute.xlu0 %1616
  %1618 = vrot.lane.b32.xlu0 %v1491, 20
  %v1619 = vpop.permute.xlu0 %1618
  %1620 = vrot.lane.b32.xlu0 %v1493, 20
  %v1621 = vpop.permute.xlu0 %1620
  %1694 = vrot.lane.b32.xlu0 %v148, 24
  %v1695 = vpop.permute.xlu0 %1694
  %1696 = vrot.lane.b32.xlu0 %v149, 24
  %v1697 = vpop.permute.xlu0 %1696
  %1698 = vrot.lane.b32.xlu0 %v151, 24
  %v1699 = vpop.permute.xlu0 %1698
  %1700 = vrot.lane.b32.xlu0 %v152, 24
  %v1701 = vpop.permute.xlu0 %1700
  %1702 = vrot.lane.b32.xlu0 %v154, 24
  %v1703 = vpop.permute.xlu0 %1702
  %1704 = vrot.lane.b32.xlu0 %v155, 24
  %v1705 = vpop.permute.xlu0 %1704
  %1706 = vrot.lane.b32.xlu0 %v157, 24
  %v1707 = vpop.permute.xlu0 %1706
  %1708 = vrot.lane.b32.xlu0 %v158, 24
  %v1709 = vpop.permute.xlu0 %1708
  %1710 = vrot.lane.b32.xlu0 %v160, 24
  %v1711 = vpop.permute.xlu0 %1710
  %1712 = vrot.lane.b32.xlu0 %v161, 24
  %v1713 = vpop.permute.xlu0 %1712
  %1714 = vrot.lane.b32.xlu0 %v163, 24
  %v1715 = vpop.permute.xlu0 %1714
  %1716 = vrot.lane.b32.xlu0 %v164, 24
  %v1717 = vpop.permute.xlu0 %1716
  %1718 = vrot.lane.b32.xlu0 %v166, 24
  %v1719 = vpop.permute.xlu0 %1718
  %1720 = vrot.lane.b32.xlu0 %v167, 24
  %v1721 = vpop.permute.xlu0 %1720
  %1722 = vrot.lane.b32.xlu0 %v169, 24
  %v1723 = vpop.permute.xlu0 %1722
  %1724 = vrot.lane.b32.xlu0 %v170, 24
  %v1725 = vpop.permute.xlu0 %1724
  %1726 = vrot.lane.b32.xlu0 %v172, 24
  %v1727 = vpop.permute.xlu0 %1726
  %1728 = vrot.lane.b32.xlu0 %v173, 24
  %v1729 = vpop.permute.xlu0 %1728
  %1730 = vrot.lane.b32.xlu0 %v175, 24
  %v1731 = vpop.permute.xlu0 %1730
  %1732 = vrot.lane.b32.xlu0 %v176, 24
  %v1733 = vpop.permute.xlu0 %1732
  %1734 = vrot.lane.b32.xlu0 %v178, 24
  %v1735 = vpop.permute.xlu0 %1734
  %1736 = vrot.lane.b32.xlu0 %v179, 24
  %v1737 = vpop.permute.xlu0 %1736
  %1738 = vrot.lane.b32.xlu0 %v181, 24
  %v1739 = vpop.permute.xlu0 %1738
  %1740 = vrot.lane.b32.xlu0 %v182, 24
  %v1741 = vpop.permute.xlu0 %1740
  %1742 = vrot.lane.b32.xlu0 %v184, 24
  %v1743 = vpop.permute.xlu0 %1742
  %1744 = vrot.lane.b32.xlu0 %v185, 24
  %v1745 = vpop.permute.xlu0 %1744
  %1746 = vrot.lane.b32.xlu0 %v187, 24
  %v1747 = vpop.permute.xlu0 %1746
  %1748 = vrot.lane.b32.xlu0 %v188, 24
  %v1749 = vpop.permute.xlu0 %1748
  %1750 = vrot.lane.b32.xlu0 %v190, 24
  %v1751 = vpop.permute.xlu0 %1750
  %1752 = vrot.lane.b32.xlu0 %v191, 24
  %v1753 = vpop.permute.xlu0 %1752
  %1754 = vrot.lane.b32.xlu0 %v193, 24
  %v1755 = vpop.permute.xlu0 %1754
  %1756 = vrot.lane.b32.xlu0 %v194, 24
  %v1757 = vpop.permute.xlu0 %1756
  %1758 = vrot.lane.b32.xlu0 %v208, 24
  %v1759 = vpop.permute.xlu0 %1758
  %1760 = vrot.lane.b32.xlu0 %v209, 24
  %v1761 = vpop.permute.xlu0 %1760
  %1762 = vrot.lane.b32.xlu0 %v211, 24
  %v1763 = vpop.permute.xlu0 %1762
  %1764 = vrot.lane.b32.xlu0 %v212, 24
  %v1765 = vpop.permute.xlu0 %1764
  %1766 = vrot.lane.b32.xlu0 %v214, 24
  %v1767 = vpop.permute.xlu0 %1766
  %1768 = vrot.lane.b32.xlu0 %v215, 24
  %v1769 = vpop.permute.xlu0 %1768
  %1770 = vrot.lane.b32.xlu0 %v217, 24
  %v1771 = vpop.permute.xlu0 %1770
  %1772 = vrot.lane.b32.xlu0 %v218, 24
  %v1773 = vpop.permute.xlu0 %1772
  %1774 = vrot.lane.b32.xlu0 %v220, 24
  %v1775 = vpop.permute.xlu0 %1774
  %1776 = vrot.lane.b32.xlu0 %v221, 24
  %v1777 = vpop.permute.xlu0 %1776
  %1778 = vrot.lane.b32.xlu0 %v223, 24
  %v1779 = vpop.permute.xlu0 %1778
  %1780 = vrot.lane.b32.xlu0 %v224, 24
  %v1781 = vpop.permute.xlu0 %1780
  %1782 = vrot.lane.b32.xlu0 %v226, 24
  %v1783 = vpop.permute.xlu0 %1782
  %1784 = vrot.lane.b32.xlu0 %v227, 24
  %v1785 = vpop.permute.xlu0 %1784
  %1786 = vrot.lane.b32.xlu0 %v229, 24
  %v1787 = vpop.permute.xlu0 %1786
  %1788 = vrot.lane.b32.xlu0 %v230, 24
  %v1789 = vpop.permute.xlu0 %1788
  %1790 = vrot.lane.b32.xlu0 %v232, 24
  %v1791 = vpop.permute.xlu0 %1790
  %1792 = vrot.lane.b32.xlu0 %v233, 24
  %v1793 = vpop.permute.xlu0 %1792
  %1794 = vrot.lane.b32.xlu0 %v235, 24
  %v1795 = vpop.permute.xlu0 %1794
  %1796 = vrot.lane.b32.xlu0 %v236, 24
  %v1797 = vpop.permute.xlu0 %1796
  %1798 = vrot.lane.b32.xlu0 %v238, 24
  %v1799 = vpop.permute.xlu0 %1798
  %1800 = vrot.lane.b32.xlu0 %v239, 24
  %v1801 = vpop.permute.xlu0 %1800
  %1802 = vrot.lane.b32.xlu0 %v241, 24
  %v1803 = vpop.permute.xlu0 %1802
  %1804 = vrot.lane.b32.xlu0 %v242, 24
  %v1805 = vpop.permute.xlu0 %1804
  %1806 = vrot.lane.b32.xlu0 %v244, 24
  %v1807 = vpop.permute.xlu0 %1806
  %1808 = vrot.lane.b32.xlu0 %v245, 24
  %v1809 = vpop.permute.xlu0 %1808
  %1810 = vrot.lane.b32.xlu0 %v247, 24
  %v1811 = vpop.permute.xlu0 %1810
  %1812 = vrot.lane.b32.xlu0 %v248, 24
  %v1813 = vpop.permute.xlu0 %1812
  %1814 = vrot.lane.b32.xlu0 %v250, 24
  %v1815 = vpop.permute.xlu0 %1814
  %1816 = vrot.lane.b32.xlu0 %v251, 24
  %v1817 = vpop.permute.xlu0 %1816
  %1818 = vrot.lane.b32.xlu0 %v253, 24
  %v1819 = vpop.permute.xlu0 %1818
  %1820 = vrot.lane.b32.xlu0 %v254, 24
  %v1821 = vpop.permute.xlu0 %1820
  %v1890 = vrot.slane %v190, 2
  %v1891 = vrot.slane %v191, 2
  %v1892 = vsel %vm352, %v1890, %v1891
  %v1893 = vrot.slane %v192, 2
  %v1894 = vsel %vm352, %v1891, %v1893
  %v1895 = vrot.slane %v193, 2
  %v1896 = vrot.slane %v194, 2
  %v1897 = vsel %vm352, %v1895, %v1896
  %v1898 = vrot.slane %v195, 2
  %v1899 = vsel %vm352, %v1896, %v1898
  %v1900 = vrot.slane %v250, 2
  %v1901 = vrot.slane %v251, 2
  %v1902 = vsel %vm352, %v1900, %v1901
  %v1903 = vrot.slane %v252, 2
  %v1904 = vsel %vm352, %v1901, %v1903
  %v1905 = vrot.slane %v253, 2
  %v1906 = vrot.slane %v254, 2
  %v1907 = vsel %vm352, %v1905, %v1906
  %v1908 = vrot.slane %v255, 2
  %v1909 = vsel %vm352, %v1906, %v1908
  %1910 = vrot.lane.b32.xlu0 %v375, 28
  %v1911 = vpop.permute.xlu0 %1910
  %1912 = vrot.lane.b32.xlu0 %v377, 28
  %v1913 = vpop.permute.xlu0 %1912
  %1914 = vrot.lane.b32.xlu0 %v380, 28
  %v1915 = vpop.permute.xlu0 %1914
  %1916 = vrot.lane.b32.xlu0 %v382, 28
  %v1917 = vpop.permute.xlu0 %1916
  %1918 = vrot.lane.b32.xlu0 %v385, 28
  %v1919 = vpop.permute.xlu0 %1918
  %1920 = vrot.lane.b32.xlu0 %v387, 28
  %v1921 = vpop.permute.xlu0 %1920
  %1922 = vrot.lane.b32.xlu0 %v390, 28
  %v1923 = vpop.permute.xlu0 %1922
  %1924 = vrot.lane.b32.xlu0 %v392, 28
  %v1925 = vpop.permute.xlu0 %1924
  %1926 = vrot.lane.b32.xlu0 %v395, 28
  %v1927 = vpop.permute.xlu0 %1926
  %1928 = vrot.lane.b32.xlu0 %v397, 28
  %v1929 = vpop.permute.xlu0 %1928
  %1930 = vrot.lane.b32.xlu0 %v400, 28
  %v1931 = vpop.permute.xlu0 %1930
  %1932 = vrot.lane.b32.xlu0 %v402, 28
  %v1933 = vpop.permute.xlu0 %1932
  %1934 = vrot.lane.b32.xlu0 %v405, 28
  %v1935 = vpop.permute.xlu0 %1934
  %1936 = vrot.lane.b32.xlu0 %v407, 28
  %v1937 = vpop.permute.xlu0 %1936
  %1938 = vrot.lane.b32.xlu0 %v410, 28
  %v1939 = vpop.permute.xlu0 %1938
  %1940 = vrot.lane.b32.xlu0 %v412, 28
  %v1941 = vpop.permute.xlu0 %1940
  %1942 = vrot.lane.b32.xlu0 %v415, 28
  %v1943 = vpop.permute.xlu0 %1942
  %1944 = vrot.lane.b32.xlu0 %v417, 28
  %v1945 = vpop.permute.xlu0 %1944
  %1946 = vrot.lane.b32.xlu0 %v420, 28
  %v1947 = vpop.permute.xlu0 %1946
  %1948 = vrot.lane.b32.xlu0 %v422, 28
  %v1949 = vpop.permute.xlu0 %1948
  %1950 = vrot.lane.b32.xlu0 %v425, 28
  %v1951 = vpop.permute.xlu0 %1950
  %1952 = vrot.lane.b32.xlu0 %v427, 28
  %v1953 = vpop.permute.xlu0 %1952
  %1954 = vrot.lane.b32.xlu0 %v430, 28
  %v1955 = vpop.permute.xlu0 %1954
  %1956 = vrot.lane.b32.xlu0 %v432, 28
  %v1957 = vpop.permute.xlu0 %1956
  %1958 = vrot.lane.b32.xlu0 %v1264, 28
  %v1959 = vpop.permute.xlu0 %1958
  %1960 = vrot.lane.b32.xlu0 %v1266, 28
  %v1961 = vpop.permute.xlu0 %1960
  %1962 = vrot.lane.b32.xlu0 %v1269, 28
  %v1963 = vpop.permute.xlu0 %1962
  %1964 = vrot.lane.b32.xlu0 %v1271, 28
  %v1965 = vpop.permute.xlu0 %1964
  %1966 = vrot.lane.b32.xlu0 %v1892, 28
  %v1967 = vpop.permute.xlu0 %1966
  %1968 = vrot.lane.b32.xlu0 %v1894, 28
  %v1969 = vpop.permute.xlu0 %1968
  %1970 = vrot.lane.b32.xlu0 %v1897, 28
  %v1971 = vpop.permute.xlu0 %1970
  %1972 = vrot.lane.b32.xlu0 %v1899, 28
  %v1973 = vpop.permute.xlu0 %1972
  %1974 = vrot.lane.b32.xlu0 %v455, 28
  %v1975 = vpop.permute.xlu0 %1974
  %1976 = vrot.lane.b32.xlu0 %v457, 28
  %v1977 = vpop.permute.xlu0 %1976
  %1978 = vrot.lane.b32.xlu0 %v460, 28
  %v1979 = vpop.permute.xlu0 %1978
  %1980 = vrot.lane.b32.xlu0 %v462, 28
  %v1981 = vpop.permute.xlu0 %1980
  %1982 = vrot.lane.b32.xlu0 %v465, 28
  %v1983 = vpop.permute.xlu0 %1982
  %1984 = vrot.lane.b32.xlu0 %v467, 28
  %v1985 = vpop.permute.xlu0 %1984
  %1986 = vrot.lane.b32.xlu0 %v470, 28
  %v1987 = vpop.permute.xlu0 %1986
  %1988 = vrot.lane.b32.xlu0 %v472, 28
  %v1989 = vpop.permute.xlu0 %1988
  %1990 = vrot.lane.b32.xlu0 %v475, 28
  %v1991 = vpop.permute.xlu0 %1990
  %1992 = vrot.lane.b32.xlu0 %v477, 28
  %v1993 = vpop.permute.xlu0 %1992
  %1994 = vrot.lane.b32.xlu0 %v480, 28
  %v1995 = vpop.permute.xlu0 %1994
  %1996 = vrot.lane.b32.xlu0 %v482, 28
  %v1997 = vpop.permute.xlu0 %1996
  %1998 = vrot.lane.b32.xlu0 %v485, 28
  %v1999 = vpop.permute.xlu0 %1998
  %2000 = vrot.lane.b32.xlu0 %v487, 28
  %v2001 = vpop.permute.xlu0 %2000
  %2002 = vrot.lane.b32.xlu0 %v490, 28
  %v2003 = vpop.permute.xlu0 %2002
  %2004 = vrot.lane.b32.xlu0 %v492, 28
  %v2005 = vpop.permute.xlu0 %2004
  %2006 = vrot.lane.b32.xlu0 %v495, 28
  %v2007 = vpop.permute.xlu0 %2006
  %2008 = vrot.lane.b32.xlu0 %v497, 28
  %v2009 = vpop.permute.xlu0 %2008
  %2010 = vrot.lane.b32.xlu0 %v500, 28
  %v2011 = vpop.permute.xlu0 %2010
  %2012 = vrot.lane.b32.xlu0 %v502, 28
  %v2013 = vpop.permute.xlu0 %2012
  %2014 = vrot.lane.b32.xlu0 %v505, 28
  %v2015 = vpop.permute.xlu0 %2014
  %2016 = vrot.lane.b32.xlu0 %v507, 28
  %v2017 = vpop.permute.xlu0 %2016
  %2018 = vrot.lane.b32.xlu0 %v510, 28
  %v2019 = vpop.permute.xlu0 %2018
  %2020 = vrot.lane.b32.xlu0 %v512, 28
  %v2021 = vpop.permute.xlu0 %2020
  %2022 = vrot.lane.b32.xlu0 %v1274, 28
  %v2023 = vpop.permute.xlu0 %2022
  %2024 = vrot.lane.b32.xlu0 %v1276, 28
  %v2025 = vpop.permute.xlu0 %2024
  %2026 = vrot.lane.b32.xlu0 %v1279, 28
  %v2027 = vpop.permute.xlu0 %2026
  %2028 = vrot.lane.b32.xlu0 %v1281, 28
  %v2029 = vpop.permute.xlu0 %2028
  %2030 = vrot.lane.b32.xlu0 %v1902, 28
  %v2031 = vpop.permute.xlu0 %2030
  %2032 = vrot.lane.b32.xlu0 %v1904, 28
  %v2033 = vpop.permute.xlu0 %2032
  %2034 = vrot.lane.b32.xlu0 %v1907, 28
  %v2035 = vpop.permute.xlu0 %2034
  %2036 = vrot.lane.b32.xlu0 %v1909, 28
  %v2037 = vpop.permute.xlu0 %2036
  %v2102 = vrot.slane %v190, 4
  %v2103 = vrot.slane %v191, 4
  %v2104 = vsel %vm705, %v2102, %v2103
  %v2105 = vrot.slane %v192, 4
  %v2106 = vsel %vm705, %v2103, %v2105
  %v2107 = vrot.slane %v193, 4
  %v2108 = vrot.slane %v194, 4
  %v2109 = vsel %vm705, %v2107, %v2108
  %v2110 = vrot.slane %v195, 4
  %v2111 = vsel %vm705, %v2108, %v2110
  %v2112 = vrot.slane %v250, 4
  %v2113 = vrot.slane %v251, 4
  %v2114 = vsel %vm705, %v2112, %v2113
  %v2115 = vrot.slane %v252, 4
  %v2116 = vsel %vm705, %v2113, %v2115
  %v2117 = vrot.slane %v253, 4
  %v2118 = vrot.slane %v254, 4
  %v2119 = vsel %vm705, %v2117, %v2118
  %v2120 = vrot.slane %v255, 4
  %v2121 = vsel %vm705, %v2118, %v2120
  %2122 = vrot.lane.b32.xlu0 %v728, 32
  %v2123 = vpop.permute.xlu0 %2122
  %2124 = vrot.lane.b32.xlu0 %v730, 32
  %v2125 = vpop.permute.xlu0 %2124
  %2126 = vrot.lane.b32.xlu0 %v733, 32
  %v2127 = vpop.permute.xlu0 %2126
  %2128 = vrot.lane.b32.xlu0 %v735, 32
  %v2129 = vpop.permute.xlu0 %2128
  %2130 = vrot.lane.b32.xlu0 %v738, 32
  %v2131 = vpop.permute.xlu0 %2130
  %2132 = vrot.lane.b32.xlu0 %v740, 32
  %v2133 = vpop.permute.xlu0 %2132
  %2134 = vrot.lane.b32.xlu0 %v743, 32
  %v2135 = vpop.permute.xlu0 %2134
  %2136 = vrot.lane.b32.xlu0 %v745, 32
  %v2137 = vpop.permute.xlu0 %2136
  %2138 = vrot.lane.b32.xlu0 %v748, 32
  %v2139 = vpop.permute.xlu0 %2138
  %2140 = vrot.lane.b32.xlu0 %v750, 32
  %v2141 = vpop.permute.xlu0 %2140
  %2142 = vrot.lane.b32.xlu0 %v753, 32
  %v2143 = vpop.permute.xlu0 %2142
  %2144 = vrot.lane.b32.xlu0 %v755, 32
  %v2145 = vpop.permute.xlu0 %2144
  %2146 = vrot.lane.b32.xlu0 %v758, 32
  %v2147 = vpop.permute.xlu0 %2146
  %2148 = vrot.lane.b32.xlu0 %v760, 32
  %v2149 = vpop.permute.xlu0 %2148
  %2150 = vrot.lane.b32.xlu0 %v763, 32
  %v2151 = vpop.permute.xlu0 %2150
  %2152 = vrot.lane.b32.xlu0 %v765, 32
  %v2153 = vpop.permute.xlu0 %2152
  %2154 = vrot.lane.b32.xlu0 %v768, 32
  %v2155 = vpop.permute.xlu0 %2154
  %2156 = vrot.lane.b32.xlu0 %v770, 32
  %v2157 = vpop.permute.xlu0 %2156
  %2158 = vrot.lane.b32.xlu0 %v773, 32
  %v2159 = vpop.permute.xlu0 %2158
  %2160 = vrot.lane.b32.xlu0 %v775, 32
  %v2161 = vpop.permute.xlu0 %2160
  %2162 = vrot.lane.b32.xlu0 %v778, 32
  %v2163 = vpop.permute.xlu0 %2162
  %2164 = vrot.lane.b32.xlu0 %v780, 32
  %v2165 = vpop.permute.xlu0 %2164
  %2166 = vrot.lane.b32.xlu0 %v783, 32
  %v2167 = vpop.permute.xlu0 %2166
  %2168 = vrot.lane.b32.xlu0 %v785, 32
  %v2169 = vpop.permute.xlu0 %2168
  %2170 = vrot.lane.b32.xlu0 %v1476, 32
  %v2171 = vpop.permute.xlu0 %2170
  %2172 = vrot.lane.b32.xlu0 %v1478, 32
  %v2173 = vpop.permute.xlu0 %2172
  %2174 = vrot.lane.b32.xlu0 %v1481, 32
  %v2175 = vpop.permute.xlu0 %2174
  %2176 = vrot.lane.b32.xlu0 %v1483, 32
  %v2177 = vpop.permute.xlu0 %2176
  %2178 = vrot.lane.b32.xlu0 %v2104, 32
  %v2179 = vpop.permute.xlu0 %2178
  %2180 = vrot.lane.b32.xlu0 %v2106, 32
  %v2181 = vpop.permute.xlu0 %2180
  %2182 = vrot.lane.b32.xlu0 %v2109, 32
  %v2183 = vpop.permute.xlu0 %2182
  %2184 = vrot.lane.b32.xlu0 %v2111, 32
  %v2185 = vpop.permute.xlu0 %2184
  %2186 = vrot.lane.b32.xlu0 %v808, 32
  %v2187 = vpop.permute.xlu0 %2186
  %2188 = vrot.lane.b32.xlu0 %v810, 32
  %v2189 = vpop.permute.xlu0 %2188
  %2190 = vrot.lane.b32.xlu0 %v813, 32
  %v2191 = vpop.permute.xlu0 %2190
  %2192 = vrot.lane.b32.xlu0 %v815, 32
  %v2193 = vpop.permute.xlu0 %2192
  %2194 = vrot.lane.b32.xlu0 %v818, 32
  %v2195 = vpop.permute.xlu0 %2194
  %2196 = vrot.lane.b32.xlu0 %v820, 32
  %v2197 = vpop.permute.xlu0 %2196
  %2198 = vrot.lane.b32.xlu0 %v823, 32
  %v2199 = vpop.permute.xlu0 %2198
  %2200 = vrot.lane.b32.xlu0 %v825, 32
  %v2201 = vpop.permute.xlu0 %2200
  %2202 = vrot.lane.b32.xlu0 %v828, 32
  %v2203 = vpop.permute.xlu0 %2202
  %2204 = vrot.lane.b32.xlu0 %v830, 32
  %v2205 = vpop.permute.xlu0 %2204
  %2206 = vrot.lane.b32.xlu0 %v833, 32
  %v2207 = vpop.permute.xlu0 %2206
  %2208 = vrot.lane.b32.xlu0 %v835, 32
  %v2209 = vpop.permute.xlu0 %2208
  %2210 = vrot.lane.b32.xlu0 %v838, 32
  %v2211 = vpop.permute.xlu0 %2210
  %2212 = vrot.lane.b32.xlu0 %v840, 32
  %v2213 = vpop.permute.xlu0 %2212
  %2214 = vrot.lane.b32.xlu0 %v843, 32
  %v2215 = vpop.permute.xlu0 %2214
  %2216 = vrot.lane.b32.xlu0 %v845, 32
  %v2217 = vpop.permute.xlu0 %2216
  %2218 = vrot.lane.b32.xlu0 %v848, 32
  %v2219 = vpop.permute.xlu0 %2218
  %2220 = vrot.lane.b32.xlu0 %v850, 32
  %v2221 = vpop.permute.xlu0 %2220
  %2222 = vrot.lane.b32.xlu0 %v853, 32
  %v2223 = vpop.permute.xlu0 %2222
  %2224 = vrot.lane.b32.xlu0 %v855, 32
  %v2225 = vpop.permute.xlu0 %2224
  %2226 = vrot.lane.b32.xlu0 %v858, 32
  %v2227 = vpop.permute.xlu0 %2226
  %2228 = vrot.lane.b32.xlu0 %v860, 32
  %v2229 = vpop.permute.xlu0 %2228
  %2230 = vrot.lane.b32.xlu0 %v863, 32
  %v2231 = vpop.permute.xlu0 %2230
  %2232 = vrot.lane.b32.xlu0 %v865, 32
  %v2233 = vpop.permute.xlu0 %2232
  %2234 = vrot.lane.b32.xlu0 %v1486, 32
  %v2235 = vpop.permute.xlu0 %2234
  %2236 = vrot.lane.b32.xlu0 %v1488, 32
  %v2237 = vpop.permute.xlu0 %2236
  %2238 = vrot.lane.b32.xlu0 %v1491, 32
  %v2239 = vpop.permute.xlu0 %2238
  %2240 = vrot.lane.b32.xlu0 %v1493, 32
  %v2241 = vpop.permute.xlu0 %2240
  %2242 = vrot.lane.b32.xlu0 %v2114, 32
  %v2243 = vpop.permute.xlu0 %2242
  %2244 = vrot.lane.b32.xlu0 %v2116, 32
  %v2245 = vpop.permute.xlu0 %2244
  %2246 = vrot.lane.b32.xlu0 %v2119, 32
  %v2247 = vpop.permute.xlu0 %2246
  %2248 = vrot.lane.b32.xlu0 %v2121, 32
  %v2249 = vpop.permute.xlu0 %2248
  %vm2314 = vcmask 31744
  %v2315 = vsel %vm2314, %v136, %v514
  %v2316 = vsel %vm2314, %v137, %v516
  %v2317 = vsel %vm2314, %v139, %v518
  %v2318 = vsel %vm2314, %v140, %v520
  %v2319 = vsel %vm2314, %v142, %v522
  %v2320 = vsel %vm2314, %v143, %v524
  %v2321 = vsel %vm2314, %v145, %v526
  %v2322 = vsel %vm2314, %v146, %v528
  %v2323 = vsel %vm2314, %v148, %v530
  %v2324 = vsel %vm2314, %v149, %v532
  %v2325 = vsel %vm2314, %v151, %v534
  %v2326 = vsel %vm2314, %v152, %v536
  %v2327 = vsel %vm2314, %v154, %v538
  %v2328 = vsel %vm2314, %v155, %v540
  %v2329 = vsel %vm2314, %v157, %v542
  %v2330 = vsel %vm2314, %v158, %v544
  %v2331 = vsel %vm2314, %v160, %v546
  %v2332 = vsel %vm2314, %v161, %v548
  %v2333 = vsel %vm2314, %v163, %v550
  %v2334 = vsel %vm2314, %v164, %v552
  %v2335 = vsel %vm2314, %v166, %v554
  %v2336 = vsel %vm2314, %v167, %v556
  %v2337 = vsel %vm2314, %v169, %v558
  %v2338 = vsel %vm2314, %v170, %v560
  %v2339 = vsel %vm2314, %v172, %v562
  %v2340 = vsel %vm2314, %v173, %v564
  %v2341 = vsel %vm2314, %v175, %v566
  %v2342 = vsel %vm2314, %v176, %v568
  %v2343 = vsel %vm2314, %v178, %v570
  %v2344 = vsel %vm2314, %v179, %v572
  %v2345 = vsel %vm2314, %v181, %v574
  %v2346 = vsel %vm2314, %v182, %v576
  %v2347 = vsel %vm2314, %v196, %v578
  %v2348 = vsel %vm2314, %v197, %v580
  %v2349 = vsel %vm2314, %v199, %v582
  %v2350 = vsel %vm2314, %v200, %v584
  %v2351 = vsel %vm2314, %v202, %v586
  %v2352 = vsel %vm2314, %v203, %v588
  %v2353 = vsel %vm2314, %v205, %v590
  %v2354 = vsel %vm2314, %v206, %v592
  %v2355 = vsel %vm2314, %v208, %v594
  %v2356 = vsel %vm2314, %v209, %v596
  %v2357 = vsel %vm2314, %v211, %v598
  %v2358 = vsel %vm2314, %v212, %v600
  %v2359 = vsel %vm2314, %v214, %v602
  %v2360 = vsel %vm2314, %v215, %v604
  %v2361 = vsel %vm2314, %v217, %v606
  %v2362 = vsel %vm2314, %v218, %v608
  %v2363 = vsel %vm2314, %v220, %v610
  %v2364 = vsel %vm2314, %v221, %v612
  %v2365 = vsel %vm2314, %v223, %v614
  %v2366 = vsel %vm2314, %v224, %v616
  %v2367 = vsel %vm2314, %v226, %v618
  %v2368 = vsel %vm2314, %v227, %v620
  %v2369 = vsel %vm2314, %v229, %v622
  %v2370 = vsel %vm2314, %v230, %v624
  %v2371 = vsel %vm2314, %v232, %v626
  %v2372 = vsel %vm2314, %v233, %v628
  %v2373 = vsel %vm2314, %v235, %v630
  %v2374 = vsel %vm2314, %v236, %v632
  %v2375 = vsel %vm2314, %v238, %v634
  %v2376 = vsel %vm2314, %v239, %v636
  %v2377 = vsel %vm2314, %v241, %v638
  %v2378 = vsel %vm2314, %v242, %v640
  %vm2379 = vcmask 64512
  %v2380 = vsel %vm2379, %v2315, %v867
  %v2381 = vsel %vm2379, %v2316, %v869
  %v2382 = vsel %vm2379, %v2317, %v871
  %v2383 = vsel %vm2379, %v2318, %v873
  %v2384 = vsel %vm2379, %v2319, %v875
  %v2385 = vsel %vm2379, %v2320, %v877
  %v2386 = vsel %vm2379, %v2321, %v879
  %v2387 = vsel %vm2379, %v2322, %v881
  %v2388 = vsel %vm2379, %v2323, %v883
  %v2389 = vsel %vm2379, %v2324, %v885
  %v2390 = vsel %vm2379, %v2325, %v887
  %v2391 = vsel %vm2379, %v2326, %v889
  %v2392 = vsel %vm2379, %v2327, %v891
  %v2393 = vsel %vm2379, %v2328, %v893
  %v2394 = vsel %vm2379, %v2329, %v895
  %v2395 = vsel %vm2379, %v2330, %v897
  %v2396 = vsel %vm2379, %v2331, %v899
  %v2397 = vsel %vm2379, %v2332, %v901
  %v2398 = vsel %vm2379, %v2333, %v903
  %v2399 = vsel %vm2379, %v2334, %v905
  %v2400 = vsel %vm2379, %v2335, %v907
  %v2401 = vsel %vm2379, %v2336, %v909
  %v2402 = vsel %vm2379, %v2337, %v911
  %v2403 = vsel %vm2379, %v2338, %v913
  %v2404 = vsel %vm2379, %v2339, %v915
  %v2405 = vsel %vm2379, %v2340, %v917
  %v2406 = vsel %vm2379, %v2341, %v919
  %v2407 = vsel %vm2379, %v2342, %v921
  %v2408 = vsel %vm2379, %v2343, %v923
  %v2409 = vsel %vm2379, %v2344, %v925
  %v2410 = vsel %vm2379, %v2345, %v927
  %v2411 = vsel %vm2379, %v2346, %v929
  %v2412 = vsel %vm2379, %v2347, %v931
  %v2413 = vsel %vm2379, %v2348, %v933
  %v2414 = vsel %vm2379, %v2349, %v935
  %v2415 = vsel %vm2379, %v2350, %v937
  %v2416 = vsel %vm2379, %v2351, %v939
  %v2417 = vsel %vm2379, %v2352, %v941
  %v2418 = vsel %vm2379, %v2353, %v943
  %v2419 = vsel %vm2379, %v2354, %v945
  %v2420 = vsel %vm2379, %v2355, %v947
  %v2421 = vsel %vm2379, %v2356, %v949
  %v2422 = vsel %vm2379, %v2357, %v951
  %v2423 = vsel %vm2379, %v2358, %v953
  %v2424 = vsel %vm2379, %v2359, %v955
  %v2425 = vsel %vm2379, %v2360, %v957
  %v2426 = vsel %vm2379, %v2361, %v959
  %v2427 = vsel %vm2379, %v2362, %v961
  %v2428 = vsel %vm2379, %v2363, %v963
  %v2429 = vsel %vm2379, %v2364, %v965
  %v2430 = vsel %vm2379, %v2365, %v967
  %v2431 = vsel %vm2379, %v2366, %v969
  %v2432 = vsel %vm2379, %v2367, %v971
  %v2433 = vsel %vm2379, %v2368, %v973
  %v2434 = vsel %vm2379, %v2369, %v975
  %v2435 = vsel %vm2379, %v2370, %v977
  %v2436 = vsel %vm2379, %v2371, %v979
  %v2437 = vsel %vm2379, %v2372, %v981
  %v2438 = vsel %vm2379, %v2373, %v983
  %v2439 = vsel %vm2379, %v2374, %v985
  %v2440 = vsel %vm2379, %v2375, %v987
  %v2441 = vsel %vm2379, %v2376, %v989
  %v2442 = vsel %vm2379, %v2377, %v991
  %v2443 = vsel %vm2379, %v2378, %v993
  %vm2444 = vcmask 97280
  %v2445 = vsel %vm2444, %v2380, %v1067
  %v2446 = vsel %vm2444, %v2381, %v1069
  %v2447 = vsel %vm2444, %v2382, %v1071
  %v2448 = vsel %vm2444, %v2383, %v1073
  %v2449 = vsel %vm2444, %v2384, %v1075
  %v2450 = vsel %vm2444, %v2385, %v1077
  %v2451 = vsel %vm2444, %v2386, %v1079
  %v2452 = vsel %vm2444, %v2387, %v1081
  %v2453 = vsel %vm2444, %v2388, %v1083
  %v2454 = vsel %vm2444, %v2389, %v1085
  %v2455 = vsel %vm2444, %v2390, %v1087
  %v2456 = vsel %vm2444, %v2391, %v1089
  %v2457 = vsel %vm2444, %v2392, %v1091
  %v2458 = vsel %vm2444, %v2393, %v1093
  %v2459 = vsel %vm2444, %v2394, %v1095
  %v2460 = vsel %vm2444, %v2395, %v1097
  %v2461 = vsel %vm2444, %v2396, %v1099
  %v2462 = vsel %vm2444, %v2397, %v1101
  %v2463 = vsel %vm2444, %v2398, %v1103
  %v2464 = vsel %vm2444, %v2399, %v1105
  %v2465 = vsel %vm2444, %v2400, %v1107
  %v2466 = vsel %vm2444, %v2401, %v1109
  %v2467 = vsel %vm2444, %v2402, %v1111
  %v2468 = vsel %vm2444, %v2403, %v1113
  %v2469 = vsel %vm2444, %v2404, %v1115
  %v2470 = vsel %vm2444, %v2405, %v1117
  %v2471 = vsel %vm2444, %v2406, %v1119
  %v2472 = vsel %vm2444, %v2407, %v1121
  %v2473 = vsel %vm2444, %v2408, %v1123
  %v2474 = vsel %vm2444, %v2409, %v1125
  %v2475 = vsel %vm2444, %v2410, %v1127
  %v2476 = vsel %vm2444, %v2411, %v1129
  %v2477 = vsel %vm2444, %v2412, %v1131
  %v2478 = vsel %vm2444, %v2413, %v1133
  %v2479 = vsel %vm2444, %v2414, %v1135
  %v2480 = vsel %vm2444, %v2415, %v1137
  %v2481 = vsel %vm2444, %v2416, %v1139
  %v2482 = vsel %vm2444, %v2417, %v1141
  %v2483 = vsel %vm2444, %v2418, %v1143
  %v2484 = vsel %vm2444, %v2419, %v1145
  %v2485 = vsel %vm2444, %v2420, %v1147
  %v2486 = vsel %vm2444, %v2421, %v1149
  %v2487 = vsel %vm2444, %v2422, %v1151
  %v2488 = vsel %vm2444, %v2423, %v1153
  %v2489 = vsel %vm2444, %v2424, %v1155
  %v2490 = vsel %vm2444, %v2425, %v1157
  %v2491 = vsel %vm2444, %v2426, %v1159
  %v2492 = vsel %vm2444, %v2427, %v1161
  %v2493 = vsel %vm2444, %v2428, %v1163
  %v2494 = vsel %vm2444, %v2429, %v1165
  %v2495 = vsel %vm2444, %v2430, %v1167
  %v2496 = vsel %vm2444, %v2431, %v1169
  %v2497 = vsel %vm2444, %v2432, %v1171
  %v2498 = vsel %vm2444, %v2433, %v1173
  %v2499 = vsel %vm2444, %v2434, %v1175
  %v2500 = vsel %vm2444, %v2435, %v1177
  %v2501 = vsel %vm2444, %v2436, %v1179
  %v2502 = vsel %vm2444, %v2437, %v1181
  %v2503 = vsel %vm2444, %v2438, %v1183
  %v2504 = vsel %vm2444, %v2439, %v1185
  %v2505 = vsel %vm2444, %v2440, %v1187
  %v2506 = vsel %vm2444, %v2441, %v1189
  %v2507 = vsel %vm2444, %v2442, %v1191
  %v2508 = vsel %vm2444, %v2443, %v1193
  %vm2509 = vcmask 130048
  %v2510 = vsel %vm2509, %v2445, %v1283
  %v2511 = vsel %vm2509, %v2446, %v1285
  %v2512 = vsel %vm2509, %v2447, %v1287
  %v2513 = vsel %vm2509, %v2448, %v1289
  %v2514 = vsel %vm2509, %v2449, %v1291
  %v2515 = vsel %vm2509, %v2450, %v1293
  %v2516 = vsel %vm2509, %v2451, %v1295
  %v2517 = vsel %vm2509, %v2452, %v1297
  %v2518 = vsel %vm2509, %v2453, %v1299
  %v2519 = vsel %vm2509, %v2454, %v1301
  %v2520 = vsel %vm2509, %v2455, %v1303
  %v2521 = vsel %vm2509, %v2456, %v1305
  %v2522 = vsel %vm2509, %v2457, %v1307
  %v2523 = vsel %vm2509, %v2458, %v1309
  %v2524 = vsel %vm2509, %v2459, %v1311
  %v2525 = vsel %vm2509, %v2460, %v1313
  %v2526 = vsel %vm2509, %v2461, %v1315
  %v2527 = vsel %vm2509, %v2462, %v1317
  %v2528 = vsel %vm2509, %v2463, %v1319
  %v2529 = vsel %vm2509, %v2464, %v1321
  %v2530 = vsel %vm2509, %v2465, %v1323
  %v2531 = vsel %vm2509, %v2466, %v1325
  %v2532 = vsel %vm2509, %v2467, %v1327
  %v2533 = vsel %vm2509, %v2468, %v1329
  %v2534 = vsel %vm2509, %v2469, %v1331
  %v2535 = vsel %vm2509, %v2470, %v1333
  %v2536 = vsel %vm2509, %v2471, %v1335
  %v2537 = vsel %vm2509, %v2472, %v1337
  %v2538 = vsel %vm2509, %v2473, %v1339
  %v2539 = vsel %vm2509, %v2474, %v1341
  %v2540 = vsel %vm2509, %v2475, %v1343
  %v2541 = vsel %vm2509, %v2476, %v1345
  %v2542 = vsel %vm2509, %v2477, %v1347
  %v2543 = vsel %vm2509, %v2478, %v1349
  %v2544 = vsel %vm2509, %v2479, %v1351
  %v2545 = vsel %vm2509, %v2480, %v1353
  %v2546 = vsel %vm2509, %v2481, %v1355
  %v2547 = vsel %vm2509, %v2482, %v1357
  %v2548 = vsel %vm2509, %v2483, %v1359
  %v2549 = vsel %vm2509, %v2484, %v1361
  %v2550 = vsel %vm2509, %v2485, %v1363
  %v2551 = vsel %vm2509, %v2486, %v1365
  %v2552 = vsel %vm2509, %v2487, %v1367
  %v2553 = vsel %vm2509, %v2488, %v1369
  %v2554 = vsel %vm2509, %v2489, %v1371
  %v2555 = vsel %vm2509, %v2490, %v1373
  %v2556 = vsel %vm2509, %v2491, %v1375
  %v2557 = vsel %vm2509, %v2492, %v1377
  %v2558 = vsel %vm2509, %v2493, %v1379
  %v2559 = vsel %vm2509, %v2494, %v1381
  %v2560 = vsel %vm2509, %v2495, %v1383
  %v2561 = vsel %vm2509, %v2496, %v1385
  %v2562 = vsel %vm2509, %v2497, %v1387
  %v2563 = vsel %vm2509, %v2498, %v1389
  %v2564 = vsel %vm2509, %v2499, %v1391
  %v2565 = vsel %vm2509, %v2500, %v1393
  %v2566 = vsel %vm2509, %v2501, %v1395
  %v2567 = vsel %vm2509, %v2502, %v1397
  %v2568 = vsel %vm2509, %v2503, %v1399
  %v2569 = vsel %vm2509, %v2504, %v1401
  %v2570 = vsel %vm2509, %v2505, %v1403
  %v2571 = vsel %vm2509, %v2506, %v1405
  %v2572 = vsel %vm2509, %v2507, %v1407
  %v2573 = vsel %vm2509, %v2508, %v1409
  %vm2574 = vcmask 162816
  %v2575 = vsel %vm2574, %v2510, %v1495
  %v2576 = vsel %vm2574, %v2511, %v1497
  %v2577 = vsel %vm2574, %v2512, %v1499
  %v2578 = vsel %vm2574, %v2513, %v1501
  %v2579 = vsel %vm2574, %v2514, %v1503
  %v2580 = vsel %vm2574, %v2515, %v1505
  %v2581 = vsel %vm2574, %v2516, %v1507
  %v2582 = vsel %vm2574, %v2517, %v1509
  %v2583 = vsel %vm2574, %v2518, %v1511
  %v2584 = vsel %vm2574, %v2519, %v1513
  %v2585 = vsel %vm2574, %v2520, %v1515
  %v2586 = vsel %vm2574, %v2521, %v1517
  %v2587 = vsel %vm2574, %v2522, %v1519
  %v2588 = vsel %vm2574, %v2523, %v1521
  %v2589 = vsel %vm2574, %v2524, %v1523
  %v2590 = vsel %vm2574, %v2525, %v1525
  %v2591 = vsel %vm2574, %v2526, %v1527
  %v2592 = vsel %vm2574, %v2527, %v1529
  %v2593 = vsel %vm2574, %v2528, %v1531
  %v2594 = vsel %vm2574, %v2529, %v1533
  %v2595 = vsel %vm2574, %v2530, %v1535
  %v2596 = vsel %vm2574, %v2531, %v1537
  %v2597 = vsel %vm2574, %v2532, %v1539
  %v2598 = vsel %vm2574, %v2533, %v1541
  %v2599 = vsel %vm2574, %v2534, %v1543
  %v2600 = vsel %vm2574, %v2535, %v1545
  %v2601 = vsel %vm2574, %v2536, %v1547
  %v2602 = vsel %vm2574, %v2537, %v1549
  %v2603 = vsel %vm2574, %v2538, %v1551
  %v2604 = vsel %vm2574, %v2539, %v1553
  %v2605 = vsel %vm2574, %v2540, %v1555
  %v2606 = vsel %vm2574, %v2541, %v1557
  %v2607 = vsel %vm2574, %v2542, %v1559
  %v2608 = vsel %vm2574, %v2543, %v1561
  %v2609 = vsel %vm2574, %v2544, %v1563
  %v2610 = vsel %vm2574, %v2545, %v1565
  %v2611 = vsel %vm2574, %v2546, %v1567
  %v2612 = vsel %vm2574, %v2547, %v1569
  %v2613 = vsel %vm2574, %v2548, %v1571
  %v2614 = vsel %vm2574, %v2549, %v1573
  %v2615 = vsel %vm2574, %v2550, %v1575
  %v2616 = vsel %vm2574, %v2551, %v1577
  %v2617 = vsel %vm2574, %v2552, %v1579
  %v2618 = vsel %vm2574, %v2553, %v1581
  %v2619 = vsel %vm2574, %v2554, %v1583
  %v2620 = vsel %vm2574, %v2555, %v1585
  %v2621 = vsel %vm2574, %v2556, %v1587
  %v2622 = vsel %vm2574, %v2557, %v1589
  %v2623 = vsel %vm2574, %v2558, %v1591
  %v2624 = vsel %vm2574, %v2559, %v1593
  %v2625 = vsel %vm2574, %v2560, %v1595
  %v2626 = vsel %vm2574, %v2561, %v1597
  %v2627 = vsel %vm2574, %v2562, %v1599
  %v2628 = vsel %vm2574, %v2563, %v1601
  %v2629 = vsel %vm2574, %v2564, %v1603
  %v2630 = vsel %vm2574, %v2565, %v1605
  %v2631 = vsel %vm2574, %v2566, %v1607
  %v2632 = vsel %vm2574, %v2567, %v1609
  %v2633 = vsel %vm2574, %v2568, %v1611
  %v2634 = vsel %vm2574, %v2569, %v1613
  %v2635 = vsel %vm2574, %v2570, %v1615
  %v2636 = vsel %vm2574, %v2571, %v1617
  %v2637 = vsel %vm2574, %v2572, %v1619
  %v2638 = vsel %vm2574, %v2573, %v1621
  %vm2639 = vcmask 195584
  %v2640 = vsel %vm2639, %v2575, %v1695
  %v2641 = vsel %vm2639, %v2576, %v1697
  %v2642 = vsel %vm2639, %v2577, %v1699
  %v2643 = vsel %vm2639, %v2578, %v1701
  %v2644 = vsel %vm2639, %v2579, %v1703
  %v2645 = vsel %vm2639, %v2580, %v1705
  %v2646 = vsel %vm2639, %v2581, %v1707
  %v2647 = vsel %vm2639, %v2582, %v1709
  %v2648 = vsel %vm2639, %v2583, %v1711
  %v2649 = vsel %vm2639, %v2584, %v1713
  %v2650 = vsel %vm2639, %v2585, %v1715
  %v2651 = vsel %vm2639, %v2586, %v1717
  %v2652 = vsel %vm2639, %v2587, %v1719
  %v2653 = vsel %vm2639, %v2588, %v1721
  %v2654 = vsel %vm2639, %v2589, %v1723
  %v2655 = vsel %vm2639, %v2590, %v1725
  %v2656 = vsel %vm2639, %v2591, %v1727
  %v2657 = vsel %vm2639, %v2592, %v1729
  %v2658 = vsel %vm2639, %v2593, %v1731
  %v2659 = vsel %vm2639, %v2594, %v1733
  %v2660 = vsel %vm2639, %v2595, %v1735
  %v2661 = vsel %vm2639, %v2596, %v1737
  %v2662 = vsel %vm2639, %v2597, %v1739
  %v2663 = vsel %vm2639, %v2598, %v1741
  %v2664 = vsel %vm2639, %v2599, %v1743
  %v2665 = vsel %vm2639, %v2600, %v1745
  %v2666 = vsel %vm2639, %v2601, %v1747
  %v2667 = vsel %vm2639, %v2602, %v1749
  %v2668 = vsel %vm2639, %v2603, %v1751
  %v2669 = vsel %vm2639, %v2604, %v1753
  %v2670 = vsel %vm2639, %v2605, %v1755
  %v2671 = vsel %vm2639, %v2606, %v1757
  %v2672 = vsel %vm2639, %v2607, %v1759
  %v2673 = vsel %vm2639, %v2608, %v1761
  %v2674 = vsel %vm2639, %v2609, %v1763
  %v2675 = vsel %vm2639, %v2610, %v1765
  %v2676 = vsel %vm2639, %v2611, %v1767
  %v2677 = vsel %vm2639, %v2612, %v1769
  %v2678 = vsel %vm2639, %v2613, %v1771
  %v2679 = vsel %vm2639, %v2614, %v1773
  %v2680 = vsel %vm2639, %v2615, %v1775
  %v2681 = vsel %vm2639, %v2616, %v1777
  %v2682 = vsel %vm2639, %v2617, %v1779
  %v2683 = vsel %vm2639, %v2618, %v1781
  %v2684 = vsel %vm2639, %v2619, %v1783
  %v2685 = vsel %vm2639, %v2620, %v1785
  %v2686 = vsel %vm2639, %v2621, %v1787
  %v2687 = vsel %vm2639, %v2622, %v1789
  %v2688 = vsel %vm2639, %v2623, %v1791
  %v2689 = vsel %vm2639, %v2624, %v1793
  %v2690 = vsel %vm2639, %v2625, %v1795
  %v2691 = vsel %vm2639, %v2626, %v1797
  %v2692 = vsel %vm2639, %v2627, %v1799
  %v2693 = vsel %vm2639, %v2628, %v1801
  %v2694 = vsel %vm2639, %v2629, %v1803
  %v2695 = vsel %vm2639, %v2630, %v1805
  %v2696 = vsel %vm2639, %v2631, %v1807
  %v2697 = vsel %vm2639, %v2632, %v1809
  %v2698 = vsel %vm2639, %v2633, %v1811
  %v2699 = vsel %vm2639, %v2634, %v1813
  %v2700 = vsel %vm2639, %v2635, %v1815
  %v2701 = vsel %vm2639, %v2636, %v1817
  %v2702 = vsel %vm2639, %v2637, %v1819
  %v2703 = vsel %vm2639, %v2638, %v1821
  %vm2704 = vcmask 228352
  %v2705 = vsel %vm2704, %v2640, %v1911
  %v2706 = vsel %vm2704, %v2641, %v1913
  %v2707 = vsel %vm2704, %v2642, %v1915
  %v2708 = vsel %vm2704, %v2643, %v1917
  %v2709 = vsel %vm2704, %v2644, %v1919
  %v2710 = vsel %vm2704, %v2645, %v1921
  %v2711 = vsel %vm2704, %v2646, %v1923
  %v2712 = vsel %vm2704, %v2647, %v1925
  %v2713 = vsel %vm2704, %v2648, %v1927
  %v2714 = vsel %vm2704, %v2649, %v1929
  %v2715 = vsel %vm2704, %v2650, %v1931
  %v2716 = vsel %vm2704, %v2651, %v1933
  %v2717 = vsel %vm2704, %v2652, %v1935
  %v2718 = vsel %vm2704, %v2653, %v1937
  %v2719 = vsel %vm2704, %v2654, %v1939
  %v2720 = vsel %vm2704, %v2655, %v1941
  %v2721 = vsel %vm2704, %v2656, %v1943
  %v2722 = vsel %vm2704, %v2657, %v1945
  %v2723 = vsel %vm2704, %v2658, %v1947
  %v2724 = vsel %vm2704, %v2659, %v1949
  %v2725 = vsel %vm2704, %v2660, %v1951
  %v2726 = vsel %vm2704, %v2661, %v1953
  %v2727 = vsel %vm2704, %v2662, %v1955
  %v2728 = vsel %vm2704, %v2663, %v1957
  %v2729 = vsel %vm2704, %v2664, %v1959
  %v2730 = vsel %vm2704, %v2665, %v1961
  %v2731 = vsel %vm2704, %v2666, %v1963
  %v2732 = vsel %vm2704, %v2667, %v1965
  %v2733 = vsel %vm2704, %v2668, %v1967
  %v2734 = vsel %vm2704, %v2669, %v1969
  %v2735 = vsel %vm2704, %v2670, %v1971
  %v2736 = vsel %vm2704, %v2671, %v1973
  %v2737 = vsel %vm2704, %v2672, %v1975
  %v2738 = vsel %vm2704, %v2673, %v1977
  %v2739 = vsel %vm2704, %v2674, %v1979
  %v2740 = vsel %vm2704, %v2675, %v1981
  %v2741 = vsel %vm2704, %v2676, %v1983
  %v2742 = vsel %vm2704, %v2677, %v1985
  %v2743 = vsel %vm2704, %v2678, %v1987
  %v2744 = vsel %vm2704, %v2679, %v1989
  %v2745 = vsel %vm2704, %v2680, %v1991
  %v2746 = vsel %vm2704, %v2681, %v1993
  %v2747 = vsel %vm2704, %v2682, %v1995
  %v2748 = vsel %vm2704, %v2683, %v1997
  %v2749 = vsel %vm2704, %v2684, %v1999
  %v2750 = vsel %vm2704, %v2685, %v2001
  %v2751 = vsel %vm2704, %v2686, %v2003
  %v2752 = vsel %vm2704, %v2687, %v2005
  %v2753 = vsel %vm2704, %v2688, %v2007
  %v2754 = vsel %vm2704, %v2689, %v2009
  %v2755 = vsel %vm2704, %v2690, %v2011
  %v2756 = vsel %vm2704, %v2691, %v2013
  %v2757 = vsel %vm2704, %v2692, %v2015
  %v2758 = vsel %vm2704, %v2693, %v2017
  %v2759 = vsel %vm2704, %v2694, %v2019
  %v2760 = vsel %vm2704, %v2695, %v2021
  %v2761 = vsel %vm2704, %v2696, %v2023
  %v2762 = vsel %vm2704, %v2697, %v2025
  %v2763 = vsel %vm2704, %v2698, %v2027
  %v2764 = vsel %vm2704, %v2699, %v2029
  %v2765 = vsel %vm2704, %v2700, %v2031
  %v2766 = vsel %vm2704, %v2701, %v2033
  %v2767 = vsel %vm2704, %v2702, %v2035
  %v2768 = vsel %vm2704, %v2703, %v2037
  %vm2769 = vcmask 261120
  %v2770 = vsel %vm2769, %v2705, %v2123
  %v2771 = vsel %vm2769, %v2706, %v2125
  %v2772 = vsel %vm2769, %v2707, %v2127
  %v2773 = vsel %vm2769, %v2708, %v2129
  %v2774 = vsel %vm2769, %v2709, %v2131
  %v2775 = vsel %vm2769, %v2710, %v2133
  %v2776 = vsel %vm2769, %v2711, %v2135
  %v2777 = vsel %vm2769, %v2712, %v2137
  %v2778 = vsel %vm2769, %v2713, %v2139
  %v2779 = vsel %vm2769, %v2714, %v2141
  %v2780 = vsel %vm2769, %v2715, %v2143
  %v2781 = vsel %vm2769, %v2716, %v2145
  %v2782 = vsel %vm2769, %v2717, %v2147
  %v2783 = vsel %vm2769, %v2718, %v2149
  %v2784 = vsel %vm2769, %v2719, %v2151
  %v2785 = vsel %vm2769, %v2720, %v2153
  %v2786 = vsel %vm2769, %v2721, %v2155
  %v2787 = vsel %vm2769, %v2722, %v2157
  %v2788 = vsel %vm2769, %v2723, %v2159
  %v2789 = vsel %vm2769, %v2724, %v2161
  %v2790 = vsel %vm2769, %v2725, %v2163
  %v2791 = vsel %vm2769, %v2726, %v2165
  %v2792 = vsel %vm2769, %v2727, %v2167
  %v2793 = vsel %vm2769, %v2728, %v2169
  %v2794 = vsel %vm2769, %v2729, %v2171
  %v2795 = vsel %vm2769, %v2730, %v2173
  %v2796 = vsel %vm2769, %v2731, %v2175
  %v2797 = vsel %vm2769, %v2732, %v2177
  %v2798 = vsel %vm2769, %v2733, %v2179
  %v2799 = vsel %vm2769, %v2734, %v2181
  %v2800 = vsel %vm2769, %v2735, %v2183
  %v2801 = vsel %vm2769, %v2736, %v2185
  %v2802 = vsel %vm2769, %v2737, %v2187
  %v2803 = vsel %vm2769, %v2738, %v2189
  %v2804 = vsel %vm2769, %v2739, %v2191
  %v2805 = vsel %vm2769, %v2740, %v2193
  %v2806 = vsel %vm2769, %v2741, %v2195
  %v2807 = vsel %vm2769, %v2742, %v2197
  %v2808 = vsel %vm2769, %v2743, %v2199
  %v2809 = vsel %vm2769, %v2744, %v2201
  %v2810 = vsel %vm2769, %v2745, %v2203
  %v2811 = vsel %vm2769, %v2746, %v2205
  %v2812 = vsel %vm2769, %v2747, %v2207
  %v2813 = vsel %vm2769, %v2748, %v2209
  %v2814 = vsel %vm2769, %v2749, %v2211
  %v2815 = vsel %vm2769, %v2750, %v2213
  %v2816 = vsel %vm2769, %v2751, %v2215
  %v2817 = vsel %vm2769, %v2752, %v2217
  %v2818 = vsel %vm2769, %v2753, %v2219
  %v2819 = vsel %vm2769, %v2754, %v2221
  %v2820 = vsel %vm2769, %v2755, %v2223
  %v2821 = vsel %vm2769, %v2756, %v2225
  %v2822 = vsel %vm2769, %v2757, %v2227
  %v2823 = vsel %vm2769, %v2758, %v2229
  %v2824 = vsel %vm2769, %v2759, %v2231
  %v2825 = vsel %vm2769, %v2760, %v2233
  %v2826 = vsel %vm2769, %v2761, %v2235
  %v2827 = vsel %vm2769, %v2762, %v2237
  %v2828 = vsel %vm2769, %v2763, %v2239
  %v2829 = vsel %vm2769, %v2764, %v2241
  %v2830 = vsel %vm2769, %v2765, %v2243
  %v2831 = vsel %vm2769, %v2766, %v2245
  %v2832 = vsel %vm2769, %v2767, %v2247
  %v2833 = vsel %vm2769, %v2768, %v2249
  %v2834 = vld [vmem:[%s1] sm:$0xff]
  %v2835 = vld [vmem:[%s1 + $0x8] sm:$0xff]
  %v2836 = vld [vmem:[%s1 + $0x10] sm:$0xff]
  %v2837 = vld [vmem:[%s1 + $0x18] sm:$0xff]
  %v2838 = vld [vmem:[%s1 + $0x20] sm:$0xf]
  %vm2839 = vcmask 293888
  %v2841 = vsel %vm2839, %v2770, 0
  %v2844 = vsel %vm2839, %v2771, 0
  %v2847 = vsel %vm2839, %v2772, 0
  %v2850 = vsel %vm2839, %v2773, 0
  %v2853 = vsel %vm2839, %v2774, 0
  %v2856 = vsel %vm2839, %v2775, 0
  %v2859 = vsel %vm2839, %v2776, 0
  %v2862 = vsel %vm2839, %v2777, 0
  %v2865 = vsel %vm2839, %v2778, 0
  %v2868 = vsel %vm2839, %v2779, 0
  %v2871 = vsel %vm2839, %v2780, 0
  %v2874 = vsel %vm2839, %v2781, 0
  %v2877 = vsel %vm2839, %v2782, 0
  %v2880 = vsel %vm2839, %v2783, 0
  %v2883 = vsel %vm2839, %v2784, 0
  %v2886 = vsel %vm2839, %v2785, 0
  %v2889 = vsel %vm2839, %v2786, 0
  %v2892 = vsel %vm2839, %v2787, 0
  %v2895 = vsel %vm2839, %v2788, 0
  %v2898 = vsel %vm2839, %v2789, 0
  %v2901 = vsel %vm2839, %v2790, 0
  %v2904 = vsel %vm2839, %v2791, 0
  %v2907 = vsel %vm2839, %v2792, 0
  %v2910 = vsel %vm2839, %v2793, 0
  %v2913 = vsel %vm2839, %v2794, 0
  %v2916 = vsel %vm2839, %v2795, 0
  %v2919 = vsel %vm2839, %v2796, 0
  %v2922 = vsel %vm2839, %v2797, 0
  %v2925 = vsel %vm2839, %v2798, 0
  %v2928 = vsel %vm2839, %v2799, 0
  %v2931 = vsel %vm2839, %v2800, 0
  %v2934 = vsel %vm2839, %v2801, 0
  %v2937 = vsel %vm2839, %v2802, 0
  %v2940 = vsel %vm2839, %v2803, 0
  %v2943 = vsel %vm2839, %v2804, 0
  %v2946 = vsel %vm2839, %v2805, 0
  %v2949 = vsel %vm2839, %v2806, 0
  %v2952 = vsel %vm2839, %v2807, 0
  %v2955 = vsel %vm2839, %v2808, 0
  %v2958 = vsel %vm2839, %v2809, 0
  %v2961 = vsel %vm2839, %v2810, 0
  %v2964 = vsel %vm2839, %v2811, 0
  %v2967 = vsel %vm2839, %v2812, 0
  %v2970 = vsel %vm2839, %v2813, 0
  %v2973 = vsel %vm2839, %v2814, 0
  %v2976 = vsel %vm2839, %v2815, 0
  %v2979 = vsel %vm2839, %v2816, 0
  %v2982 = vsel %vm2839, %v2817, 0
  %v2985 = vsel %vm2839, %v2818, 0
  %v2988 = vsel %vm2839, %v2819, 0
  %v2991 = vsel %vm2839, %v2820, 0
  %v2994 = vsel %vm2839, %v2821, 0
  %v2997 = vsel %vm2839, %v2822, 0
  %v3000 = vsel %vm2839, %v2823, 0
  %v3003 = vsel %vm2839, %v2824, 0
  %v3006 = vsel %vm2839, %v2825, 0
  %v3009 = vsel %vm2839, %v2826, 0
  %v3012 = vsel %vm2839, %v2827, 0
  %v3015 = vsel %vm2839, %v2828, 0
  %v3018 = vsel %vm2839, %v2829, 0
  %v3021 = vsel %vm2839, %v2830, 0
  %v3024 = vsel %vm2839, %v2831, 0
  %v3027 = vsel %vm2839, %v2832, 0
  %v3030 = vsel %vm2839, %v2833, 0
  %v3033 = vsel %vm705, %v2838, 0
  %3035 = vmatprep.subr.mxu0 0.0
  %3036 = vmatpush1.msra.mxu0 %v2834
  %3037 = vmatprep.subr.mxu0 0.0
  %3038 = vmatpush1.msra.mxu0 %v2835
  %3039 = vmatprep.subr.mxu0 0.0
  %3040 = vmatpush1.msra.mxu0 %v2836
  %3041 = vmatprep.subr.mxu0 0.0
  %3042 = vmatpush1.msra.mxu0 %v2837
  %3043 = vmatprep.subr.mxu0 0.0
  %3044 = vmatpush1.msra.mxu0 %v3033
  %3045 = vmatprep.subr.mxu0 0.0
  %3046 = vmatpush1.msra.mxu0 0.0
  %3047 = vmatprep.subr.mxu0 0.0
  %3048 = vmatpush1.msra.mxu0 0.0
  %3049 = vmatprep.subr.mxu0 0.0
  %3050 = vmatpush1.msra.mxu0 0.0
  %3051 = vmatprep.subr.mxu0 0.0
  %3052 = vmatpush1.msra.mxu0 0.0
  %3053 = vmatprep.subr.mxu0 0.0
  %3054 = vmatpush1.msra.mxu0 0.0
  %3055 = vmatprep.subr.mxu0 0.0
  %3056 = vmatpush1.msra.mxu0 0.0
  %3057 = vmatprep.subr.mxu0 0.0
  %3058 = vmatpush1.msra.mxu0 0.0
  %3059 = vmatprep.subr.mxu0 0.0
  %3060 = vmatpush1.msra.mxu0 0.0
  %3061 = vmatprep.subr.mxu0 0.0
  %3062 = vmatpush1.msra.mxu0 0.0
  %3063 = vmatprep.subr.mxu0 0.0
  %3064 = vmatpush1.msra.mxu0 0.0
  %3065 = vmatprep.subr.mxu0 0.0
  %3066 = vmatpush1.msra.mxu0 0.0
  %3067 = vmatprep.subr.mxu0 0.0
  %3068 = vmatpush1.msra.mxu0 0.0
  %3069 = vmatprep.subr.mxu0 0.0
  %3070 = vmatpush1.msra.mxu0 0.0
  %3071 = vmatprep.subr.mxu0 0.0
  %3072 = vmatpush1.msra.mxu0 0.0
  %3073 = vmatprep.subr.mxu0 0.0
  %3074 = vmatpush1.msra.mxu0 0.0
  %3075 = vmatprep.subr.mxu0 0.0
  %3076 = vmatpush1.msra.mxu0 0.0
  %3077 = vmatprep.subr.mxu0 0.0
  %3078 = vmatpush1.msra.mxu0 0.0
  %3079 = vmatprep.subr.mxu0 0.0
  %3080 = vmatpush1.msra.mxu0 0.0
  %3081 = vmatprep.subr.mxu0 0.0
  %3082 = vmatpush1.msra.mxu0 0.0
  %3083 = vmatprep.subr.mxu0 0.0
  %3084 = vmatpush1.msra.mxu0 0.0
  %3085 = vmatprep.subr.mxu0 0.0
  %3086 = vmatpush1.msra.mxu0 0.0
  %3087 = vmatprep.subr.mxu0 0.0
  %3088 = vmatpush1.msra.mxu0 0.0
  %3089 = vmatprep.subr.mxu0 0.0
  %3090 = vmatpush1.msra.mxu0 0.0
  %3091 = vmatprep.subr.mxu0 0.0
  %3092 = vmatpush1.msra.mxu0 0.0
  %3093 = vmatprep.subr.mxu0 0.0
  %3094 = vmatpush1.msra.mxu0 0.0
  %3095 = vmatprep.subr.mxu0 0.0
  %3096 = vmatpush1.msra.mxu0 0.0
  %3097 = vmatprep.subr.mxu0 0.0
  %3098 = vmatpush1.msra.mxu0 0.0
  %3099 = vmatprep.mubr.f32.mxu0 0.0
  %3100 = vmatmul.mubr.f32.gmra.mrb[0].mxu0 %v2841
  %v3101 = vpop.f32.mrb[0].mxu0
  %v3102 = vadd.f32 0.0, %v3101
  %v3103 = vpop.f32.mrb[0].mxu0
  %3104 = vmatprep.mubr.f32.mxu0 0.0
  %3105 = vmatmul.mubr.f32.gmra.mrb[0].mxu0 %v2844
  %v3106 = vpop.f32.mrb[0].mxu0
  %v3107 = vadd.f32 0.0, %v3106
  %v3108 = vpop.f32.mrb[0].mxu0
  %3109 = vmatprep.mubr.f32.mxu0 0.0
  %3110 = vmatmul.mubr.f32.gmra.mrb[0].mxu0 %v2847
  %v3111 = vpop.f32.mrb[0].mxu0
  %v3112 = vadd.f32 0.0, %v3111
  %v3113 = vpop.f32.mrb[0].mxu0
  %3114 = vmatprep.mubr.f32.mxu0 0.0
  %3115 = vmatmul.mubr.f32.gmra.mrb[0].mxu0 %v2850
  %v3116 = vpop.f32.mrb[0].mxu0
  %v3117 = vadd.f32 0.0, %v3116
  %v3118 = vpop.f32.mrb[0].mxu0
  %3119 = vmatprep.mubr.f32.mxu0 0.0
  %3120 = vmatmul.mubr.f32.gmra.mrb[0].mxu0 %v2853
  %v3121 = vpop.f32.mrb[0].mxu0
  %v3122 = vadd.f32 0.0, %v3121
  %v3123 = vpop.f32.mrb[0].mxu0
  %3124 = vmatprep.mubr.f32.mxu0 0.0
  %3125 = vmatmul.mubr.f32.gmra.mrb[0].mxu0 %v2856
  %v3126 = vpop.f32.mrb[0].mxu0
  %v3127 = vadd.f32 0.0, %v3126
  %v3128 = vpop.f32.mrb[0].mxu0
  %3129 = vmatprep.mubr.f32.mxu0 0.0
  %3130 = vmatmul.mubr.f32.gmra.mrb[0].mxu0 %v2859
  %v3131 = vpop.f32.mrb[0].mxu0
  %v3132 = vadd.f32 0.0, %v3131
  %v3133 = vpop.f32.mrb[0].mxu0
  %3134 = vmatprep.mubr.f32.mxu0 0.0
  %3135 = vmatmul.mubr.f32.gmra.mrb[0].mxu0 %v2862
  %v3136 = vpop.f32.mrb[0].mxu0
  %v3137 = vadd.f32 0.0, %v3136
  %v3138 = vpop.f32.mrb[0].mxu0
  %3139 = vmatprep.mubr.f32.mxu0 0.0
  %3140 = vmatmul.mubr.f32.gmra.mrb[0].mxu0 %v2865
  %v3141 = vpop.f32.mrb[0].mxu0
  %v3142 = vadd.f32 0.0, %v3141
  %v3143 = vpop.f32.mrb[0].mxu0
  %3144 = vmatprep.mubr.f32.mxu0 0.0
  %3145 = vmatmul.mubr.f32.gmra.mrb[0].mxu0 %v2868
  %v3146 = vpop.f32.mrb[0].mxu0
  %v3147 = vadd.f32 0.0, %v3146
  %v3148 = vpop.f32.mrb[0].mxu0
  %3149 = vmatprep.mubr.f32.mxu0 0.0
  %3150 = vmatmul.mubr.f32.gmra.mrb[0].mxu0 %v2871
  %v3151 = vpop.f32.mrb[0].mxu0
  %v3152 = vadd.f32 0.0, %v3151
  %v3153 = vpop.f32.mrb[0].mxu0
  %3154 = vmatprep.mubr.f32.mxu0 0.0
  %3155 = vmatmul.mubr.f32.gmra.mrb[0].mxu0 %v2874
  %v3156 = vpop.f32.mrb[0].mxu0
  %v3157 = vadd.f32 0.0, %v3156
  %v3158 = vpop.f32.mrb[0].mxu0
  %3159 = vmatprep.mubr.f32.mxu0 0.0
  %3160 = vmatmul.mubr.f32.gmra.mrb[0].mxu0 %v2877
  %v3161 = vpop.f32.mrb[0].mxu0
  %v3162 = vadd.f32 0.0, %v3161
  %v3163 = vpop.f32.mrb[0].mxu0
  %3164 = vmatprep.mubr.f32.mxu0 0.0
  %3165 = vmatmul.mubr.f32.gmra.mrb[0].mxu0 %v2880
  %v3166 = vpop.f32.mrb[0].mxu0
  %v3167 = vadd.f32 0.0, %v3166
  %v3168 = vpop.f32.mrb[0].mxu0
  %3169 = vmatprep.mubr.f32.mxu0 0.0
  %3170 = vmatmul.mubr.f32.gmra.mrb[0].mxu0 %v2883
  %v3171 = vpop.f32.mrb[0].mxu0
  %v3172 = vadd.f32 0.0, %v3171
  %v3173 = vpop.f32.mrb[0].mxu0
  %3174 = vmatprep.mubr.f32.mxu0 0.0
  %3175 = vmatmul.mubr.f32.gmra.mrb[0].mxu0 %v2886
  %v3176 = vpop.f32.mrb[0].mxu0
  %v3177 = vadd.f32 0.0, %v3176
  %v3178 = vpop.f32.mrb[0].mxu0
  %3179 = vmatprep.mubr.f32.mxu0 0.0
  %3180 = vmatmul.mubr.f32.gmra.mrb[0].mxu0 %v2889
  %v3181 = vpop.f32.mrb[0].mxu0
  %v3182 = vadd.f32 0.0, %v3181
  %v3183 = vpop.f32.mrb[0].mxu0
  %3184 = vmatprep.mubr.f32.mxu0 0.0
  %3185 = vmatmul.mubr.f32.gmra.mrb[0].mxu0 %v2892
  %v3186 = vpop.f32.mrb[0].mxu0
  %v3187 = vadd.f32 0.0, %v3186
  %v3188 = vpop.f32.mrb[0].mxu0
  %3189 = vmatprep.mubr.f32.mxu0 0.0
  %3190 = vmatmul.mubr.f32.gmra.mrb[0].mxu0 %v2895
  %v3191 = vpop.f32.mrb[0].mxu0
  %v3192 = vadd.f32 0.0, %v3191
  %v3193 = vpop.f32.mrb[0].mxu0
  %3194 = vmatprep.mubr.f32.mxu0 0.0
  %3195 = vmatmul.mubr.f32.gmra.mrb[0].mxu0 %v2898
  %v3196 = vpop.f32.mrb[0].mxu0
  %v3197 = vadd.f32 0.0, %v3196
  %v3198 = vpop.f32.mrb[0].mxu0
  %3199 = vmatprep.mubr.f32.mxu0 0.0
  %3200 = vmatmul.mubr.f32.gmra.mrb[0].mxu0 %v2901
  %v3201 = vpop.f32.mrb[0].mxu0
  %v3202 = vadd.f32 0.0, %v3201
  %v3203 = vpop.f32.mrb[0].mxu0
  %3204 = vmatprep.mubr.f32.mxu0 0.0
  %3205 = vmatmul.mubr.f32.gmra.mrb[0].mxu0 %v2904
  %v3206 = vpop.f32.mrb[0].mxu0
  %v3207 = vadd.f32 0.0, %v3206
  %v3208 = vpop.f32.mrb[0].mxu0
  %3209 = vmatprep.mubr.f32.mxu0 0.0
  %3210 = vmatmul.mubr.f32.gmra.mrb[0].mxu0 %v2907
  %v3211 = vpop.f32.mrb[0].mxu0
  %v3212 = vadd.f32 0.0, %v3211
  %v3213 = vpop.f32.mrb[0].mxu0
  %3214 = vmatprep.mubr.f32.mxu0 0.0
  %3215 = vmatmul.mubr.f32.gmra.mrb[0].mxu0 %v2910
  %v3216 = vpop.f32.mrb[0].mxu0
  %v3217 = vadd.f32 0.0, %v3216
  %v3218 = vpop.f32.mrb[0].mxu0
  %3219 = vmatprep.mubr.f32.mxu0 0.0
  %3220 = vmatmul.mubr.f32.gmra.mrb[0].mxu0 %v2913
  %v3221 = vpop.f32.mrb[0].mxu0
  %v3222 = vadd.f32 0.0, %v3221
  %v3223 = vpop.f32.mrb[0].mxu0
  %3224 = vmatprep.mubr.f32.mxu0 0.0
  %3225 = vmatmul.mubr.f32.gmra.mrb[0].mxu0 %v2916
  %v3226 = vpop.f32.mrb[0].mxu0
  %v3227 = vadd.f32 0.0, %v3226
  %v3228 = vpop.f32.mrb[0].mxu0
  %3229 = vmatprep.mubr.f32.mxu0 0.0
  %3230 = vmatmul.mubr.f32.gmra.mrb[0].mxu0 %v2919
  %v3231 = vpop.f32.mrb[0].mxu0
  %v3232 = vadd.f32 0.0, %v3231
  %v3233 = vpop.f32.mrb[0].mxu0
  %3234 = vmatprep.mubr.f32.mxu0 0.0
  %3235 = vmatmul.mubr.f32.gmra.mrb[0].mxu0 %v2922
  %v3236 = vpop.f32.mrb[0].mxu0
  %v3237 = vadd.f32 0.0, %v3236
  %v3238 = vpop.f32.mrb[0].mxu0
  %3239 = vmatprep.mubr.f32.mxu0 0.0
  %3240 = vmatmul.mubr.f32.gmra.mrb[0].mxu0 %v2925
  %v3241 = vpop.f32.mrb[0].mxu0
  %v3242 = vadd.f32 0.0, %v3241
  %v3243 = vpop.f32.mrb[0].mxu0
  %3244 = vmatprep.mubr.f32.mxu0 0.0
  %3245 = vmatmul.mubr.f32.gmra.mrb[0].mxu0 %v2928
  %v3246 = vpop.f32.mrb[0].mxu0
  %v3247 = vadd.f32 0.0, %v3246
  %v3248 = vpop.f32.mrb[0].mxu0
  %3249 = vmatprep.mubr.f32.mxu0 0.0
  %3250 = vmatmul.mubr.f32.gmra.mrb[0].mxu0 %v2931
  %v3251 = vpop.f32.mrb[0].mxu0
  %v3252 = vadd.f32 0.0, %v3251
  %v3253 = vpop.f32.mrb[0].mxu0
  %3254 = vmatprep.mubr.f32.mxu0 0.0
  %3255 = vmatmul.mubr.f32.gmra.mrb[0].mxu0 %v2934
  %v3256 = vpop.f32.mrb[0].mxu0
  %v3257 = vadd.f32 0.0, %v3256
  %v3258 = vpop.f32.mrb[0].mxu0
  %3259 = vmatprep.mubr.f32.mxu0 0.0
  %3260 = vmatmul.mubr.f32.gmra.mrb[0].mxu0 %v2937
  %v3261 = vpop.f32.mrb[0].mxu0
  %v3262 = vadd.f32 0.0, %v3261
  %v3263 = vpop.f32.mrb[0].mxu0
  %3264 = vmatprep.mubr.f32.mxu0 0.0
  %3265 = vmatmul.mubr.f32.gmra.mrb[0].mxu0 %v2940
  %v3266 = vpop.f32.mrb[0].mxu0
  %v3267 = vadd.f32 0.0, %v3266
  %v3268 = vpop.f32.mrb[0].mxu0
  %3269 = vmatprep.mubr.f32.mxu0 0.0
  %3270 = vmatmul.mubr.f32.gmra.mrb[0].mxu0 %v2943
  %v3271 = vpop.f32.mrb[0].mxu0
  %v3272 = vadd.f32 0.0, %v3271
  %v3273 = vpop.f32.mrb[0].mxu0
  %3274 = vmatprep.mubr.f32.mxu0 0.0
  %3275 = vmatmul.mubr.f32.gmra.mrb[0].mxu0 %v2946
  %v3276 = vpop.f32.mrb[0].mxu0
  %v3277 = vadd.f32 0.0, %v3276
  %v3278 = vpop.f32.mrb[0].mxu0
  %3279 = vmatprep.mubr.f32.mxu0 0.0
  %3280 = vmatmul.mubr.f32.gmra.mrb[0].mxu0 %v2949
  %v3281 = vpop.f32.mrb[0].mxu0
  %v3282 = vadd.f32 0.0, %v3281
  %v3283 = vpop.f32.mrb[0].mxu0
  %3284 = vmatprep.mubr.f32.mxu0 0.0
  %3285 = vmatmul.mubr.f32.gmra.mrb[0].mxu0 %v2952
  %v3286 = vpop.f32.mrb[0].mxu0
  %v3287 = vadd.f32 0.0, %v3286
  %v3288 = vpop.f32.mrb[0].mxu0
  %3289 = vmatprep.mubr.f32.mxu0 0.0
  %3290 = vmatmul.mubr.f32.gmra.mrb[0].mxu0 %v2955
  %v3291 = vpop.f32.mrb[0].mxu0
  %v3292 = vadd.f32 0.0, %v3291
  %v3293 = vpop.f32.mrb[0].mxu0
  %3294 = vmatprep.mubr.f32.mxu0 0.0
  %3295 = vmatmul.mubr.f32.gmra.mrb[0].mxu0 %v2958
  %v3296 = vpop.f32.mrb[0].mxu0
  %v3297 = vadd.f32 0.0, %v3296
  %v3298 = vpop.f32.mrb[0].mxu0
  %3299 = vmatprep.mubr.f32.mxu0 0.0
  %3300 = vmatmul.mubr.f32.gmra.mrb[0].mxu0 %v2961
  %v3301 = vpop.f32.mrb[0].mxu0
  %v3302 = vadd.f32 0.0, %v3301
  %v3303 = vpop.f32.mrb[0].mxu0
  %3304 = vmatprep.mubr.f32.mxu0 0.0
  %3305 = vmatmul.mubr.f32.gmra.mrb[0].mxu0 %v2964
  %v3306 = vpop.f32.mrb[0].mxu0
  %v3307 = vadd.f32 0.0, %v3306
  %v3308 = vpop.f32.mrb[0].mxu0
  %3309 = vmatprep.mubr.f32.mxu0 0.0
  %3310 = vmatmul.mubr.f32.gmra.mrb[0].mxu0 %v2967
  %v3311 = vpop.f32.mrb[0].mxu0
  %v3312 = vadd.f32 0.0, %v3311
  %v3313 = vpop.f32.mrb[0].mxu0
  %3314 = vmatprep.mubr.f32.mxu0 0.0
  %3315 = vmatmul.mubr.f32.gmra.mrb[0].mxu0 %v2970
  %v3316 = vpop.f32.mrb[0].mxu0
  %v3317 = vadd.f32 0.0, %v3316
  %v3318 = vpop.f32.mrb[0].mxu0
  %3319 = vmatprep.mubr.f32.mxu0 0.0
  %3320 = vmatmul.mubr.f32.gmra.mrb[0].mxu0 %v2973
  %v3321 = vpop.f32.mrb[0].mxu0
  %v3322 = vadd.f32 0.0, %v3321
  %v3323 = vpop.f32.mrb[0].mxu0
  %3324 = vmatprep.mubr.f32.mxu0 0.0
  %3325 = vmatmul.mubr.f32.gmra.mrb[0].mxu0 %v2976
  %v3326 = vpop.f32.mrb[0].mxu0
  %v3327 = vadd.f32 0.0, %v3326
  %v3328 = vpop.f32.mrb[0].mxu0
  %3329 = vmatprep.mubr.f32.mxu0 0.0
  %3330 = vmatmul.mubr.f32.gmra.mrb[0].mxu0 %v2979
  %v3331 = vpop.f32.mrb[0].mxu0
  %v3332 = vadd.f32 0.0, %v3331
  %v3333 = vpop.f32.mrb[0].mxu0
  %3334 = vmatprep.mubr.f32.mxu0 0.0
  %3335 = vmatmul.mubr.f32.gmra.mrb[0].mxu0 %v2982
  %v3336 = vpop.f32.mrb[0].mxu0
  %v3337 = vadd.f32 0.0, %v3336
  %v3338 = vpop.f32.mrb[0].mxu0
  %3339 = vmatprep.mubr.f32.mxu0 0.0
  %3340 = vmatmul.mubr.f32.gmra.mrb[0].mxu0 %v2985
  %v3341 = vpop.f32.mrb[0].mxu0
  %v3342 = vadd.f32 0.0, %v3341
  %v3343 = vpop.f32.mrb[0].mxu0
  %3344 = vmatprep.mubr.f32.mxu0 0.0
  %3345 = vmatmul.mubr.f32.gmra.mrb[0].mxu0 %v2988
  %v3346 = vpop.f32.mrb[0].mxu0
  %v3347 = vadd.f32 0.0, %v3346
  %v3348 = vpop.f32.mrb[0].mxu0
  %3349 = vmatprep.mubr.f32.mxu0 0.0
  %3350 = vmatmul.mubr.f32.gmra.mrb[0].mxu0 %v2991
  %v3351 = vpop.f32.mrb[0].mxu0
  %v3352 = vadd.f32 0.0, %v3351
  %v3353 = vpop.f32.mrb[0].mxu0
  %3354 = vmatprep.mubr.f32.mxu0 0.0
  %3355 = vmatmul.mubr.f32.gmra.mrb[0].mxu0 %v2994
  %v3356 = vpop.f32.mrb[0].mxu0
  %v3357 = vadd.f32 0.0, %v3356
  %v3358 = vpop.f32.mrb[0].mxu0
  %3359 = vmatprep.mubr.f32.mxu0 0.0
  %3360 = vmatmul.mubr.f32.gmra.mrb[0].mxu0 %v2997
  %v3361 = vpop.f32.mrb[0].mxu0
  %v3362 = vadd.f32 0.0, %v3361
  %v3363 = vpop.f32.mrb[0].mxu0
  %3364 = vmatprep.mubr.f32.mxu0 0.0
  %3365 = vmatmul.mubr.f32.gmra.mrb[0].mxu0 %v3000
  %v3366 = vpop.f32.mrb[0].mxu0
  %v3367 = vadd.f32 0.0, %v3366
  %v3368 = vpop.f32.mrb[0].mxu0
  %3369 = vmatprep.mubr.f32.mxu0 0.0
  %3370 = vmatmul.mubr.f32.gmra.mrb[0].mxu0 %v3003
  %v3371 = vpop.f32.mrb[0].mxu0
  %v3372 = vadd.f32 0.0, %v3371
  %v3373 = vpop.f32.mrb[0].mxu0
  %3374 = vmatprep.mubr.f32.mxu0 0.0
  %3375 = vmatmul.mubr.f32.gmra.mrb[0].mxu0 %v3006
  %v3376 = vpop.f32.mrb[0].mxu0
  %v3377 = vadd.f32 0.0, %v3376
  %v3378 = vpop.f32.mrb[0].mxu0
  %3379 = vmatprep.mubr.f32.mxu0 0.0
  %3380 = vmatmul.mubr.f32.gmra.mrb[0].mxu0 %v3009
  %v3381 = vpop.f32.mrb[0].mxu0
  %v3382 = vadd.f32 0.0, %v3381
  %v3383 = vpop.f32.mrb[0].mxu0
  %3384 = vmatprep.mubr.f32.mxu0 0.0
  %3385 = vmatmul.mubr.f32.gmra.mrb[0].mxu0 %v3012
  %v3386 = vpop.f32.mrb[0].mxu0
  %v3387 = vadd.f32 0.0, %v3386
  %v3388 = vpop.f32.mrb[0].mxu0
  %3389 = vmatprep.mubr.f32.mxu0 0.0
  %3390 = vmatmul.mubr.f32.gmra.mrb[0].mxu0 %v3015
  %v3391 = vpop.f32.mrb[0].mxu0
  %v3392 = vadd.f32 0.0, %v3391
  %v3393 = vpop.f32.mrb[0].mxu0
  %3394 = vmatprep.mubr.f32.mxu0 0.0
  %3395 = vmatmul.mubr.f32.gmra.mrb[0].mxu0 %v3018
  %v3396 = vpop.f32.mrb[0].mxu0
  %v3397 = vadd.f32 0.0, %v3396
  %v3398 = vpop.f32.mrb[0].mxu0
  %3399 = vmatprep.mubr.f32.mxu0 0.0
  %3400 = vmatmul.mubr.f32.gmra.mrb[0].mxu0 %v3021
  %v3401 = vpop.f32.mrb[0].mxu0
  %v3402 = vadd.f32 0.0, %v3401
  %v3403 = vpop.f32.mrb[0].mxu0
  %3404 = vmatprep.mubr.f32.mxu0 0.0
  %3405 = vmatmul.mubr.f32.gmra.mrb[0].mxu0 %v3024
  %v3406 = vpop.f32.mrb[0].mxu0
  %v3407 = vadd.f32 0.0, %v3406
  %v3408 = vpop.f32.mrb[0].mxu0
  %3409 = vmatprep.mubr.f32.mxu0 0.0
  %3410 = vmatmul.mubr.f32.gmra.mrb[0].mxu0 %v3027
  %v3411 = vpop.f32.mrb[0].mxu0
  %v3412 = vadd.f32 0.0, %v3411
  %v3413 = vpop.f32.mrb[0].mxu0
  %3414 = vmatprep.mubr.f32.mxu0 0.0
  %3415 = vmatmul.mubr.f32.gmra.mrb[0].mxu0 %v3030
  %v3416 = vpop.f32.mrb[0].mxu0
  %v3417 = vadd.f32 0.0, %v3416
  %v3418 = vpop.f32.mrb[0].mxu0
  %3419 = vdwg.mxu0
  %v3420 = vsel %vm2379, %v3102, 0.0
  %v3421 = vsel %vm2379, %v3107, 0.0
  %v3422 = vadd.f32 %v3420, %v3421
  %v3423 = vsel %vm2379, %v3112, 0.0
  %v3424 = vadd.f32 %v3422, %v3423
  %v3425 = vsel %vm2379, %v3117, 0.0
  %v3426 = vadd.f32 %v3424, %v3425
  %v3427 = vsel %vm2379, %v3122, 0.0
  %v3428 = vadd.f32 %v3426, %v3427
  %v3429 = vsel %vm2379, %v3127, 0.0
  %v3430 = vadd.f32 %v3428, %v3429
  %v3431 = vsel %vm2379, %v3132, 0.0
  %v3432 = vadd.f32 %v3430, %v3431
  %v3433 = vsel %vm2379, %v3137, 0.0
  %v3434 = vadd.f32 %v3432, %v3433
  %v3435 = vsel %vm2379, %v3142, 0.0
  %v3436 = vadd.f32 %v3434, %v3435
  %v3437 = vsel %vm2379, %v3147, 0.0
  %v3438 = vadd.f32 %v3436, %v3437
  %v3439 = vsel %vm2379, %v3152, 0.0
  %v3440 = vadd.f32 %v3438, %v3439
  %v3441 = vsel %vm2379, %v3157, 0.0
  %v3442 = vadd.f32 %v3440, %v3441
  %v3443 = vsel %vm2379, %v3162, 0.0
  %v3444 = vadd.f32 %v3442, %v3443
  %v3445 = vsel %vm2379, %v3167, 0.0
  %v3446 = vadd.f32 %v3444, %v3445
  %v3447 = vsel %vm2379, %v3172, 0.0
  %v3448 = vadd.f32 %v3446, %v3447
  %v3449 = vsel %vm2379, %v3177, 0.0
  %v3450 = vadd.f32 %v3448, %v3449
  %v3451 = vsel %vm2379, %v3182, 0.0
  %v3452 = vadd.f32 %v3450, %v3451
  %v3453 = vsel %vm2379, %v3187, 0.0
  %v3454 = vadd.f32 %v3452, %v3453
  %v3455 = vsel %vm2379, %v3192, 0.0
  %v3456 = vadd.f32 %v3454, %v3455
  %v3457 = vsel %vm2379, %v3197, 0.0
  %v3458 = vadd.f32 %v3456, %v3457
  %v3459 = vsel %vm2379, %v3202, 0.0
  %v3460 = vadd.f32 %v3458, %v3459
  %v3461 = vsel %vm2379, %v3207, 0.0
  %v3462 = vadd.f32 %v3460, %v3461
  %v3463 = vsel %vm2379, %v3212, 0.0
  %v3464 = vadd.f32 %v3462, %v3463
  %v3465 = vsel %vm2379, %v3217, 0.0
  %v3466 = vadd.f32 %v3464, %v3465
  %v3467 = vsel %vm2379, %v3222, 0.0
  %v3468 = vadd.f32 %v3466, %v3467
  %v3469 = vsel %vm2379, %v3227, 0.0
  %v3470 = vadd.f32 %v3468, %v3469
  %v3471 = vsel %vm2379, %v3232, 0.0
  %v3472 = vadd.f32 %v3470, %v3471
  %v3473 = vsel %vm2379, %v3237, 0.0
  %v3474 = vadd.f32 %v3472, %v3473
  %v3475 = vsel %vm2379, %v3242, 0.0
  %v3476 = vadd.f32 %v3474, %v3475
  %v3477 = vsel %vm2379, %v3247, 0.0
  %v3478 = vadd.f32 %v3476, %v3477
  %v3479 = vsel %vm2379, %v3252, 0.0
  %v3480 = vadd.f32 %v3478, %v3479
  %v3481 = vsel %vm2379, %v3257, 0.0
  %v3482 = vadd.f32 %v3480, %v3481
  %v3483 = vsel %vm2379, %v3262, 0.0
  %v3484 = vadd.f32 %v3482, %v3483
  %v3485 = vsel %vm2379, %v3267, 0.0
  %v3486 = vadd.f32 %v3484, %v3485
  %v3487 = vsel %vm2379, %v3272, 0.0
  %v3488 = vadd.f32 %v3486, %v3487
  %v3489 = vsel %vm2379, %v3277, 0.0
  %v3490 = vadd.f32 %v3488, %v3489
  %v3491 = vsel %vm2379, %v3282, 0.0
  %v3492 = vadd.f32 %v3490, %v3491
  %v3493 = vsel %vm2379, %v3287, 0.0
  %v3494 = vadd.f32 %v3492, %v3493
  %v3495 = vsel %vm2379, %v3292, 0.0
  %v3496 = vadd.f32 %v3494, %v3495
  %v3497 = vsel %vm2379, %v3297, 0.0
  %v3498 = vadd.f32 %v3496, %v3497
  %v3499 = vsel %vm2379, %v3302, 0.0
  %v3500 = vadd.f32 %v3498, %v3499
  %v3501 = vsel %vm2379, %v3307, 0.0
  %v3502 = vadd.f32 %v3500, %v3501
  %v3503 = vsel %vm2379, %v3312, 0.0
  %v3504 = vadd.f32 %v3502, %v3503
  %v3505 = vsel %vm2379, %v3317, 0.0
  %v3506 = vadd.f32 %v3504, %v3505
  %v3507 = vsel %vm2379, %v3322, 0.0
  %v3508 = vadd.f32 %v3506, %v3507
  %v3509 = vsel %vm2379, %v3327, 0.0
  %v3510 = vadd.f32 %v3508, %v3509
  %v3511 = vsel %vm2379, %v3332, 0.0
  %v3512 = vadd.f32 %v3510, %v3511
  %v3513 = vsel %vm2379, %v3337, 0.0
  %v3514 = vadd.f32 %v3512, %v3513
  %v3515 = vsel %vm2379, %v3342, 0.0
  %v3516 = vadd.f32 %v3514, %v3515
  %v3517 = vsel %vm2379, %v3347, 0.0
  %v3518 = vadd.f32 %v3516, %v3517
  %v3519 = vsel %vm2379, %v3352, 0.0
  %v3520 = vadd.f32 %v3518, %v3519
  %v3521 = vsel %vm2379, %v3357, 0.0
  %v3522 = vadd.f32 %v3520, %v3521
  %v3523 = vsel %vm2379, %v3362, 0.0
  %v3524 = vadd.f32 %v3522, %v3523
  %v3525 = vsel %vm2379, %v3367, 0.0
  %v3526 = vadd.f32 %v3524, %v3525
  %v3527 = vsel %vm2379, %v3372, 0.0
  %v3528 = vadd.f32 %v3526, %v3527
  %v3529 = vsel %vm2379, %v3377, 0.0
  %v3530 = vadd.f32 %v3528, %v3529
  %v3531 = vsel %vm2379, %v3382, 0.0
  %v3532 = vadd.f32 %v3530, %v3531
  %v3533 = vsel %vm2379, %v3387, 0.0
  %v3534 = vadd.f32 %v3532, %v3533
  %v3535 = vsel %vm2379, %v3392, 0.0
  %v3536 = vadd.f32 %v3534, %v3535
  %v3537 = vsel %vm2379, %v3397, 0.0
  %v3538 = vadd.f32 %v3536, %v3537
  %v3539 = vsel %vm2379, %v3402, 0.0
  %v3540 = vadd.f32 %v3538, %v3539
  %v3541 = vsel %vm2379, %v3407, 0.0
  %v3542 = vadd.f32 %v3540, %v3541
  %v3543 = vsel %vm2379, %v3412, 0.0
  %v3544 = vadd.f32 %v3542, %v3543
  %v3545 = vsel %vm2379, %v3417, 0.0
  %v3546 = vadd.f32 %v3544, %v3545
  %v3547 = vrot.slane %v3546, 4
  %v3548 = vadd.f32 %v3546, %v3547
  %v3549 = vrot.slane %v3548, 2
  %v3550 = vadd.f32 %v3548, %v3549
  %v3551 = vrot.slane %v3550, 1
  %v3552 = vadd.f32 %v3550, %v3551
  %v3553 = vmul.f32 %v3102, %v3102
  %v3554 = vmul.f32 %v3107, %v3107
  %v3555 = vmul.f32 %v3112, %v3112
  %v3556 = vmul.f32 %v3117, %v3117
  %v3557 = vmul.f32 %v3122, %v3122
  %v3558 = vmul.f32 %v3127, %v3127
  %v3559 = vmul.f32 %v3132, %v3132
  %v3560 = vmul.f32 %v3137, %v3137
  %v3561 = vmul.f32 %v3142, %v3142
  %v3562 = vmul.f32 %v3147, %v3147
  %v3563 = vmul.f32 %v3152, %v3152
  %v3564 = vmul.f32 %v3157, %v3157
  %v3565 = vmul.f32 %v3162, %v3162
  %v3566 = vmul.f32 %v3167, %v3167
  %v3567 = vmul.f32 %v3172, %v3172
  %v3568 = vmul.f32 %v3177, %v3177
  %v3569 = vmul.f32 %v3182, %v3182
  %v3570 = vmul.f32 %v3187, %v3187
  %v3571 = vmul.f32 %v3192, %v3192
  %v3572 = vmul.f32 %v3197, %v3197
  %v3573 = vmul.f32 %v3202, %v3202
  %v3574 = vmul.f32 %v3207, %v3207
  %v3575 = vmul.f32 %v3212, %v3212
  %v3576 = vmul.f32 %v3217, %v3217
  %v3577 = vmul.f32 %v3222, %v3222
  %v3578 = vmul.f32 %v3227, %v3227
  %v3579 = vmul.f32 %v3232, %v3232
  %v3580 = vmul.f32 %v3237, %v3237
  %v3581 = vmul.f32 %v3242, %v3242
  %v3582 = vmul.f32 %v3247, %v3247
  %v3583 = vmul.f32 %v3252, %v3252
  %v3584 = vmul.f32 %v3257, %v3257
  %v3585 = vmul.f32 %v3262, %v3262
  %v3586 = vmul.f32 %v3267, %v3267
  %v3587 = vmul.f32 %v3272, %v3272
  %v3588 = vmul.f32 %v3277, %v3277
  %v3589 = vmul.f32 %v3282, %v3282
  %v3590 = vmul.f32 %v3287, %v3287
  %v3591 = vmul.f32 %v3292, %v3292
  %v3592 = vmul.f32 %v3297, %v3297
  %v3593 = vmul.f32 %v3302, %v3302
  %v3594 = vmul.f32 %v3307, %v3307
  %v3595 = vmul.f32 %v3312, %v3312
  %v3596 = vmul.f32 %v3317, %v3317
  %v3597 = vmul.f32 %v3322, %v3322
  %v3598 = vmul.f32 %v3327, %v3327
  %v3599 = vmul.f32 %v3332, %v3332
  %v3600 = vmul.f32 %v3337, %v3337
  %v3601 = vmul.f32 %v3342, %v3342
  %v3602 = vmul.f32 %v3347, %v3347
  %v3603 = vmul.f32 %v3352, %v3352
  %v3604 = vmul.f32 %v3357, %v3357
  %v3605 = vmul.f32 %v3362, %v3362
  %v3606 = vmul.f32 %v3367, %v3367
  %v3607 = vmul.f32 %v3372, %v3372
  %v3608 = vmul.f32 %v3377, %v3377
  %v3609 = vmul.f32 %v3382, %v3382
  %v3610 = vmul.f32 %v3387, %v3387
  %v3611 = vmul.f32 %v3392, %v3392
  %v3612 = vmul.f32 %v3397, %v3397
  %v3613 = vmul.f32 %v3402, %v3402
  %v3614 = vmul.f32 %v3407, %v3407
  %v3615 = vmul.f32 %v3412, %v3412
  %v3616 = vmul.f32 %v3417, %v3417
  %v3617 = vsel %vm2379, %v3553, 0.0
  %v3618 = vsel %vm2379, %v3554, 0.0
  %v3619 = vadd.f32 %v3617, %v3618
  %v3620 = vsel %vm2379, %v3555, 0.0
  %v3621 = vadd.f32 %v3619, %v3620
  %v3622 = vsel %vm2379, %v3556, 0.0
  %v3623 = vadd.f32 %v3621, %v3622
  %v3624 = vsel %vm2379, %v3557, 0.0
  %v3625 = vadd.f32 %v3623, %v3624
  %v3626 = vsel %vm2379, %v3558, 0.0
  %v3627 = vadd.f32 %v3625, %v3626
  %v3628 = vsel %vm2379, %v3559, 0.0
  %v3629 = vadd.f32 %v3627, %v3628
  %v3630 = vsel %vm2379, %v3560, 0.0
  %v3631 = vadd.f32 %v3629, %v3630
  %v3632 = vsel %vm2379, %v3561, 0.0
  %v3633 = vadd.f32 %v3631, %v3632
  %v3634 = vsel %vm2379, %v3562, 0.0
  %v3635 = vadd.f32 %v3633, %v3634
  %v3636 = vsel %vm2379, %v3563, 0.0
  %v3637 = vadd.f32 %v3635, %v3636
  %v3638 = vsel %vm2379, %v3564, 0.0
  %v3639 = vadd.f32 %v3637, %v3638
  %v3640 = vsel %vm2379, %v3565, 0.0
  %v3641 = vadd.f32 %v3639, %v3640
  %v3642 = vsel %vm2379, %v3566, 0.0
  %v3643 = vadd.f32 %v3641, %v3642
  %v3644 = vsel %vm2379, %v3567, 0.0
  %v3645 = vadd.f32 %v3643, %v3644
  %v3646 = vsel %vm2379, %v3568, 0.0
  %v3647 = vadd.f32 %v3645, %v3646
  %v3648 = vsel %vm2379, %v3569, 0.0
  %v3649 = vadd.f32 %v3647, %v3648
  %v3650 = vsel %vm2379, %v3570, 0.0
  %v3651 = vadd.f32 %v3649, %v3650
  %v3652 = vsel %vm2379, %v3571, 0.0
  %v3653 = vadd.f32 %v3651, %v3652
  %v3654 = vsel %vm2379, %v3572, 0.0
  %v3655 = vadd.f32 %v3653, %v3654
  %v3656 = vsel %vm2379, %v3573, 0.0
  %v3657 = vadd.f32 %v3655, %v3656
  %v3658 = vsel %vm2379, %v3574, 0.0
  %v3659 = vadd.f32 %v3657, %v3658
  %v3660 = vsel %vm2379, %v3575, 0.0
  %v3661 = vadd.f32 %v3659, %v3660
  %v3662 = vsel %vm2379, %v3576, 0.0
  %v3663 = vadd.f32 %v3661, %v3662
  %v3664 = vsel %vm2379, %v3577, 0.0
  %v3665 = vadd.f32 %v3663, %v3664
  %v3666 = vsel %vm2379, %v3578, 0.0
  %v3667 = vadd.f32 %v3665, %v3666
  %v3668 = vsel %vm2379, %v3579, 0.0
  %v3669 = vadd.f32 %v3667, %v3668
  %v3670 = vsel %vm2379, %v3580, 0.0
  %v3671 = vadd.f32 %v3669, %v3670
  %v3672 = vsel %vm2379, %v3581, 0.0
  %v3673 = vadd.f32 %v3671, %v3672
  %v3674 = vsel %vm2379, %v3582, 0.0
  %v3675 = vadd.f32 %v3673, %v3674
  %v3676 = vsel %vm2379, %v3583, 0.0
  %v3677 = vadd.f32 %v3675, %v3676
  %v3678 = vsel %vm2379, %v3584, 0.0
  %v3679 = vadd.f32 %v3677, %v3678
  %v3680 = vsel %vm2379, %v3585, 0.0
  %v3681 = vadd.f32 %v3679, %v3680
  %v3682 = vsel %vm2379, %v3586, 0.0
  %v3683 = vadd.f32 %v3681, %v3682
  %v3684 = vsel %vm2379, %v3587, 0.0
  %v3685 = vadd.f32 %v3683, %v3684
  %v3686 = vsel %vm2379, %v3588, 0.0
  %v3687 = vadd.f32 %v3685, %v3686
  %v3688 = vsel %vm2379, %v3589, 0.0
  %v3689 = vadd.f32 %v3687, %v3688
  %v3690 = vsel %vm2379, %v3590, 0.0
  %v3691 = vadd.f32 %v3689, %v3690
  %v3692 = vsel %vm2379, %v3591, 0.0
  %v3693 = vadd.f32 %v3691, %v3692
  %v3694 = vsel %vm2379, %v3592, 0.0
  %v3695 = vadd.f32 %v3693, %v3694
  %v3696 = vsel %vm2379, %v3593, 0.0
  %v3697 = vadd.f32 %v3695, %v3696
  %v3698 = vsel %vm2379, %v3594, 0.0
  %v3699 = vadd.f32 %v3697, %v3698
  %v3700 = vsel %vm2379, %v3595, 0.0
  %v3701 = vadd.f32 %v3699, %v3700
  %v3702 = vsel %vm2379, %v3596, 0.0
  %v3703 = vadd.f32 %v3701, %v3702
  %v3704 = vsel %vm2379, %v3597, 0.0
  %v3705 = vadd.f32 %v3703, %v3704
  %v3706 = vsel %vm2379, %v3598, 0.0
  %v3707 = vadd.f32 %v3705, %v3706
  %v3708 = vsel %vm2379, %v3599, 0.0
  %v3709 = vadd.f32 %v3707, %v3708
  %v3710 = vsel %vm2379, %v3600, 0.0
  %v3711 = vadd.f32 %v3709, %v3710
  %v3712 = vsel %vm2379, %v3601, 0.0
  %v3713 = vadd.f32 %v3711, %v3712
  %v3714 = vsel %vm2379, %v3602, 0.0
  %v3715 = vadd.f32 %v3713, %v3714
  %v3716 = vsel %vm2379, %v3603, 0.0
  %v3717 = vadd.f32 %v3715, %v3716
  %v3718 = vsel %vm2379, %v3604, 0.0
  %v3719 = vadd.f32 %v3717, %v3718
  %v3720 = vsel %vm2379, %v3605, 0.0
  %v3721 = vadd.f32 %v3719, %v3720
  %v3722 = vsel %vm2379, %v3606, 0.0
  %v3723 = vadd.f32 %v3721, %v3722
  %v3724 = vsel %vm2379, %v3607, 0.0
  %v3725 = vadd.f32 %v3723, %v3724
  %v3726 = vsel %vm2379, %v3608, 0.0
  %v3727 = vadd.f32 %v3725, %v3726
  %v3728 = vsel %vm2379, %v3609, 0.0
  %v3729 = vadd.f32 %v3727, %v3728
  %v3730 = vsel %vm2379, %v3610, 0.0
  %v3731 = vadd.f32 %v3729, %v3730
  %v3732 = vsel %vm2379, %v3611, 0.0
  %v3733 = vadd.f32 %v3731, %v3732
  %v3734 = vsel %vm2379, %v3612, 0.0
  %v3735 = vadd.f32 %v3733, %v3734
  %v3736 = vsel %vm2379, %v3613, 0.0
  %v3737 = vadd.f32 %v3735, %v3736
  %v3738 = vsel %vm2379, %v3614, 0.0
  %v3739 = vadd.f32 %v3737, %v3738
  %v3740 = vsel %vm2379, %v3615, 0.0
  %v3741 = vadd.f32 %v3739, %v3740
  %v3742 = vsel %vm2379, %v3616, 0.0
  %v3743 = vadd.f32 %v3741, %v3742
  %v3744 = vrot.slane %v3743, 4
  %v3745 = vadd.f32 %v3743, %v3744
  %v3746 = vrot.slane %v3745, 2
  %v3747 = vadd.f32 %v3745, %v3746
  %v3748 = vrot.slane %v3747, 1
  %v3749 = vadd.f32 %v3747, %v3748
  %vm3750 = vcmask 1040384
  %v3751 = vsel %vm3750, %v3552, %v3749
  %vm3752 = vcmask 58368
  %3753 = vst.msk [vmem:[%s3] sm:$0x3] %vm3752, %v3751
  %3754 = vxpose.xlu0.b32.start [1/16] %v3102, 128
  %3755 = vxpose.xlu0.b32.cont [2/16] %v3107, 128
  %3756 = vxpose.xlu0.b32.cont [3/16] %v3112, 128
  %3757 = vxpose.xlu0.b32.cont [4/16] %v3117, 128
  %3758 = vxpose.xlu0.b32.cont [5/16] %v3122, 128
  %3759 = vxpose.xlu0.b32.cont [6/16] %v3127, 128
  %3760 = vxpose.xlu0.b32.cont [7/16] %v3132, 128
  %3761 = vxpose.xlu0.b32.cont [8/16] %v3137, 128
  %3762 = vxpose.xlu0.b32.cont [9/16] %v3142, 128
  %3763 = vxpose.xlu0.b32.cont [10/16] %v3147, 128
  %3764 = vxpose.xlu0.b32.cont [11/16] %v3152, 128
  %3765 = vxpose.xlu0.b32.cont [12/16] %v3157, 128
  %3766 = vxpose.xlu0.b32.cont [13/16] %v3162, 128
  %3767 = vxpose.xlu0.b32.cont [14/16] %v3167, 128
  %3768 = vxpose.xlu0.b32.cont [15/16] %v3172, 128
  %3769 = vxpose.xlu0.b32.end [16/16] %v3177, 128
  %v3770 = vpop.trf.xlu0
  %v3771 = vpop.trf.xlu0
  %v3772 = vpop.trf.xlu0
  %v3773 = vpop.trf.xlu0
  %v3774 = vpop.trf.xlu0
  %v3775 = vpop.trf.xlu0
  %v3776 = vpop.trf.xlu0
  %v3777 = vpop.trf.xlu0
  %v3778 = vpop.trf.xlu0
  %v3779 = vpop.trf.xlu0
  %v3780 = vpop.trf.xlu0
  %v3781 = vpop.trf.xlu0
  %v3782 = vpop.trf.xlu0
  %v3783 = vpop.trf.xlu0
  %v3784 = vpop.trf.xlu0
  %v3785 = vpop.trf.xlu0
  %3786 = vxpose.xlu0.b32.start [1/16] %v3182, 128
  %3787 = vxpose.xlu0.b32.cont [2/16] %v3187, 128
  %3788 = vxpose.xlu0.b32.cont [3/16] %v3192, 128
  %3789 = vxpose.xlu0.b32.cont [4/16] %v3197, 128
  %3790 = vxpose.xlu0.b32.cont [5/16] %v3202, 128
  %3791 = vxpose.xlu0.b32.cont [6/16] %v3207, 128
  %3792 = vxpose.xlu0.b32.cont [7/16] %v3212, 128
  %3793 = vxpose.xlu0.b32.cont [8/16] %v3217, 128
  %3794 = vxpose.xlu0.b32.cont [9/16] %v3222, 128
  %3795 = vxpose.xlu0.b32.cont [10/16] %v3227, 128
  %3796 = vxpose.xlu0.b32.cont [11/16] %v3232, 128
  %3797 = vxpose.xlu0.b32.cont [12/16] %v3237, 128
  %3798 = vxpose.xlu0.b32.cont [13/16] %v3242, 128
  %3799 = vxpose.xlu0.b32.cont [14/16] %v3247, 128
  %3800 = vxpose.xlu0.b32.cont [15/16] %v3252, 128
  %3801 = vxpose.xlu0.b32.end [16/16] %v3257, 128
  %v3802 = vpop.trf.xlu0
  %v3803 = vpop.trf.xlu0
  %v3804 = vpop.trf.xlu0
  %v3805 = vpop.trf.xlu0
  %v3806 = vpop.trf.xlu0
  %v3807 = vpop.trf.xlu0
  %v3808 = vpop.trf.xlu0
  %v3809 = vpop.trf.xlu0
  %v3810 = vpop.trf.xlu0
  %v3811 = vpop.trf.xlu0
  %v3812 = vpop.trf.xlu0
  %v3813 = vpop.trf.xlu0
  %v3814 = vpop.trf.xlu0
  %v3815 = vpop.trf.xlu0
  %v3816 = vpop.trf.xlu0
  %v3817 = vpop.trf.xlu0
  %3818 = vxpose.xlu0.b32.start [1/16] %v3262, 128
  %3819 = vxpose.xlu0.b32.cont [2/16] %v3267, 128
  %3820 = vxpose.xlu0.b32.cont [3/16] %v3272, 128
  %3821 = vxpose.xlu0.b32.cont [4/16] %v3277, 128
  %3822 = vxpose.xlu0.b32.cont [5/16] %v3282, 128
  %3823 = vxpose.xlu0.b32.cont [6/16] %v3287, 128
  %3824 = vxpose.xlu0.b32.cont [7/16] %v3292, 128
  %3825 = vxpose.xlu0.b32.cont [8/16] %v3297, 128
  %3826 = vxpose.xlu0.b32.cont [9/16] %v3302, 128
  %3827 = vxpose.xlu0.b32.cont [10/16] %v3307, 128
  %3828 = vxpose.xlu0.b32.cont [11/16] %v3312, 128
  %3829 = vxpose.xlu0.b32.cont [12/16] %v3317, 128
  %3830 = vxpose.xlu0.b32.cont [13/16] %v3322, 128
  %3831 = vxpose.xlu0.b32.cont [14/16] %v3327, 128
  %3832 = vxpose.xlu0.b32.cont [15/16] %v3332, 128
  %3833 = vxpose.xlu0.b32.end [16/16] %v3337, 128
  %v3834 = vpop.trf.xlu0
  %v3835 = vpop.trf.xlu0
  %v3836 = vpop.trf.xlu0
  %v3837 = vpop.trf.xlu0
  %v3838 = vpop.trf.xlu0
  %v3839 = vpop.trf.xlu0
  %v3840 = vpop.trf.xlu0
  %v3841 = vpop.trf.xlu0
  %v3842 = vpop.trf.xlu0
  %v3843 = vpop.trf.xlu0
  %v3844 = vpop.trf.xlu0
  %v3845 = vpop.trf.xlu0
  %v3846 = vpop.trf.xlu0
  %v3847 = vpop.trf.xlu0
  %v3848 = vpop.trf.xlu0
  %v3849 = vpop.trf.xlu0
  %3850 = vxpose.xlu0.b32.start [1/16] %v3342, 128
  %3851 = vxpose.xlu0.b32.cont [2/16] %v3347, 128
  %3852 = vxpose.xlu0.b32.cont [3/16] %v3352, 128
  %3853 = vxpose.xlu0.b32.cont [4/16] %v3357, 128
  %3854 = vxpose.xlu0.b32.cont [5/16] %v3362, 128
  %3855 = vxpose.xlu0.b32.cont [6/16] %v3367, 128
  %3856 = vxpose.xlu0.b32.cont [7/16] %v3372, 128
  %3857 = vxpose.xlu0.b32.cont [8/16] %v3377, 128
  %3858 = vxpose.xlu0.b32.cont [9/16] %v3382, 128
  %3859 = vxpose.xlu0.b32.cont [10/16] %v3387, 128
  %3860 = vxpose.xlu0.b32.cont [11/16] %v3392, 128
  %3861 = vxpose.xlu0.b32.cont [12/16] %v3397, 128
  %3862 = vxpose.xlu0.b32.cont [13/16] %v3402, 128
  %3863 = vxpose.xlu0.b32.cont [14/16] %v3407, 128
  %3864 = vxpose.xlu0.b32.cont [15/16] %v3412, 128
  %3865 = vxpose.xlu0.b32.end [16/16] %v3417, 128
  %v3866 = vpop.trf.xlu0
  %v3867 = vpop.trf.xlu0
  %v3868 = vpop.trf.xlu0
  %v3869 = vpop.trf.xlu0
  %v3870 = vpop.trf.xlu0
  %v3871 = vpop.trf.xlu0
  %v3872 = vpop.trf.xlu0
  %v3873 = vpop.trf.xlu0
  %v3874 = vpop.trf.xlu0
  %v3875 = vpop.trf.xlu0
  %v3876 = vpop.trf.xlu0
  %v3877 = vpop.trf.xlu0
  %v3878 = vpop.trf.xlu0
  %v3879 = vpop.trf.xlu0
  %v3880 = vpop.trf.xlu0
  %v3881 = vpop.trf.xlu0
  %3882 = vst [vmem:[%s2] sm:$0xff] %v3770
  %3883 = vst [vmem:[%s2 + $0x8] sm:$0xff] %v3802
  %3884 = vst [vmem:[%s2 + $0x10] sm:$0xff] %v3834
  %3885 = vst [vmem:[%s2 + $0x18] sm:$0xff] %v3866
  // Predicated region
  $region10: #{dil_conv.1} parent=0 // pred_check
    _
  $region11: #{dil_conv.1} parent=0 // pred_check_branch
    %3887 = sbr.rel (0) target = $region13
  $region12: #{dil_conv.1} parent=0 // pred_region
    _
  $region13: #{dil_conv.1} parent=0 // pred_fallthru
    _
  // Predicated region
  $region14: #{dil_conv.1} parent=0 // pred_check
    _
  $region15: #{dil_conv.1} parent=0 // pred_check_branch
    %3889 = sbr.rel (0) target = $region17
  $region16: #{dil_conv.1} parent=0 // pred_region
    _
  $region17: #{dil_conv.1} parent=0 // pred_fallthru
    _
  // Predicated region
  $region18: #{dil_conv.1} parent=0 // pred_check
    _
  $region19: #{dil_conv.1} parent=0 // pred_check_branch
    %3891 = sbr.rel (0) target = $region21
  $region20: #{dil_conv.1} parent=0 // pred_region
    _
  $region21: #{dil_conv.1} parent=0 // pred_fallthru
    _
  // Predicated region
  $region22: #{dil_conv.1} parent=0 // pred_check
    _
  $region23: #{dil_conv.1} parent=0 // pred_check_branch
    %3893 = sbr.rel (0) target = $region25
  $region24: #{dil_conv.1} parent=0 // pred_region
    _
  $region25: #{dil_conv.1} parent=0 // pred_fallthru
    _

</llo_original>
